<compile_context>
chip_gen: v5e
topology: v5e:2x2
jax: 0.10.0
libtpu: 0.0.40
codegen_flags: <defaults>
</compile_context>

<pallas_src>
import jax
import jax.numpy as jnp
from jax import lax
from jax.experimental import pallas as pl
from jax.experimental.pallas import tpu as pltpu

FILTER_SIZES = (1, 2, 3, 4, 5, 6, 7, 8, 9, 10)
NUM_FILTERS = 32
NUM_CLASSES = 2
IN_CHANNELS = 3
_NEG = -1e30

# The validity mask uses k_i == i + 1 (true for FILTER_SIZES 1..10).
assert FILTER_SIZES == tuple(range(1, len(FILTER_SIZES) + 1))


def _make_textcnn_kernel(TB, S, CHp, NF, kmax):
    R = TB * S

    def kernel(x_ref, w_ref, b_ref, mask_ref, hid_ref):
        # x_ref    : (TB, S, CHp)   bf16/f32  TB batch rows per grid step
        # w_ref    : (kmax, CHp, NF)          tap-major fused conv weights (resident)
        # b_ref    : (1, NF)  f32             conv biases (resident)
        # mask_ref : (R, NF)  f32             additive -1e30 validity mask (resident)
        # hid_ref  : (TB, NF) f32             pooled hidden output (lane/sublane dense)
        xs = x_ref[...].reshape(R, CHp)

        # One lane-dense MXU matmul per conv tap; shift-add on the OUTPUT via XLU
        # rolls: rolled[r] = z[(r + dk) mod R].  Rows that wrap (or cross into a
        # neighbouring batch row) only ever land on invalid within-row positions,
        # which the additive mask removes before the max-pool.
        acc = jnp.dot(xs, w_ref[0], preferred_element_type=jnp.float32)   # (R, NF) f32
        for dk in range(1, kmax):                                         # static unroll
            z = jnp.dot(xs, w_ref[dk], preferred_element_type=jnp.float32)
            acc = acc + pltpu.roll(z, R - dk, axis=0)

        # Hoisted validity mask (0 where (r mod S) + filter_idx < S, else -1e30),
        # then per-row max-pool over the S positions.
        acc = acc + mask_ref[...]
        pooled = jnp.max(acc.reshape(TB, S, NF), axis=1)                  # (TB, NF)

        # bias + ReLU after the max-pool (equivalent to relu-then-max of the conv).
        hid_ref[...] = jnp.maximum(pooled + b_ref[...], 0.0)

    return kernel


def pack_params(params, compute_dtype=jnp.bfloat16):
    """One-time repacking of PyTorch-layout parameters (hoisted out of forward)."""
    F, nk, kmax, C = NUM_FILTERS, len(FILTER_SIZES), max(FILTER_SIZES), IN_CHANNELS
    H = params["conv_w"][0].shape[-1]
    CH = C * H
    CHp = 128 * ((CH + 127) // 128)        # lane-align contraction dim (96 -> 128)
    NF = nk * F

    # Fused tap-major conv weights: W_all[dk, c*H+h, i*F+f] = w_i[f, c, dk, h]
    # (zero for dk >= k_i and for padded contraction rows).
    w_all = jnp.zeros((kmax, CHp, NF), jnp.float32)
    b_all = jnp.zeros((1, NF), jnp.float32)
    for i, k in enumerate(FILTER_SIZES):
        w = jnp.asarray(params["conv_w"][i], jnp.float32)             # (F, C, k, H)
        wk = jnp.transpose(w, (2, 1, 3, 0)).reshape(k, CH, F)         # (k, C*H, F)
        w_all = w_all.at[:k, :CH, i * F:(i + 1) * F].set(wk)
        b_all = b_all.at[0, i * F:(i + 1) * F].set(
            jnp.asarray(params["conv_b"][i], jnp.float32))

    return {
        "w_all": w_all.astype(compute_dtype),   # bf16 halves DMA/VMEM on v6e/v7x
        "b_all": b_all,
        "fc_wT": jnp.asarray(params["fc_w"], jnp.float32).T,          # (NF, NC), stays f32
        "fc_b": jnp.asarray(params["fc_b"], jnp.float32).reshape(1, NUM_CLASSES),
        "H": H,
        "CHp": CHp,
        "dtype": compute_dtype,
    }


def textcnn_forward(x, packed, tb=None):
    B, C, S, H = x.shape
    assert C == IN_CHANNELS and H == packed["H"]
    assert S >= max(FILTER_SIZES), "sequence length must cover the largest filter"
    F, nk, kmax = NUM_FILTERS, len(FILTER_SIZES), max(FILTER_SIZES)
    NF, CH, CHp = nk * F, C * H, packed["CHp"]

    # Batch tile: amortize grid-step overhead and fill the MXU rows
    # (TB*S >= 256 targets v6e/v7x 256-deep MXUs; >=128 is enough on v5e).
    # Keep TB a multiple of 8 so the (TB, NF) output block is sublane-aligned.
    if tb is None:
        tb = pl.cdiv(256, S)
    tb = max(8, 8 * pl.cdiv(tb, 8))
    B_pad = tb * pl.cdiv(B, tb)
    grid = (B_pad // tb,)
    R = tb * S

    # NCHW -> (B, S, C*H), lane-pad contraction CH->CHp, pad batch to B_pad.
    # TODO(synk): producing activations directly in (B, S, C*H) bf16 upstream would
    # avoid this extra HBM round trip (matters most on v5e's ~0.8 TB/s HBM).
    x2 = jnp.transpose(x.astype(jnp.float32), (0, 2, 1, 3)).reshape(B, S, CH)
    x2 = jnp.pad(x2, ((0, B_pad - B), (0, 0), (0, CHp - CH)))
    x2 = x2.astype(packed["dtype"])

    # Hoisted additive validity mask (identical every grid step -> resident input).
    pos = jnp.arange(R, dtype=jnp.int32) % S                  # within-row position
    fil = jnp.arange(NF, dtype=jnp.int32) // F                # filter index i (k_i=i+1)
    mask = jnp.where(pos[:, None] + fil[None, :] < S, 0.0, _NEG).astype(jnp.float32)

    kernel = _make_textcnn_kernel(tb, S, CHp, NF, kmax)

    itemsize = jnp.dtype(packed["dtype"]).itemsize
    cost = pl.CostEstimate(
        flops=2 * B_pad * S * CHp * kmax * NF,
        transcendentals=0,
        bytes_accessed=(x2.size * itemsize
                        + packed["w_all"].size * itemsize
                        + mask.size * 4
                        + B_pad * NF * 4),
    )

    hidden_pad = pl.pallas_call(
        kernel,
        grid=grid,
        in_specs=[
            pl.BlockSpec((tb, S, CHp), lambda b: (b, 0, 0)),      # x: TB rows / step
            pl.BlockSpec((kmax, CHp, NF), lambda b: (0, 0, 0)),   # conv weights (resident)
            pl.BlockSpec((1, NF), lambda b: (0, 0)),              # conv bias (resident)
            pl.BlockSpec((R, NF), lambda b: (0, 0)),              # validity mask (resident)
        ],
        out_specs=pl.BlockSpec((tb, NF), lambda b: (b, 0)),       # dense (TB, 320) store
        out_shape=jax.ShapeDtypeStruct((B_pad, NF), jnp.float32),
        compiler_params=pltpu.CompilerParams(
            dimension_semantics=("parallel",),
            vmem_limit_bytes=32 * 1024 * 1024),
        cost_estimate=cost,
    )(x2, packed["w_all"], packed["b_all"], mask)

    hidden = hidden_pad[:B]
    # nn.Dropout(p=0.1) is identity in eval mode; 320->2 FC is a tiny lane-sparse
    # matmul -> done as a single XLA op on the returned hidden (per perf review).
    out = hidden @ packed["fc_wT"] + packed["fc_b"]
    return out, hidden


def reference_forward(x, params):
    """Pure-JAX reference using lax.conv (independent of the kernel math)."""
    x = x.astype(jnp.float32)
    pools = []
    for i, k in enumerate(FILTER_SIZES):
        w = params["conv_w"][i]
        b = params["conv_b"][i]
        y = lax.conv_general_dilated(
            x, w, window_strides=(1, 1), padding="VALID",
            dimension_numbers=("NCHW", "OIHW", "NCHW"))
        y = y + b.reshape(1, -1, 1, 1)
        y = jnp.maximum(y, 0.0)[..., 0]        # (B, F, L)
        pools.append(jnp.max(y, axis=2))       # (B, F)
    hidden = jnp.concatenate(pools, axis=1)
    out = hidden @ params["fc_w"].T + params["fc_b"]
    return out, hidden


if __name__ == "__main__":
    B, S, H = 20, 16, 32  # batch, seq length, hidden_size

    key = jax.random.PRNGKey(0)
    keys = jax.random.split(key, 2 * len(FILTER_SIZES) + 3)

    conv_w, conv_b = [], []
    for i, k in enumerate(FILTER_SIZES):
        conv_w.append(0.1 * jax.random.normal(
            keys[2 * i], (NUM_FILTERS, IN_CHANNELS, k, H), jnp.float32))
        conv_b.append(0.1 * jax.random.normal(
            keys[2 * i + 1], (NUM_FILTERS,), jnp.float32))
    fc_w = 0.1 * jax.random.normal(
        keys[-3], (NUM_CLASSES, NUM_FILTERS * len(FILTER_SIZES)), jnp.float32)
    fc_b = 0.1 * jax.random.normal(keys[-2], (NUM_CLASSES,), jnp.float32)
    params = {"conv_w": conv_w, "conv_b": conv_b, "fc_w": fc_w, "fc_b": fc_b}

    x = jax.random.normal(keys[-1], (B, IN_CHANNELS, S, H), jnp.float32)

    out_ref, hidden_ref = reference_forward(x, params)

    # f32 compute path with a 3-step grid (TB=8): tight check of the kernel math
    # (roll alignment, cross-row mask, padded batch rows).
    packed_f32 = pack_params(params, compute_dtype=jnp.float32)
    out32, hid32 = textcnn_forward(x, packed_f32, tb=8)
    jax.block_until_ready((out32, hid32))
    assert jnp.allclose(hid32, hidden_ref, atol=5e-4, rtol=5e-4)
    assert jnp.allclose(out32, out_ref, atol=5e-4, rtol=5e-4)

    # bf16 fast path (default TB -> TB*S = 256, 2-step grid): looser tolerance.
    packed_bf16 = pack_params(params)  # compute_dtype=bfloat16
    out16, hid16 = textcnn_forward(x, packed_bf16)
    jax.block_until_ready((out16, hid16))
    assert jnp.allclose(hid16, hidden_ref, atol=1.5e-1, rtol=5e-2)
    assert jnp.allclose(out16, out_ref, atol=1.5e-1, rtol=5e-2)

    print("KERNEL_OK")
</pallas_src>

<mosaic_0001>
module attributes {stable_mosaic.version = 11 : i64} {
  func.func @kernel(%arg0: i32, %arg1: memref<8x16x128xf32, #tpu.memory_space<vmem>>, %arg2: memref<10x128x320xf32, #tpu.memory_space<vmem>>, %arg3: memref<1x320xf32, #tpu.memory_space<vmem>>, %arg4: memref<128x320xf32, #tpu.memory_space<vmem>>, %arg5: memref<8x320xf32, #tpu.memory_space<vmem>>) attributes {dimension_semantics = [#tpu.dimension_semantics<parallel>], iteration_bounds = array<i64: 3>, scalar_prefetch = 0 : i64, scratch_operands = 0 : i64, tpu.core_type = #tpu.core_type<tc>, window_params = [{transform_indices = @transform_0, window_bounds = array<i64: 8, 16, 128>}, {pipeline_mode = #tpu.pipeline_mode<synchronous>, transform_indices = @transform_1, window_bounds = array<i64: 10, 128, 320>}, {pipeline_mode = #tpu.pipeline_mode<synchronous>, transform_indices = @transform_2, window_bounds = array<i64: 1, 320>}, {pipeline_mode = #tpu.pipeline_mode<synchronous>, transform_indices = @transform_3, window_bounds = array<i64: 128, 320>}, {transform_indices = @transform_4, window_bounds = array<i64: 8, 320>}]} {
    %c0 = arith.constant 0 : index
    %c0_0 = arith.constant 0 : index
    %c0_1 = arith.constant 0 : index
    %0 = vector.load %arg1[%c0, %c0_0, %c0_1] : memref<8x16x128xf32, #tpu.memory_space<vmem>>, vector<8x16x128xf32>
    %1 = vector.shape_cast %0 : vector<8x16x128xf32> to vector<128x128xf32>
    %c0_2 = arith.constant 0 : index
    %c0_3 = arith.constant 0 : index
    %c0_4 = arith.constant 0 : index
    %2 = vector.load %arg2[%c0_2, %c0_3, %c0_4] : memref<10x128x320xf32, #tpu.memory_space<vmem>>, vector<1x128x320xf32>
    %3 = vector.shape_cast %2 : vector<1x128x320xf32> to vector<128x320xf32>
    %cst = arith.constant dense<0.000000e+00> : vector<128x320xf32>
    %4 = tpu.matmul %1, %3, %cst {dimension_numbers = #tpu.dot_dimension_numbers<[1], [0], [0], [1], [0, 0, 1, 1], [], []>} : vector<128x128xf32>, vector<128x320xf32>, vector<128x320xf32> -> vector<128x320xf32>
    %c1 = arith.constant 1 : index
    %c0_5 = arith.constant 0 : index
    %c0_6 = arith.constant 0 : index
    %5 = vector.load %arg2[%c1, %c0_5, %c0_6] : memref<10x128x320xf32, #tpu.memory_space<vmem>>, vector<1x128x320xf32>
    %6 = vector.shape_cast %5 : vector<1x128x320xf32> to vector<128x320xf32>
    %cst_7 = arith.constant dense<0.000000e+00> : vector<128x320xf32>
    %7 = tpu.matmul %1, %6, %cst_7 {dimension_numbers = #tpu.dot_dimension_numbers<[1], [0], [0], [1], [0, 0, 1, 1], [], []>} : vector<128x128xf32>, vector<128x320xf32>, vector<128x320xf32> -> vector<128x320xf32>
    %c127_i32 = arith.constant 127 : i32
    %8 = tpu.dynamic_rotate %7 by %c127_i32 dim 0 : vector<128x320xf32>, i32 -> vector<128x320xf32>
    %9 = arith.addf %4, %8 : vector<128x320xf32>
    %c2 = arith.constant 2 : index
    %c0_8 = arith.constant 0 : index
    %c0_9 = arith.constant 0 : index
    %10 = vector.load %arg2[%c2, %c0_8, %c0_9] : memref<10x128x320xf32, #tpu.memory_space<vmem>>, vector<1x128x320xf32>
    %11 = vector.shape_cast %10 : vector<1x128x320xf32> to vector<128x320xf32>
    %cst_10 = arith.constant dense<0.000000e+00> : vector<128x320xf32>
    %12 = tpu.matmul %1, %11, %cst_10 {dimension_numbers = #tpu.dot_dimension_numbers<[1], [0], [0], [1], [0, 0, 1, 1], [], []>} : vector<128x128xf32>, vector<128x320xf32>, vector<128x320xf32> -> vector<128x320xf32>
    %c126_i32 = arith.constant 126 : i32
    %13 = tpu.dynamic_rotate %12 by %c126_i32 dim 0 : vector<128x320xf32>, i32 -> vector<128x320xf32>
    %14 = arith.addf %9, %13 : vector<128x320xf32>
    %c3 = arith.constant 3 : index
    %c0_11 = arith.constant 0 : index
    %c0_12 = arith.constant 0 : index
    %15 = vector.load %arg2[%c3, %c0_11, %c0_12] : memref<10x128x320xf32, #tpu.memory_space<vmem>>, vector<1x128x320xf32>
    %16 = vector.shape_cast %15 : vector<1x128x320xf32> to vector<128x320xf32>
    %cst_13 = arith.constant dense<0.000000e+00> : vector<128x320xf32>
    %17 = tpu.matmul %1, %16, %cst_13 {dimension_numbers = #tpu.dot_dimension_numbers<[1], [0], [0], [1], [0, 0, 1, 1], [], []>} : vector<128x128xf32>, vector<128x320xf32>, vector<128x320xf32> -> vector<128x320xf32>
    %c125_i32 = arith.constant 125 : i32
    %18 = tpu.dynamic_rotate %17 by %c125_i32 dim 0 : vector<128x320xf32>, i32 -> vector<128x320xf32>
    %19 = arith.addf %14, %18 : vector<128x320xf32>
    %c4 = arith.constant 4 : index
    %c0_14 = arith.constant 0 : index
    %c0_15 = arith.constant 0 : index
    %20 = vector.load %arg2[%c4, %c0_14, %c0_15] : memref<10x128x320xf32, #tpu.memory_space<vmem>>, vector<1x128x320xf32>
    %21 = vector.shape_cast %20 : vector<1x128x320xf32> to vector<128x320xf32>
    %cst_16 = arith.constant dense<0.000000e+00> : vector<128x320xf32>
    %22 = tpu.matmul %1, %21, %cst_16 {dimension_numbers = #tpu.dot_dimension_numbers<[1], [0], [0], [1], [0, 0, 1, 1], [], []>} : vector<128x128xf32>, vector<128x320xf32>, vector<128x320xf32> -> vector<128x320xf32>
    %c124_i32 = arith.constant 124 : i32
    %23 = tpu.dynamic_rotate %22 by %c124_i32 dim 0 : vector<128x320xf32>, i32 -> vector<128x320xf32>
    %24 = arith.addf %19, %23 : vector<128x320xf32>
    %c5 = arith.constant 5 : index
    %c0_17 = arith.constant 0 : index
    %c0_18 = arith.constant 0 : index
    %25 = vector.load %arg2[%c5, %c0_17, %c0_18] : memref<10x128x320xf32, #tpu.memory_space<vmem>>, vector<1x128x320xf32>
    %26 = vector.shape_cast %25 : vector<1x128x320xf32> to vector<128x320xf32>
    %cst_19 = arith.constant dense<0.000000e+00> : vector<128x320xf32>
    %27 = tpu.matmul %1, %26, %cst_19 {dimension_numbers = #tpu.dot_dimension_numbers<[1], [0], [0], [1], [0, 0, 1, 1], [], []>} : vector<128x128xf32>, vector<128x320xf32>, vector<128x320xf32> -> vector<128x320xf32>
    %c123_i32 = arith.constant 123 : i32
    %28 = tpu.dynamic_rotate %27 by %c123_i32 dim 0 : vector<128x320xf32>, i32 -> vector<128x320xf32>
    %29 = arith.addf %24, %28 : vector<128x320xf32>
    %c6 = arith.constant 6 : index
    %c0_20 = arith.constant 0 : index
    %c0_21 = arith.constant 0 : index
    %30 = vector.load %arg2[%c6, %c0_20, %c0_21] : memref<10x128x320xf32, #tpu.memory_space<vmem>>, vector<1x128x320xf32>
    %31 = vector.shape_cast %30 : vector<1x128x320xf32> to vector<128x320xf32>
    %cst_22 = arith.constant dense<0.000000e+00> : vector<128x320xf32>
    %32 = tpu.matmul %1, %31, %cst_22 {dimension_numbers = #tpu.dot_dimension_numbers<[1], [0], [0], [1], [0, 0, 1, 1], [], []>} : vector<128x128xf32>, vector<128x320xf32>, vector<128x320xf32> -> vector<128x320xf32>
    %c122_i32 = arith.constant 122 : i32
    %33 = tpu.dynamic_rotate %32 by %c122_i32 dim 0 : vector<128x320xf32>, i32 -> vector<128x320xf32>
    %34 = arith.addf %29, %33 : vector<128x320xf32>
    %c7 = arith.constant 7 : index
    %c0_23 = arith.constant 0 : index
    %c0_24 = arith.constant 0 : index
    %35 = vector.load %arg2[%c7, %c0_23, %c0_24] : memref<10x128x320xf32, #tpu.memory_space<vmem>>, vector<1x128x320xf32>
    %36 = vector.shape_cast %35 : vector<1x128x320xf32> to vector<128x320xf32>
    %cst_25 = arith.constant dense<0.000000e+00> : vector<128x320xf32>
    %37 = tpu.matmul %1, %36, %cst_25 {dimension_numbers = #tpu.dot_dimension_numbers<[1], [0], [0], [1], [0, 0, 1, 1], [], []>} : vector<128x128xf32>, vector<128x320xf32>, vector<128x320xf32> -> vector<128x320xf32>
    %c121_i32 = arith.constant 121 : i32
    %38 = tpu.dynamic_rotate %37 by %c121_i32 dim 0 : vector<128x320xf32>, i32 -> vector<128x320xf32>
    %39 = arith.addf %34, %38 : vector<128x320xf32>
    %c8 = arith.constant 8 : index
    %c0_26 = arith.constant 0 : index
    %c0_27 = arith.constant 0 : index
    %40 = vector.load %arg2[%c8, %c0_26, %c0_27] : memref<10x128x320xf32, #tpu.memory_space<vmem>>, vector<1x128x320xf32>
    %41 = vector.shape_cast %40 : vector<1x128x320xf32> to vector<128x320xf32>
    %cst_28 = arith.constant dense<0.000000e+00> : vector<128x320xf32>
    %42 = tpu.matmul %1, %41, %cst_28 {dimension_numbers = #tpu.dot_dimension_numbers<[1], [0], [0], [1], [0, 0, 1, 1], [], []>} : vector<128x128xf32>, vector<128x320xf32>, vector<128x320xf32> -> vector<128x320xf32>
    %c120_i32 = arith.constant 120 : i32
    %43 = tpu.dynamic_rotate %42 by %c120_i32 dim 0 : vector<128x320xf32>, i32 -> vector<128x320xf32>
    %44 = arith.addf %39, %43 : vector<128x320xf32>
    %c9 = arith.constant 9 : index
    %c0_29 = arith.constant 0 : index
    %c0_30 = arith.constant 0 : index
    %45 = vector.load %arg2[%c9, %c0_29, %c0_30] : memref<10x128x320xf32, #tpu.memory_space<vmem>>, vector<1x128x320xf32>
    %46 = vector.shape_cast %45 : vector<1x128x320xf32> to vector<128x320xf32>
    %cst_31 = arith.constant dense<0.000000e+00> : vector<128x320xf32>
    %47 = tpu.matmul %1, %46, %cst_31 {dimension_numbers = #tpu.dot_dimension_numbers<[1], [0], [0], [1], [0, 0, 1, 1], [], []>} : vector<128x128xf32>, vector<128x320xf32>, vector<128x320xf32> -> vector<128x320xf32>
    %c119_i32 = arith.constant 119 : i32
    %48 = tpu.dynamic_rotate %47 by %c119_i32 dim 0 : vector<128x320xf32>, i32 -> vector<128x320xf32>
    %49 = arith.addf %44, %48 : vector<128x320xf32>
    %c0_32 = arith.constant 0 : index
    %c0_33 = arith.constant 0 : index
    %50 = vector.load %arg4[%c0_32, %c0_33] : memref<128x320xf32, #tpu.memory_space<vmem>>, vector<128x320xf32>
    %51 = arith.addf %49, %50 : vector<128x320xf32>
    %52 = vector.shape_cast %51 : vector<128x320xf32> to vector<8x16x320xf32>
    %cst_34 = arith.constant dense<0xFF800000> : vector<8x320xf32>
    %53 = vector.multi_reduction <maximumf>, %52, %cst_34 [1] : vector<8x16x320xf32> to vector<8x320xf32>
    %c0_35 = arith.constant 0 : index
    %c0_36 = arith.constant 0 : index
    %54 = vector.load %arg3[%c0_35, %c0_36] : memref<1x320xf32, #tpu.memory_space<vmem>>, vector<1x320xf32>
    %55 = vector.broadcast %54 : vector<1x320xf32> to vector<8x320xf32>
    %56 = arith.addf %53, %55 : vector<8x320xf32>
    %cst_37 = arith.constant 0.000000e+00 : f32
    %57 = vector.broadcast %cst_37 : f32 to vector<8x320xf32>
    %58 = arith.maximumf %56, %57 : vector<8x320xf32>
    %c0_38 = arith.constant 0 : index
    %c0_39 = arith.constant 0 : index
    %59 = vector.load %arg5[%c0_38, %c0_39] : memref<8x320xf32, #tpu.memory_space<vmem>>, vector<8x320xf32>
    tpu.vector_store %arg5[%c0_38, %c0_39], %58 {strides = array<i32>} : memref<8x320xf32, #tpu.memory_space<vmem>>, vector<8x320xf32>,
    return
  }
  func.func @transform_0(%arg0: i32) -> (i32, i32, i32) {
    %c0_i32 = arith.constant 0 : i32
    %c0_i32_0 = arith.constant 0 : i32
    %c0_i32_1 = arith.constant 0 : i32
    return %arg0, %c0_i32, %c0_i32_0 : i32, i32, i32
  }
  func.func @transform_1(%arg0: i32) -> (i32, i32, i32) {
    %c0_i32 = arith.constant 0 : i32
    %c0_i32_0 = arith.constant 0 : i32
    %c0_i32_1 = arith.constant 0 : i32
    %c0_i32_2 = arith.constant 0 : i32
    return %c0_i32, %c0_i32_0, %c0_i32_1 : i32, i32, i32
  }
  func.func @transform_2(%arg0: i32) -> (i32, i32) {
    %c0_i32 = arith.constant 0 : i32
    %c0_i32_0 = arith.constant 0 : i32
    %c0_i32_1 = arith.constant 0 : i32
    return %c0_i32, %c0_i32_0 : i32, i32
  }
  func.func @transform_3(%arg0: i32) -> (i32, i32) {
    %c0_i32 = arith.constant 0 : i32
    %c0_i32_0 = arith.constant 0 : i32
    %c0_i32_1 = arith.constant 0 : i32
    return %c0_i32, %c0_i32_0 : i32, i32
  }
  func.func @transform_4(%arg0: i32) -> (i32, i32) {
    %c0_i32 = arith.constant 0 : i32
    %c0_i32_0 = arith.constant 0 : i32
    return %arg0, %c0_i32 : i32, i32
  }
}

</mosaic_0001>

<llo_original>
// kernel: tpu_custom_call.1
$region0: #{tpu_custom_call.1}
  #allocation0 [shape = 'u32[]', space=smem, size = 0x4, offset = 0x4, fixed_abs, tag = 'smem constant byte address 0x4 - core index']
  #allocation1 [shape = 'u32[72,128]{1,0:T(1,128)}', space=vmem, size = 0x9000, scoped, tag = 'internal scratch']
  %s0 = inlined_call_operand.vmem [shape: f32[24,16,128], index: 0, kind: input, shape index: {}]
  %s1 = inlined_call_operand.vmem [shape: f32[10,128,320], index: 1, kind: input, shape index: {}]
  %s2 = inlined_call_operand.vmem [shape: f32[1,320], index: 2, kind: input, shape index: {}]
  %s3 = inlined_call_operand.vmem [shape: f32[128,320], index: 3, kind: input, shape index: {}]
  %s4 = inlined_call_operand.hbm [shape: f32[24,320], index: 4, kind: output, shape index: {}]
  %s5 = sld [smem:[#allocation0]]
  $region49: #{tpu_custom_call.1} parent=0
    _
  %s7 = ssub.s32 1, %s5
  %s8 = scalar_select 0, %s7, %s5
  $region1: #{tpu_custom_call.1} parent=0
    #allocation2 [shape = 'u8[24576]{0}', space=vmem, size = 0x6000, scoped, tag = 'output window, operand 0']
    #allocation3 [shape = 's32[2]{0}', space=sflag, size = 0x8, scoped, tag = 'scoped memory for tpu_custom_call.1']
    %9 = vsyncpa [#allocation3], 0
    %s10 = scalar_lea.sflag [#allocation3], 1
    %11 = vsyncpa %s10, 0
    loop: start=0, step=1, limit=5
    $region2: #{tpu_custom_call.1} parent=1 // loop_pre_header
      _
    $region3: #{tpu_custom_call.1} parent=1 // loop_header
      %s13 = sphi 0, %s17
      %p14 = scmp.ge.s32.totalorder %s13, 5
      %s23 = sphi 0, %s25
      %s26 = sphi 0, %s23
      %s27 = sphi 0, %s26
      %s43 = sphi 0, %s27
      %s47 = sphi 0, %s47
      %s49 = sphi 0, %s47
      %s50 = sphi 0, %s49
      %s64 = sphi 0, %s50
      %s68 = sphi 0, %s68
      %s70 = sphi 0, %s68
      %s71 = sphi 0, %s70
      %s85 = sphi 0, %s71
      %s89 = sphi 0, %s89
      %s91 = sphi 0, %s89
      %s92 = sphi 0, %s91
      %s106 = sphi 0, %s92
      %s112 = sphi 0, %s114
      %s115 = sphi 0, %s112
      %s116 = sphi 0, %s115
      %s132 = sphi 0, %s116
    $region4: #{tpu_custom_call.1} parent=1 // loop_header_branch
      %16 = sbr.rel (%p14) target = $region8
    $region5: #{tpu_custom_call.1} parent=1 // loop_body
      %s18 = ssub.s32 %s13, 1
      %s19 = ssub.s32 %s13, 2
      %s20 = sadd.s32 %s13, 1
      %s21 = ssub.s32 %s13, %s20
      %p22 = scmp.eq.s32.totalorder %s21, 0
      %s24 = sadd.s32 %s23, 1
      %s25 = scalar_select %p22, %s23, %s24
      %p28 = pneg %p22
      %p29 = scmp.eq.s32.totalorder %s13, 2
      %p30 = por %p28, %p29
      %p31 = scmp.ne.s32.totalorder %s23, %s26
      %p32 = scmp.eq.s32.totalorder %s13, 0
      %p33 = por %p31, %p32
      %p34 = scmp.ne.s32.totalorder %s23, %s26
      %p35 = scmp.eq.s32.totalorder %s18, 2
      %p36 = por %p34, %p35
      %p37 = scmp.ne.s32.totalorder %s26, %s27
      %p38 = scmp.eq.s32.totalorder %s18, 0
      %p39 = por %p37, %p38
      %p40 = scmp.ne.s32.totalorder %s26, %s27
      %p41 = scmp.eq.s32.totalorder %s19, 2
      %p42 = por %p40, %p41
      %p44 = scmp.ne.s32.totalorder %s27, %s43
      %p45 = scmp.eq.s32.totalorder %s19, 0
      %p46 = por %p44, %p45
      %s48 = sadd.s32 %s47, 1
      %p51 = scmp.eq.s32.totalorder %s13, 2
      %p52 = scmp.ne.s32.totalorder %s47, %s49
      %p53 = scmp.eq.s32.totalorder %s13, 0
      %p54 = por %p52, %p53
      %p55 = scmp.ne.s32.totalorder %s47, %s49
      %p56 = scmp.eq.s32.totalorder %s18, 2
      %p57 = por %p55, %p56
      %p58 = scmp.ne.s32.totalorder %s49, %s50
      %p59 = scmp.eq.s32.totalorder %s18, 0
      %p60 = por %p58, %p59
      %p61 = scmp.ne.s32.totalorder %s49, %s50
      %p62 = scmp.eq.s32.totalorder %s19, 2
      %p63 = por %p61, %p62
      %p65 = scmp.ne.s32.totalorder %s50, %s64
      %p66 = scmp.eq.s32.totalorder %s19, 0
      %p67 = por %p65, %p66
      %s69 = sadd.s32 %s68, 1
      %p72 = scmp.eq.s32.totalorder %s13, 2
      %p73 = scmp.ne.s32.totalorder %s68, %s70
      %p74 = scmp.eq.s32.totalorder %s13, 0
      %p75 = por %p73, %p74
      %p76 = scmp.ne.s32.totalorder %s68, %s70
      %p77 = scmp.eq.s32.totalorder %s18, 2
      %p78 = por %p76, %p77
      %p79 = scmp.ne.s32.totalorder %s70, %s71
      %p80 = scmp.eq.s32.totalorder %s18, 0
      %p81 = por %p79, %p80
      %p82 = scmp.ne.s32.totalorder %s70, %s71
      %p83 = scmp.eq.s32.totalorder %s19, 2
      %p84 = por %p82, %p83
      %p86 = scmp.ne.s32.totalorder %s71, %s85
      %p87 = scmp.eq.s32.totalorder %s19, 0
      %p88 = por %p86, %p87
      %s90 = sadd.s32 %s89, 1
      %p93 = scmp.eq.s32.totalorder %s13, 2
      %p94 = scmp.ne.s32.totalorder %s89, %s91
      %p95 = scmp.eq.s32.totalorder %s13, 0
      %p96 = por %p94, %p95
      %p97 = scmp.ne.s32.totalorder %s89, %s91
      %p98 = scmp.eq.s32.totalorder %s18, 2
      %p99 = por %p97, %p98
      %p100 = scmp.ne.s32.totalorder %s91, %s92
      %p101 = scmp.eq.s32.totalorder %s18, 0
      %p102 = por %p100, %p101
      %p103 = scmp.ne.s32.totalorder %s91, %s92
      %p104 = scmp.eq.s32.totalorder %s19, 2
      %p105 = por %p103, %p104
      %p107 = scmp.ne.s32.totalorder %s92, %s106
      %p108 = scmp.eq.s32.totalorder %s19, 0
      %p109 = por %p107, %p108
      %s110 = ssub.s32 %s13, %s20
      %p111 = scmp.eq.s32.totalorder %s110, 0
      %s113 = sadd.s32 %s112, 1
      %s114 = scalar_select %p111, %s112, %s113
      %p117 = pneg %p111
      %p118 = scmp.eq.s32.totalorder %s13, 2
      %p119 = por %p117, %p118
      %p120 = scmp.ne.s32.totalorder %s112, %s115
      %p121 = scmp.eq.s32.totalorder %s13, 0
      %p122 = por %p120, %p121
      %p123 = scmp.ne.s32.totalorder %s112, %s115
      %p124 = scmp.eq.s32.totalorder %s18, 2
      %p125 = por %p123, %p124
      %p126 = scmp.ne.s32.totalorder %s115, %s116
      %p127 = scmp.eq.s32.totalorder %s18, 0
      %p128 = por %p126, %p127
      %p129 = scmp.ne.s32.totalorder %s115, %s116
      %p130 = scmp.eq.s32.totalorder %s19, 2
      %p131 = por %p129, %p130
      %p133 = scmp.ne.s32.totalorder %s116, %s132
      %p134 = scmp.eq.s32.totalorder %s19, 0
      %p135 = por %p133, %p134
      %p136 = scmp.le.s32.totalorder 1, %s13
      %p137 = scmp.lt.s32.totalorder %s13, 4
      %p138 = pnand %p136, %p137
      %p139 = pneg %p138
      // Predicated region
      $region9: #{tpu_custom_call.1} parent=5 // pred_check
        _
      $region10: #{tpu_custom_call.1} parent=5 // pred_check_branch
        %141 = sbr.rel (%p138) target = $region12
      $region11: #{tpu_custom_call.1} parent=5 // pred_region
        %s142 = ssub.s32 %s13, 1
        // Predicated region
        $region13: #{tpu_custom_call.1} parent=11 // pred_check
          %p143 = pneg %p60
        $region14: #{tpu_custom_call.1} parent=11 // pred_check_branch
          %145 = sbr.rel (%p143) target = $region16
        $region15: #{tpu_custom_call.1} parent=11 // pred_region
          _
        $region16: #{tpu_custom_call.1} parent=11 // pred_fallthru
          _
        // Predicated region
        $region17: #{tpu_custom_call.1} parent=11 // pred_check
          %p146 = pneg %p81
        $region18: #{tpu_custom_call.1} parent=11 // pred_check_branch
          %148 = sbr.rel (%p146) target = $region20
        $region19: #{tpu_custom_call.1} parent=11 // pred_region
          _
        $region20: #{tpu_custom_call.1} parent=11 // pred_fallthru
          _
        // Predicated region
        $region21: #{tpu_custom_call.1} parent=11 // pred_check
          %p149 = pneg %p102
        $region22: #{tpu_custom_call.1} parent=11 // pred_check_branch
          %151 = sbr.rel (%p149) target = $region24
        $region23: #{tpu_custom_call.1} parent=11 // pred_region
          _
        $region24: #{tpu_custom_call.1} parent=11 // pred_fallthru
          _
      $region12: #{tpu_custom_call.1} parent=5 // pred_fallthru
        _
      %p152 = scmp.lt.s32.totalorder %s13, 3
      // Predicated region
      $region25: #{tpu_custom_call.1} parent=5 // pred_check
        %p153 = pneg %p152
      $region26: #{tpu_custom_call.1} parent=5 // pred_check_branch
        %155 = sbr.rel (%p153) target = $region28
      $region27: #{tpu_custom_call.1} parent=5 // pred_region
        // Predicated region
        $region29: #{tpu_custom_call.1} parent=27 // pred_check
          %p156 = pneg %p33
        $region30: #{tpu_custom_call.1} parent=27 // pred_check_branch
          %158 = sbr.rel (%p156) target = $region32
        $region31: #{tpu_custom_call.1} parent=27 // pred_region
          %s159 = smul.u32 8, %s13
          %p160 = scmp.lt.s32.totalorder %s159, 23
          %s161 = scalar_select %p160, %s159, 23
          %s162 = smul.addr %s161, 2
          %s163 = smul.addr %s162, 8
          %s164 = scalar_lea.vmem %s0, %s163
          %s165 = smul.u32 8, %s13
        $region32: #{tpu_custom_call.1} parent=27 // pred_fallthru
          _
      $region28: #{tpu_custom_call.1} parent=5 // pred_fallthru
        _
      %p166 = scmp.le.s32.totalorder 1, %s13
      %p167 = scmp.lt.s32.totalorder %s13, 4
      %p168 = pnand %p166, %p167
      %p169 = pneg %p168
      // Predicated region
      $region33: #{tpu_custom_call.1} parent=5 // pred_check
        _
      $region34: #{tpu_custom_call.1} parent=5 // pred_check_branch
        %171 = sbr.rel (%p168) target = $region36
      $region35: #{tpu_custom_call.1} parent=5 // pred_region
        %s172 = ssub.s32 %s13, 1
        %s173 = smul.u32 8, %s18
        %p174 = scmp.lt.s32.totalorder %s173, 23
        %s175 = scalar_select %p174, %s173, 23
        %s176 = smul.addr %s175, 2
        %s177 = smul.addr %s176, 8
        %s178 = scalar_lea.vmem %s0, %s177
        %p179 = pneg %p39
        %p180 = pneg %p36
        %p181 = pneg %p60
        %p182 = pneg %p57
        %p183 = pneg %p81
        %p184 = pneg %p78
        %p185 = pneg %p102
        %p186 = pneg %p99
        %p187 = pneg %p128
        %p188 = pneg %p125
        %s189 = sand.u32 %s115, 1
        %s190 = scalar_lea.sflag [#allocation3], %s189
        %s191 = sand.u32 %s115, 1
        %s192 = smul.addr %s191, 24
        %s193 = scalar_lea.vmem [#allocation2], %s192
        %s194 = smul.u32 8, %s18
        %p195 = scmp.lt.s32.totalorder %s194, 23
        %s196 = scalar_select %p195, %s194, 23
        %s197 = smul.addr %s196, 2
        %s198 = smul.addr %s197, 8
        %s199 = scalar_lea.vmem %s0, %s198
        %s200 = smul.u32 8, %s18
        %v201 = vld [vmem:[%s199] sm:$0xff]
        %v202 = vld [vmem:[%s199 + $0x8] sm:$0xff]
        %v203 = vld [vmem:[%s199 + $0x10] sm:$0xff]
        %v204 = vld [vmem:[%s199 + $0x18] sm:$0xff]
        %v205 = vld [vmem:[%s199 + $0x20] sm:$0xff]
        %v206 = vld [vmem:[%s199 + $0x28] sm:$0xff]
        %v207 = vld [vmem:[%s199 + $0x30] sm:$0xff]
        %v208 = vld [vmem:[%s199 + $0x38] sm:$0xff]
        %v209 = vld [vmem:[%s199 + $0x40] sm:$0xff]
        %v210 = vld [vmem:[%s199 + $0x48] sm:$0xff]
        %v211 = vld [vmem:[%s199 + $0x50] sm:$0xff]
        %v212 = vld [vmem:[%s199 + $0x58] sm:$0xff]
        %v213 = vld [vmem:[%s199 + $0x60] sm:$0xff]
        %v214 = vld [vmem:[%s199 + $0x68] sm:$0xff]
        %v215 = vld [vmem:[%s199 + $0x70] sm:$0xff]
        %v216 = vld [vmem:[%s199 + $0x78] sm:$0xff]
        %v217 = vld [vmem:[%s1] sm:$0xff]
        %v218 = vld [vmem:[%s1 + $0x8] sm:$0xff]
        %v219 = vld [vmem:[%s1 + $0x10] sm:$0xff]
        %v220 = vld [vmem:[%s1 + $0x18] sm:$0xff]
        %v221 = vld [vmem:[%s1 + $0x20] sm:$0xff]
        %v222 = vld [vmem:[%s1 + $0x28] sm:$0xff]
        %v223 = vld [vmem:[%s1 + $0x30] sm:$0xff]
        %v224 = vld [vmem:[%s1 + $0x38] sm:$0xff]
        %v225 = vld [vmem:[%s1 + $0x40] sm:$0xff]
        %v226 = vld [vmem:[%s1 + $0x48] sm:$0xff]
        %v227 = vld [vmem:[%s1 + $0x50] sm:$0xff]
        %v228 = vld [vmem:[%s1 + $0x58] sm:$0xff]
        %v229 = vld [vmem:[%s1 + $0x60] sm:$0xff]
        %v230 = vld [vmem:[%s1 + $0x68] sm:$0xff]
        %v231 = vld [vmem:[%s1 + $0x70] sm:$0xff]
        %v232 = vld [vmem:[%s1 + $0x78] sm:$0xff]
        %v233 = vld [vmem:[%s1 + $0x80] sm:$0xff]
        %v234 = vld [vmem:[%s1 + $0x88] sm:$0xff]
        %v235 = vld [vmem:[%s1 + $0x90] sm:$0xff]
        %v236 = vld [vmem:[%s1 + $0x98] sm:$0xff]
        %v237 = vld [vmem:[%s1 + $0xa0] sm:$0xff]
        %v238 = vld [vmem:[%s1 + $0xa8] sm:$0xff]
        %v239 = vld [vmem:[%s1 + $0xb0] sm:$0xff]
        %v240 = vld [vmem:[%s1 + $0xb8] sm:$0xff]
        %v241 = vld [vmem:[%s1 + $0xc0] sm:$0xff]
        %v242 = vld [vmem:[%s1 + $0xc8] sm:$0xff]
        %v243 = vld [vmem:[%s1 + $0xd0] sm:$0xff]
        %v244 = vld [vmem:[%s1 + $0xd8] sm:$0xff]
        %v245 = vld [vmem:[%s1 + $0xe0] sm:$0xff]
        %v246 = vld [vmem:[%s1 + $0xe8] sm:$0xff]
        %v247 = vld [vmem:[%s1 + $0xf0] sm:$0xff]
        %v248 = vld [vmem:[%s1 + $0xf8] sm:$0xff]
        %v249 = vld [vmem:[%s1 + $0x100] sm:$0xff]
        %v250 = vld [vmem:[%s1 + $0x108] sm:$0xff]
        %v251 = vld [vmem:[%s1 + $0x110] sm:$0xff]
        %v252 = vld [vmem:[%s1 + $0x118] sm:$0xff]
        %v253 = vld [vmem:[%s1 + $0x120] sm:$0xff]
        %v254 = vld [vmem:[%s1 + $0x128] sm:$0xff]
        %v255 = vld [vmem:[%s1 + $0x130] sm:$0xff]
        %v256 = vld [vmem:[%s1 + $0x138] sm:$0xff]
        %v257 = vld [vmem:[%s1 + $0x140] sm:$0xff]
        %v258 = vld [vmem:[%s1 + $0x148] sm:$0xff]
        %v259 = vld [vmem:[%s1 + $0x150] sm:$0xff]
        %v260 = vld [vmem:[%s1 + $0x158] sm:$0xff]
        %v261 = vld [vmem:[%s1 + $0x160] sm:$0xff]
        %v262 = vld [vmem:[%s1 + $0x168] sm:$0xff]
        %v263 = vld [vmem:[%s1 + $0x170] sm:$0xff]
        %v264 = vld [vmem:[%s1 + $0x178] sm:$0xff]
        %s265 = scalar_lea.vmem %s1, 384
        %v266 = vld [vmem:[%s265] sm:$0xff]
        %v267 = vld [vmem:[%s265 + $0x8] sm:$0xff]
        %v268 = vld [vmem:[%s265 + $0x10] sm:$0xff]
        %v269 = vld [vmem:[%s265 + $0x18] sm:$0xff]
        %v270 = vld [vmem:[%s265 + $0x20] sm:$0xff]
        %v271 = vld [vmem:[%s265 + $0x28] sm:$0xff]
        %v272 = vld [vmem:[%s265 + $0x30] sm:$0xff]
        %v273 = vld [vmem:[%s265 + $0x38] sm:$0xff]
        %v274 = vld [vmem:[%s265 + $0x40] sm:$0xff]
        %v275 = vld [vmem:[%s265 + $0x48] sm:$0xff]
        %v276 = vld [vmem:[%s265 + $0x50] sm:$0xff]
        %v277 = vld [vmem:[%s265 + $0x58] sm:$0xff]
        %v278 = vld [vmem:[%s265 + $0x60] sm:$0xff]
        %v279 = vld [vmem:[%s265 + $0x68] sm:$0xff]
        %v280 = vld [vmem:[%s265 + $0x70] sm:$0xff]
        %v281 = vld [vmem:[%s265 + $0x78] sm:$0xff]
        %v282 = vld [vmem:[%s265 + $0x80] sm:$0xff]
        %v283 = vld [vmem:[%s265 + $0x88] sm:$0xff]
        %v284 = vld [vmem:[%s265 + $0x90] sm:$0xff]
        %v285 = vld [vmem:[%s265 + $0x98] sm:$0xff]
        %v286 = vld [vmem:[%s265 + $0xa0] sm:$0xff]
        %v287 = vld [vmem:[%s265 + $0xa8] sm:$0xff]
        %v288 = vld [vmem:[%s265 + $0xb0] sm:$0xff]
        %v289 = vld [vmem:[%s265 + $0xb8] sm:$0xff]
        %v290 = vld [vmem:[%s265 + $0xc0] sm:$0xff]
        %v291 = vld [vmem:[%s265 + $0xc8] sm:$0xff]
        %v292 = vld [vmem:[%s265 + $0xd0] sm:$0xff]
        %v293 = vld [vmem:[%s265 + $0xd8] sm:$0xff]
        %v294 = vld [vmem:[%s265 + $0xe0] sm:$0xff]
        %v295 = vld [vmem:[%s265 + $0xe8] sm:$0xff]
        %v296 = vld [vmem:[%s265 + $0xf0] sm:$0xff]
        %v297 = vld [vmem:[%s265 + $0xf8] sm:$0xff]
        %v298 = vld [vmem:[%s265 + $0x100] sm:$0xff]
        %v299 = vld [vmem:[%s265 + $0x108] sm:$0xff]
        %v300 = vld [vmem:[%s265 + $0x110] sm:$0xff]
        %v301 = vld [vmem:[%s265 + $0x118] sm:$0xff]
        %v302 = vld [vmem:[%s265 + $0x120] sm:$0xff]
        %v303 = vld [vmem:[%s265 + $0x128] sm:$0xff]
        %v304 = vld [vmem:[%s265 + $0x130] sm:$0xff]
        %v305 = vld [vmem:[%s265 + $0x138] sm:$0xff]
        %v306 = vld [vmem:[%s265 + $0x140] sm:$0xff]
        %v307 = vld [vmem:[%s265 + $0x148] sm:$0xff]
        %v308 = vld [vmem:[%s265 + $0x150] sm:$0xff]
        %v309 = vld [vmem:[%s265 + $0x158] sm:$0xff]
        %v310 = vld [vmem:[%s265 + $0x160] sm:$0xff]
        %v311 = vld [vmem:[%s265 + $0x168] sm:$0xff]
        %v312 = vld [vmem:[%s265 + $0x170] sm:$0xff]
        %v313 = vld [vmem:[%s265 + $0x178] sm:$0xff]
        %314 = vmatpush.msra.mxu0 %v311
        %315 = vmatpush.msra.mxu0 %v308
        %316 = vmatpush.msra.mxu0 %v305
        %317 = vmatpush.msra.mxu0 %v302
        %318 = vmatpush.msra.mxu0 %v299
        %319 = vmatpush.msra.mxu0 %v296
        %320 = vmatpush.msra.mxu0 %v293
        %321 = vmatpush.msra.mxu0 %v290
        %322 = vmatpush.msra.mxu0 %v287
        %323 = vmatpush.msra.mxu0 %v284
        %324 = vmatpush.msra.mxu0 %v281
        %325 = vmatpush.msra.mxu0 %v278
        %326 = vmatpush.msra.mxu0 %v275
        %327 = vmatpush.msra.mxu0 %v272
        %328 = vmatpush.msra.mxu0 %v269
        %329 = vmatpush.msra.mxu0 %v266
        %330 = vmatmul.f32.gmra.mxu0 %v201
        %v331 = vpop.f32.mrf.mxu0
        %v332 = vadd.f32 0.0, %v331
        %333 = vmatmul.f32.gmra.mxu0 %v202
        %v334 = vpop.f32.mrf.mxu0
        %v335 = vadd.f32 0.0, %v334
        %336 = vmatmul.f32.gmra.mxu0 %v203
        %v337 = vpop.f32.mrf.mxu0
        %v338 = vadd.f32 0.0, %v337
        %339 = vmatmul.f32.gmra.mxu0 %v204
        %v340 = vpop.f32.mrf.mxu0
        %v341 = vadd.f32 0.0, %v340
        %342 = vmatmul.f32.gmra.mxu0 %v205
        %v343 = vpop.f32.mrf.mxu0
        %v344 = vadd.f32 0.0, %v343
        %345 = vmatmul.f32.gmra.mxu0 %v206
        %v346 = vpop.f32.mrf.mxu0
        %v347 = vadd.f32 0.0, %v346
        %348 = vmatmul.f32.gmra.mxu0 %v207
        %v349 = vpop.f32.mrf.mxu0
        %v350 = vadd.f32 0.0, %v349
        %351 = vmatmul.f32.gmra.mxu0 %v208
        %v352 = vpop.f32.mrf.mxu0
        %v353 = vadd.f32 0.0, %v352
        %354 = vmatmul.f32.gmra.mxu0 %v209
        %v355 = vpop.f32.mrf.mxu0
        %v356 = vadd.f32 0.0, %v355
        %357 = vmatmul.f32.gmra.mxu0 %v210
        %v358 = vpop.f32.mrf.mxu0
        %v359 = vadd.f32 0.0, %v358
        %360 = vmatmul.f32.gmra.mxu0 %v211
        %v361 = vpop.f32.mrf.mxu0
        %v362 = vadd.f32 0.0, %v361
        %363 = vmatmul.f32.gmra.mxu0 %v212
        %v364 = vpop.f32.mrf.mxu0
        %v365 = vadd.f32 0.0, %v364
        %366 = vmatmul.f32.gmra.mxu0 %v213
        %v367 = vpop.f32.mrf.mxu0
        %v368 = vadd.f32 0.0, %v367
        %369 = vmatmul.f32.gmra.mxu0 %v214
        %v370 = vpop.f32.mrf.mxu0
        %v371 = vadd.f32 0.0, %v370
        %372 = vmatmul.f32.gmra.mxu0 %v215
        %v373 = vpop.f32.mrf.mxu0
        %v374 = vadd.f32 0.0, %v373
        %375 = vmatmul.f32.gmra.mxu0 %v216
        %v376 = vpop.f32.mrf.mxu0
        %v377 = vadd.f32 0.0, %v376
        %378 = vdwg.mxu0
        %379 = vmatpush.msra.mxu0 %v312
        %380 = vmatpush.msra.mxu0 %v309
        %381 = vmatpush.msra.mxu0 %v306
        %382 = vmatpush.msra.mxu0 %v303
        %383 = vmatpush.msra.mxu0 %v300
        %384 = vmatpush.msra.mxu0 %v297
        %385 = vmatpush.msra.mxu0 %v294
        %386 = vmatpush.msra.mxu0 %v291
        %387 = vmatpush.msra.mxu0 %v288
        %388 = vmatpush.msra.mxu0 %v285
        %389 = vmatpush.msra.mxu0 %v282
        %390 = vmatpush.msra.mxu0 %v279
        %391 = vmatpush.msra.mxu0 %v276
        %392 = vmatpush.msra.mxu0 %v273
        %393 = vmatpush.msra.mxu0 %v270
        %394 = vmatpush.msra.mxu0 %v267
        %395 = vmatmul.f32.gmra.mxu0 %v201
        %v396 = vpop.f32.mrf.mxu0
        %v397 = vadd.f32 0.0, %v396
        %398 = vmatmul.f32.gmra.mxu0 %v202
        %v399 = vpop.f32.mrf.mxu0
        %v400 = vadd.f32 0.0, %v399
        %401 = vmatmul.f32.gmra.mxu0 %v203
        %v402 = vpop.f32.mrf.mxu0
        %v403 = vadd.f32 0.0, %v402
        %404 = vmatmul.f32.gmra.mxu0 %v204
        %v405 = vpop.f32.mrf.mxu0
        %v406 = vadd.f32 0.0, %v405
        %407 = vmatmul.f32.gmra.mxu0 %v205
        %v408 = vpop.f32.mrf.mxu0
        %v409 = vadd.f32 0.0, %v408
        %410 = vmatmul.f32.gmra.mxu0 %v206
        %v411 = vpop.f32.mrf.mxu0
        %v412 = vadd.f32 0.0, %v411
        %413 = vmatmul.f32.gmra.mxu0 %v207
        %v414 = vpop.f32.mrf.mxu0
        %v415 = vadd.f32 0.0, %v414
        %416 = vmatmul.f32.gmra.mxu0 %v208
        %v417 = vpop.f32.mrf.mxu0
        %v418 = vadd.f32 0.0, %v417
        %419 = vmatmul.f32.gmra.mxu0 %v209
        %v420 = vpop.f32.mrf.mxu0
        %v421 = vadd.f32 0.0, %v420
        %422 = vmatmul.f32.gmra.mxu0 %v210
        %v423 = vpop.f32.mrf.mxu0
        %v424 = vadd.f32 0.0, %v423
        %425 = vmatmul.f32.gmra.mxu0 %v211
        %v426 = vpop.f32.mrf.mxu0
        %v427 = vadd.f32 0.0, %v426
        %428 = vmatmul.f32.gmra.mxu0 %v212
        %v429 = vpop.f32.mrf.mxu0
        %v430 = vadd.f32 0.0, %v429
        %431 = vmatmul.f32.gmra.mxu0 %v213
        %v432 = vpop.f32.mrf.mxu0
        %v433 = vadd.f32 0.0, %v432
        %434 = vmatmul.f32.gmra.mxu0 %v214
        %v435 = vpop.f32.mrf.mxu0
        %v436 = vadd.f32 0.0, %v435
        %437 = vmatmul.f32.gmra.mxu0 %v215
        %v438 = vpop.f32.mrf.mxu0
        %v439 = vadd.f32 0.0, %v438
        %440 = vmatmul.f32.gmra.mxu0 %v216
        %v441 = vpop.f32.mrf.mxu0
        %v442 = vadd.f32 0.0, %v441
        %443 = vdwg.mxu0
        %444 = vmatpush.msra.mxu0 %v313
        %445 = vmatpush.msra.mxu0 %v310
        %446 = vmatpush.msra.mxu0 %v307
        %447 = vmatpush.msra.mxu0 %v304
        %448 = vmatpush.msra.mxu0 %v301
        %449 = vmatpush.msra.mxu0 %v298
        %450 = vmatpush.msra.mxu0 %v295
        %451 = vmatpush.msra.mxu0 %v292
        %452 = vmatpush.msra.mxu0 %v289
        %453 = vmatpush.msra.mxu0 %v286
        %454 = vmatpush.msra.mxu0 %v283
        %455 = vmatpush.msra.mxu0 %v280
        %456 = vmatpush.msra.mxu0 %v277
        %457 = vmatpush.msra.mxu0 %v274
        %458 = vmatpush.msra.mxu0 %v271
        %459 = vmatpush.msra.mxu0 %v268
        %460 = vmatmul.f32.gmra.mxu0 %v201
        %v461 = vpop.f32.mrf.mxu0
        %v462 = vadd.f32 0.0, %v461
        %463 = vmatmul.f32.gmra.mxu0 %v202
        %v464 = vpop.f32.mrf.mxu0
        %v465 = vadd.f32 0.0, %v464
        %466 = vmatmul.f32.gmra.mxu0 %v203
        %v467 = vpop.f32.mrf.mxu0
        %v468 = vadd.f32 0.0, %v467
        %469 = vmatmul.f32.gmra.mxu0 %v204
        %v470 = vpop.f32.mrf.mxu0
        %v471 = vadd.f32 0.0, %v470
        %472 = vmatmul.f32.gmra.mxu0 %v205
        %v473 = vpop.f32.mrf.mxu0
        %v474 = vadd.f32 0.0, %v473
        %475 = vmatmul.f32.gmra.mxu0 %v206
        %v476 = vpop.f32.mrf.mxu0
        %v477 = vadd.f32 0.0, %v476
        %478 = vmatmul.f32.gmra.mxu0 %v207
        %v479 = vpop.f32.mrf.mxu0
        %v480 = vadd.f32 0.0, %v479
        %481 = vmatmul.f32.gmra.mxu0 %v208
        %v482 = vpop.f32.mrf.mxu0
        %v483 = vadd.f32 0.0, %v482
        %484 = vmatmul.f32.gmra.mxu0 %v209
        %v485 = vpop.f32.mrf.mxu0
        %v486 = vadd.f32 0.0, %v485
        %487 = vmatmul.f32.gmra.mxu0 %v210
        %v488 = vpop.f32.mrf.mxu0
        %v489 = vadd.f32 0.0, %v488
        %490 = vmatmul.f32.gmra.mxu0 %v211
        %v491 = vpop.f32.mrf.mxu0
        %v492 = vadd.f32 0.0, %v491
        %493 = vmatmul.f32.gmra.mxu0 %v212
        %v494 = vpop.f32.mrf.mxu0
        %v495 = vadd.f32 0.0, %v494
        %496 = vmatmul.f32.gmra.mxu0 %v213
        %v497 = vpop.f32.mrf.mxu0
        %v498 = vadd.f32 0.0, %v497
        %499 = vmatmul.f32.gmra.mxu0 %v214
        %v500 = vpop.f32.mrf.mxu0
        %v501 = vadd.f32 0.0, %v500
        %502 = vmatmul.f32.gmra.mxu0 %v215
        %v503 = vpop.f32.mrf.mxu0
        %v504 = vadd.f32 0.0, %v503
        %505 = vmatmul.f32.gmra.mxu0 %v216
        %v506 = vpop.f32.mrf.mxu0
        %v507 = vadd.f32 0.0, %v506
        %508 = vdwg.mxu0
        %v509 = vrot.slane %v332, 1
        %v510 = vrot.slane %v397, 1
        %v511 = vrot.slane %v462, 1
        %v512 = vrot.slane %v335, 1
        %v513 = vrot.slane %v400, 1
        %v514 = vrot.slane %v465, 1
        %v515 = vrot.slane %v338, 1
        %v516 = vrot.slane %v403, 1
        %v517 = vrot.slane %v468, 1
        %v518 = vrot.slane %v341, 1
        %v519 = vrot.slane %v406, 1
        %v520 = vrot.slane %v471, 1
        %v521 = vrot.slane %v344, 1
        %v522 = vrot.slane %v409, 1
        %v523 = vrot.slane %v474, 1
        %v524 = vrot.slane %v347, 1
        %v525 = vrot.slane %v412, 1
        %v526 = vrot.slane %v477, 1
        %v527 = vrot.slane %v350, 1
        %v528 = vrot.slane %v415, 1
        %v529 = vrot.slane %v480, 1
        %v530 = vrot.slane %v353, 1
        %v531 = vrot.slane %v418, 1
        %v532 = vrot.slane %v483, 1
        %v533 = vrot.slane %v356, 1
        %v534 = vrot.slane %v421, 1
        %v535 = vrot.slane %v486, 1
        %v536 = vrot.slane %v359, 1
        %v537 = vrot.slane %v424, 1
        %v538 = vrot.slane %v489, 1
        %v539 = vrot.slane %v362, 1
        %v540 = vrot.slane %v427, 1
        %v541 = vrot.slane %v492, 1
        %v542 = vrot.slane %v365, 1
        %v543 = vrot.slane %v430, 1
        %v544 = vrot.slane %v495, 1
        %v545 = vrot.slane %v368, 1
        %v546 = vrot.slane %v433, 1
        %v547 = vrot.slane %v498, 1
        %v548 = vrot.slane %v371, 1
        %v549 = vrot.slane %v436, 1
        %v550 = vrot.slane %v501, 1
        %v551 = vrot.slane %v374, 1
        %v552 = vrot.slane %v439, 1
        %v553 = vrot.slane %v504, 1
        %v554 = vrot.slane %v377, 1
        %v555 = vrot.slane %v442, 1
        %v556 = vrot.slane %v507, 1
        %v557 = vlaneseq
        %v558 = vshrl.u32 %v557, 7
        %vm559 = vcmp.lt.s32.totalorder %v558, 7
        %v560 = vsel %vm559, %v551, %v554
        %v561 = vsel %vm559, %v552, %v555
        %v562 = vsel %vm559, %v553, %v556
        %v563 = vsel %vm559, %v548, %v551
        %v564 = vsel %vm559, %v549, %v552
        %v565 = vsel %vm559, %v550, %v553
        %v566 = vsel %vm559, %v545, %v548
        %v567 = vsel %vm559, %v546, %v549
        %v568 = vsel %vm559, %v547, %v550
        %v569 = vsel %vm559, %v542, %v545
        %v570 = vsel %vm559, %v543, %v546
        %v571 = vsel %vm559, %v544, %v547
        %v572 = vsel %vm559, %v539, %v542
        %v573 = vsel %vm559, %v540, %v543
        %v574 = vsel %vm559, %v541, %v544
        %v575 = vsel %vm559, %v536, %v539
        %v576 = vsel %vm559, %v537, %v540
        %v577 = vsel %vm559, %v538, %v541
        %v578 = vsel %vm559, %v533, %v536
        %v579 = vsel %vm559, %v534, %v537
        %v580 = vsel %vm559, %v535, %v538
        %v581 = vsel %vm559, %v530, %v533
        %v582 = vsel %vm559, %v531, %v534
        %v583 = vsel %vm559, %v532, %v535
        %v584 = vsel %vm559, %v527, %v530
        %v585 = vsel %vm559, %v528, %v531
        %v586 = vsel %vm559, %v529, %v532
        %v587 = vsel %vm559, %v524, %v527
        %v588 = vsel %vm559, %v525, %v528
        %v589 = vsel %vm559, %v526, %v529
        %v590 = vsel %vm559, %v521, %v524
        %v591 = vsel %vm559, %v522, %v525
        %v592 = vsel %vm559, %v523, %v526
        %v593 = vsel %vm559, %v518, %v521
        %v594 = vsel %vm559, %v519, %v522
        %v595 = vsel %vm559, %v520, %v523
        %v596 = vsel %vm559, %v515, %v518
        %v597 = vsel %vm559, %v516, %v519
        %v598 = vsel %vm559, %v517, %v520
        %v599 = vsel %vm559, %v512, %v515
        %v600 = vsel %vm559, %v513, %v516
        %v601 = vsel %vm559, %v514, %v517
        %v602 = vsel %vm559, %v509, %v512
        %v603 = vsel %vm559, %v510, %v513
        %v604 = vsel %vm559, %v511, %v514
        %v605 = vsel %vm559, %v554, %v509
        %v606 = vsel %vm559, %v555, %v510
        %v607 = vsel %vm559, %v556, %v511
        %608 = vmatpush.msra.mxu0 %v262
        %609 = vmatpush.msra.mxu0 %v259
        %610 = vmatpush.msra.mxu0 %v256
        %611 = vmatpush.msra.mxu0 %v253
        %612 = vmatpush.msra.mxu0 %v250
        %613 = vmatpush.msra.mxu0 %v247
        %614 = vmatpush.msra.mxu0 %v244
        %615 = vmatpush.msra.mxu0 %v241
        %616 = vmatpush.msra.mxu0 %v238
        %617 = vmatpush.msra.mxu0 %v235
        %618 = vmatpush.msra.mxu0 %v232
        %619 = vmatpush.msra.mxu0 %v229
        %620 = vmatpush.msra.mxu0 %v226
        %621 = vmatpush.msra.mxu0 %v223
        %622 = vmatpush.msra.mxu0 %v220
        %623 = vmatpush.msra.mxu0 %v217
        %624 = vmatmul.f32.gmra.mxu0 %v201
        %v625 = vpop.f32.mrf.mxu0
        %v626 = vadd.f32 %v602, %v625
        %627 = vmatmul.f32.gmra.mxu0 %v202
        %v628 = vpop.f32.mrf.mxu0
        %v629 = vadd.f32 %v599, %v628
        %630 = vmatmul.f32.gmra.mxu0 %v203
        %v631 = vpop.f32.mrf.mxu0
        %v632 = vadd.f32 %v596, %v631
        %633 = vmatmul.f32.gmra.mxu0 %v204
        %v634 = vpop.f32.mrf.mxu0
        %v635 = vadd.f32 %v593, %v634
        %636 = vmatmul.f32.gmra.mxu0 %v205
        %v637 = vpop.f32.mrf.mxu0
        %v638 = vadd.f32 %v590, %v637
        %639 = vmatmul.f32.gmra.mxu0 %v206
        %v640 = vpop.f32.mrf.mxu0
        %v641 = vadd.f32 %v587, %v640
        %642 = vmatmul.f32.gmra.mxu0 %v207
        %v643 = vpop.f32.mrf.mxu0
        %v644 = vadd.f32 %v584, %v643
        %645 = vmatmul.f32.gmra.mxu0 %v208
        %v646 = vpop.f32.mrf.mxu0
        %v647 = vadd.f32 %v581, %v646
        %648 = vmatmul.f32.gmra.mxu0 %v209
        %v649 = vpop.f32.mrf.mxu0
        %v650 = vadd.f32 %v578, %v649
        %651 = vmatmul.f32.gmra.mxu0 %v210
        %v652 = vpop.f32.mrf.mxu0
        %v653 = vadd.f32 %v575, %v652
        %654 = vmatmul.f32.gmra.mxu0 %v211
        %v655 = vpop.f32.mrf.mxu0
        %v656 = vadd.f32 %v572, %v655
        %657 = vmatmul.f32.gmra.mxu0 %v212
        %v658 = vpop.f32.mrf.mxu0
        %v659 = vadd.f32 %v569, %v658
        %660 = vmatmul.f32.gmra.mxu0 %v213
        %v661 = vpop.f32.mrf.mxu0
        %v662 = vadd.f32 %v566, %v661
        %663 = vmatmul.f32.gmra.mxu0 %v214
        %v664 = vpop.f32.mrf.mxu0
        %v665 = vadd.f32 %v563, %v664
        %666 = vmatmul.f32.gmra.mxu0 %v215
        %v667 = vpop.f32.mrf.mxu0
        %v668 = vadd.f32 %v560, %v667
        %669 = vmatmul.f32.gmra.mxu0 %v216
        %v670 = vpop.f32.mrf.mxu0
        %v671 = vadd.f32 %v605, %v670
        %672 = vdwg.mxu0
        %673 = vmatpush.msra.mxu0 %v263
        %674 = vmatpush.msra.mxu0 %v260
        %675 = vmatpush.msra.mxu0 %v257
        %676 = vmatpush.msra.mxu0 %v254
        %677 = vmatpush.msra.mxu0 %v251
        %678 = vmatpush.msra.mxu0 %v248
        %679 = vmatpush.msra.mxu0 %v245
        %680 = vmatpush.msra.mxu0 %v242
        %681 = vmatpush.msra.mxu0 %v239
        %682 = vmatpush.msra.mxu0 %v236
        %683 = vmatpush.msra.mxu0 %v233
        %684 = vmatpush.msra.mxu0 %v230
        %685 = vmatpush.msra.mxu0 %v227
        %686 = vmatpush.msra.mxu0 %v224
        %687 = vmatpush.msra.mxu0 %v221
        %688 = vmatpush.msra.mxu0 %v218
        %689 = vmatmul.f32.gmra.mxu0 %v201
        %v690 = vpop.f32.mrf.mxu0
        %v691 = vadd.f32 %v603, %v690
        %692 = vmatmul.f32.gmra.mxu0 %v202
        %v693 = vpop.f32.mrf.mxu0
        %v694 = vadd.f32 %v600, %v693
        %695 = vmatmul.f32.gmra.mxu0 %v203
        %v696 = vpop.f32.mrf.mxu0
        %v697 = vadd.f32 %v597, %v696
        %698 = vmatmul.f32.gmra.mxu0 %v204
        %v699 = vpop.f32.mrf.mxu0
        %v700 = vadd.f32 %v594, %v699
        %701 = vmatmul.f32.gmra.mxu0 %v205
        %v702 = vpop.f32.mrf.mxu0
        %v703 = vadd.f32 %v591, %v702
        %704 = vmatmul.f32.gmra.mxu0 %v206
        %v705 = vpop.f32.mrf.mxu0
        %v706 = vadd.f32 %v588, %v705
        %707 = vmatmul.f32.gmra.mxu0 %v207
        %v708 = vpop.f32.mrf.mxu0
        %v709 = vadd.f32 %v585, %v708
        %710 = vmatmul.f32.gmra.mxu0 %v208
        %v711 = vpop.f32.mrf.mxu0
        %v712 = vadd.f32 %v582, %v711
        %713 = vmatmul.f32.gmra.mxu0 %v209
        %v714 = vpop.f32.mrf.mxu0
        %v715 = vadd.f32 %v579, %v714
        %716 = vmatmul.f32.gmra.mxu0 %v210
        %v717 = vpop.f32.mrf.mxu0
        %v718 = vadd.f32 %v576, %v717
        %719 = vmatmul.f32.gmra.mxu0 %v211
        %v720 = vpop.f32.mrf.mxu0
        %v721 = vadd.f32 %v573, %v720
        %722 = vmatmul.f32.gmra.mxu0 %v212
        %v723 = vpop.f32.mrf.mxu0
        %v724 = vadd.f32 %v570, %v723
        %725 = vmatmul.f32.gmra.mxu0 %v213
        %v726 = vpop.f32.mrf.mxu0
        %v727 = vadd.f32 %v567, %v726
        %728 = vmatmul.f32.gmra.mxu0 %v214
        %v729 = vpop.f32.mrf.mxu0
        %v730 = vadd.f32 %v564, %v729
        %731 = vmatmul.f32.gmra.mxu0 %v215
        %v732 = vpop.f32.mrf.mxu0
        %v733 = vadd.f32 %v561, %v732
        %734 = vmatmul.f32.gmra.mxu0 %v216
        %v735 = vpop.f32.mrf.mxu0
        %v736 = vadd.f32 %v606, %v735
        %737 = vdwg.mxu0
        %738 = vmatpush.msra.mxu0 %v264
        %739 = vmatpush.msra.mxu0 %v261
        %740 = vmatpush.msra.mxu0 %v258
        %741 = vmatpush.msra.mxu0 %v255
        %742 = vmatpush.msra.mxu0 %v252
        %743 = vmatpush.msra.mxu0 %v249
        %744 = vmatpush.msra.mxu0 %v246
        %745 = vmatpush.msra.mxu0 %v243
        %746 = vmatpush.msra.mxu0 %v240
        %747 = vmatpush.msra.mxu0 %v237
        %748 = vmatpush.msra.mxu0 %v234
        %749 = vmatpush.msra.mxu0 %v231
        %750 = vmatpush.msra.mxu0 %v228
        %751 = vmatpush.msra.mxu0 %v225
        %752 = vmatpush.msra.mxu0 %v222
        %753 = vmatpush.msra.mxu0 %v219
        %754 = vmatmul.f32.gmra.mxu0 %v201
        %v755 = vpop.f32.mrf.mxu0
        %v756 = vadd.f32 %v604, %v755
        %757 = vmatmul.f32.gmra.mxu0 %v202
        %v758 = vpop.f32.mrf.mxu0
        %v759 = vadd.f32 %v601, %v758
        %760 = vmatmul.f32.gmra.mxu0 %v203
        %v761 = vpop.f32.mrf.mxu0
        %v762 = vadd.f32 %v598, %v761
        %763 = vmatmul.f32.gmra.mxu0 %v204
        %v764 = vpop.f32.mrf.mxu0
        %v765 = vadd.f32 %v595, %v764
        %766 = vmatmul.f32.gmra.mxu0 %v205
        %v767 = vpop.f32.mrf.mxu0
        %v768 = vadd.f32 %v592, %v767
        %769 = vmatmul.f32.gmra.mxu0 %v206
        %v770 = vpop.f32.mrf.mxu0
        %v771 = vadd.f32 %v589, %v770
        %772 = vmatmul.f32.gmra.mxu0 %v207
        %v773 = vpop.f32.mrf.mxu0
        %v774 = vadd.f32 %v586, %v773
        %775 = vmatmul.f32.gmra.mxu0 %v208
        %v776 = vpop.f32.mrf.mxu0
        %v777 = vadd.f32 %v583, %v776
        %778 = vmatmul.f32.gmra.mxu0 %v209
        %v779 = vpop.f32.mrf.mxu0
        %v780 = vadd.f32 %v580, %v779
        %781 = vmatmul.f32.gmra.mxu0 %v210
        %v782 = vpop.f32.mrf.mxu0
        %v783 = vadd.f32 %v577, %v782
        %784 = vmatmul.f32.gmra.mxu0 %v211
        %v785 = vpop.f32.mrf.mxu0
        %v786 = vadd.f32 %v574, %v785
        %787 = vmatmul.f32.gmra.mxu0 %v212
        %v788 = vpop.f32.mrf.mxu0
        %v789 = vadd.f32 %v571, %v788
        %790 = vmatmul.f32.gmra.mxu0 %v213
        %v791 = vpop.f32.mrf.mxu0
        %v792 = vadd.f32 %v568, %v791
        %793 = vmatmul.f32.gmra.mxu0 %v214
        %v794 = vpop.f32.mrf.mxu0
        %v795 = vadd.f32 %v565, %v794
        %796 = vmatmul.f32.gmra.mxu0 %v215
        %v797 = vpop.f32.mrf.mxu0
        %v798 = vadd.f32 %v562, %v797
        %799 = vmatmul.f32.gmra.mxu0 %v216
        %v800 = vpop.f32.mrf.mxu0
        %v801 = vadd.f32 %v607, %v800
        %802 = vdwg.mxu0
        %s803 = scalar_lea.vmem %s1, 768
        %v804 = vld [vmem:[%s803] sm:$0xff]
        %v805 = vld [vmem:[%s803 + $0x8] sm:$0xff]
        %v806 = vld [vmem:[%s803 + $0x10] sm:$0xff]
        %v807 = vld [vmem:[%s803 + $0x18] sm:$0xff]
        %v808 = vld [vmem:[%s803 + $0x20] sm:$0xff]
        %v809 = vld [vmem:[%s803 + $0x28] sm:$0xff]
        %v810 = vld [vmem:[%s803 + $0x30] sm:$0xff]
        %v811 = vld [vmem:[%s803 + $0x38] sm:$0xff]
        %v812 = vld [vmem:[%s803 + $0x40] sm:$0xff]
        %v813 = vld [vmem:[%s803 + $0x48] sm:$0xff]
        %v814 = vld [vmem:[%s803 + $0x50] sm:$0xff]
        %v815 = vld [vmem:[%s803 + $0x58] sm:$0xff]
        %v816 = vld [vmem:[%s803 + $0x60] sm:$0xff]
        %v817 = vld [vmem:[%s803 + $0x68] sm:$0xff]
        %v818 = vld [vmem:[%s803 + $0x70] sm:$0xff]
        %v819 = vld [vmem:[%s803 + $0x78] sm:$0xff]
        %v820 = vld [vmem:[%s803 + $0x80] sm:$0xff]
        %v821 = vld [vmem:[%s803 + $0x88] sm:$0xff]
        %v822 = vld [vmem:[%s803 + $0x90] sm:$0xff]
        %v823 = vld [vmem:[%s803 + $0x98] sm:$0xff]
        %v824 = vld [vmem:[%s803 + $0xa0] sm:$0xff]
        %v825 = vld [vmem:[%s803 + $0xa8] sm:$0xff]
        %v826 = vld [vmem:[%s803 + $0xb0] sm:$0xff]
        %v827 = vld [vmem:[%s803 + $0xb8] sm:$0xff]
        %v828 = vld [vmem:[%s803 + $0xc0] sm:$0xff]
        %v829 = vld [vmem:[%s803 + $0xc8] sm:$0xff]
        %v830 = vld [vmem:[%s803 + $0xd0] sm:$0xff]
        %v831 = vld [vmem:[%s803 + $0xd8] sm:$0xff]
        %v832 = vld [vmem:[%s803 + $0xe0] sm:$0xff]
        %v833 = vld [vmem:[%s803 + $0xe8] sm:$0xff]
        %v834 = vld [vmem:[%s803 + $0xf0] sm:$0xff]
        %v835 = vld [vmem:[%s803 + $0xf8] sm:$0xff]
        %v836 = vld [vmem:[%s803 + $0x100] sm:$0xff]
        %v837 = vld [vmem:[%s803 + $0x108] sm:$0xff]
        %v838 = vld [vmem:[%s803 + $0x110] sm:$0xff]
        %v839 = vld [vmem:[%s803 + $0x118] sm:$0xff]
        %v840 = vld [vmem:[%s803 + $0x120] sm:$0xff]
        %v841 = vld [vmem:[%s803 + $0x128] sm:$0xff]
        %v842 = vld [vmem:[%s803 + $0x130] sm:$0xff]
        %v843 = vld [vmem:[%s803 + $0x138] sm:$0xff]
        %v844 = vld [vmem:[%s803 + $0x140] sm:$0xff]
        %v845 = vld [vmem:[%s803 + $0x148] sm:$0xff]
        %v846 = vld [vmem:[%s803 + $0x150] sm:$0xff]
        %v847 = vld [vmem:[%s803 + $0x158] sm:$0xff]
        %v848 = vld [vmem:[%s803 + $0x160] sm:$0xff]
        %v849 = vld [vmem:[%s803 + $0x168] sm:$0xff]
        %v850 = vld [vmem:[%s803 + $0x170] sm:$0xff]
        %v851 = vld [vmem:[%s803 + $0x178] sm:$0xff]
        %852 = vmatpush.msra.mxu0 %v849
        %853 = vmatpush.msra.mxu0 %v846
        %854 = vmatpush.msra.mxu0 %v843
        %855 = vmatpush.msra.mxu0 %v840
        %856 = vmatpush.msra.mxu0 %v837
        %857 = vmatpush.msra.mxu0 %v834
        %858 = vmatpush.msra.mxu0 %v831
        %859 = vmatpush.msra.mxu0 %v828
        %860 = vmatpush.msra.mxu0 %v825
        %861 = vmatpush.msra.mxu0 %v822
        %862 = vmatpush.msra.mxu0 %v819
        %863 = vmatpush.msra.mxu0 %v816
        %864 = vmatpush.msra.mxu0 %v813
        %865 = vmatpush.msra.mxu0 %v810
        %866 = vmatpush.msra.mxu0 %v807
        %867 = vmatpush.msra.mxu0 %v804
        %868 = vmatmul.f32.gmra.mxu0 %v201
        %v869 = vpop.f32.mrf.mxu0
        %v870 = vadd.f32 0.0, %v869
        %871 = vmatmul.f32.gmra.mxu0 %v202
        %v872 = vpop.f32.mrf.mxu0
        %v873 = vadd.f32 0.0, %v872
        %874 = vmatmul.f32.gmra.mxu0 %v203
        %v875 = vpop.f32.mrf.mxu0
        %v876 = vadd.f32 0.0, %v875
        %877 = vmatmul.f32.gmra.mxu0 %v204
        %v878 = vpop.f32.mrf.mxu0
        %v879 = vadd.f32 0.0, %v878
        %880 = vmatmul.f32.gmra.mxu0 %v205
        %v881 = vpop.f32.mrf.mxu0
        %v882 = vadd.f32 0.0, %v881
        %883 = vmatmul.f32.gmra.mxu0 %v206
        %v884 = vpop.f32.mrf.mxu0
        %v885 = vadd.f32 0.0, %v884
        %886 = vmatmul.f32.gmra.mxu0 %v207
        %v887 = vpop.f32.mrf.mxu0
        %v888 = vadd.f32 0.0, %v887
        %889 = vmatmul.f32.gmra.mxu0 %v208
        %v890 = vpop.f32.mrf.mxu0
        %v891 = vadd.f32 0.0, %v890
        %892 = vmatmul.f32.gmra.mxu0 %v209
        %v893 = vpop.f32.mrf.mxu0
        %v894 = vadd.f32 0.0, %v893
        %895 = vmatmul.f32.gmra.mxu0 %v210
        %v896 = vpop.f32.mrf.mxu0
        %v897 = vadd.f32 0.0, %v896
        %898 = vmatmul.f32.gmra.mxu0 %v211
        %v899 = vpop.f32.mrf.mxu0
        %v900 = vadd.f32 0.0, %v899
        %901 = vmatmul.f32.gmra.mxu0 %v212
        %v902 = vpop.f32.mrf.mxu0
        %v903 = vadd.f32 0.0, %v902
        %904 = vmatmul.f32.gmra.mxu0 %v213
        %v905 = vpop.f32.mrf.mxu0
        %v906 = vadd.f32 0.0, %v905
        %907 = vmatmul.f32.gmra.mxu0 %v214
        %v908 = vpop.f32.mrf.mxu0
        %v909 = vadd.f32 0.0, %v908
        %910 = vmatmul.f32.gmra.mxu0 %v215
        %v911 = vpop.f32.mrf.mxu0
        %v912 = vadd.f32 0.0, %v911
        %913 = vmatmul.f32.gmra.mxu0 %v216
        %v914 = vpop.f32.mrf.mxu0
        %v915 = vadd.f32 0.0, %v914
        %916 = vdwg.mxu0
        %917 = vmatpush.msra.mxu0 %v850
        %918 = vmatpush.msra.mxu0 %v847
        %919 = vmatpush.msra.mxu0 %v844
        %920 = vmatpush.msra.mxu0 %v841
        %921 = vmatpush.msra.mxu0 %v838
        %922 = vmatpush.msra.mxu0 %v835
        %923 = vmatpush.msra.mxu0 %v832
        %924 = vmatpush.msra.mxu0 %v829
        %925 = vmatpush.msra.mxu0 %v826
        %926 = vmatpush.msra.mxu0 %v823
        %927 = vmatpush.msra.mxu0 %v820
        %928 = vmatpush.msra.mxu0 %v817
        %929 = vmatpush.msra.mxu0 %v814
        %930 = vmatpush.msra.mxu0 %v811
        %931 = vmatpush.msra.mxu0 %v808
        %932 = vmatpush.msra.mxu0 %v805
        %933 = vmatmul.f32.gmra.mxu0 %v201
        %v934 = vpop.f32.mrf.mxu0
        %v935 = vadd.f32 0.0, %v934
        %936 = vmatmul.f32.gmra.mxu0 %v202
        %v937 = vpop.f32.mrf.mxu0
        %v938 = vadd.f32 0.0, %v937
        %939 = vmatmul.f32.gmra.mxu0 %v203
        %v940 = vpop.f32.mrf.mxu0
        %v941 = vadd.f32 0.0, %v940
        %942 = vmatmul.f32.gmra.mxu0 %v204
        %v943 = vpop.f32.mrf.mxu0
        %v944 = vadd.f32 0.0, %v943
        %945 = vmatmul.f32.gmra.mxu0 %v205
        %v946 = vpop.f32.mrf.mxu0
        %v947 = vadd.f32 0.0, %v946
        %948 = vmatmul.f32.gmra.mxu0 %v206
        %v949 = vpop.f32.mrf.mxu0
        %v950 = vadd.f32 0.0, %v949
        %951 = vmatmul.f32.gmra.mxu0 %v207
        %v952 = vpop.f32.mrf.mxu0
        %v953 = vadd.f32 0.0, %v952
        %954 = vmatmul.f32.gmra.mxu0 %v208
        %v955 = vpop.f32.mrf.mxu0
        %v956 = vadd.f32 0.0, %v955
        %957 = vmatmul.f32.gmra.mxu0 %v209
        %v958 = vpop.f32.mrf.mxu0
        %v959 = vadd.f32 0.0, %v958
        %960 = vmatmul.f32.gmra.mxu0 %v210
        %v961 = vpop.f32.mrf.mxu0
        %v962 = vadd.f32 0.0, %v961
        %963 = vmatmul.f32.gmra.mxu0 %v211
        %v964 = vpop.f32.mrf.mxu0
        %v965 = vadd.f32 0.0, %v964
        %966 = vmatmul.f32.gmra.mxu0 %v212
        %v967 = vpop.f32.mrf.mxu0
        %v968 = vadd.f32 0.0, %v967
        %969 = vmatmul.f32.gmra.mxu0 %v213
        %v970 = vpop.f32.mrf.mxu0
        %v971 = vadd.f32 0.0, %v970
        %972 = vmatmul.f32.gmra.mxu0 %v214
        %v973 = vpop.f32.mrf.mxu0
        %v974 = vadd.f32 0.0, %v973
        %975 = vmatmul.f32.gmra.mxu0 %v215
        %v976 = vpop.f32.mrf.mxu0
        %v977 = vadd.f32 0.0, %v976
        %978 = vmatmul.f32.gmra.mxu0 %v216
        %v979 = vpop.f32.mrf.mxu0
        %v980 = vadd.f32 0.0, %v979
        %981 = vdwg.mxu0
        %982 = vmatpush.msra.mxu0 %v851
        %983 = vmatpush.msra.mxu0 %v848
        %984 = vmatpush.msra.mxu0 %v845
        %985 = vmatpush.msra.mxu0 %v842
        %986 = vmatpush.msra.mxu0 %v839
        %987 = vmatpush.msra.mxu0 %v836
        %988 = vmatpush.msra.mxu0 %v833
        %989 = vmatpush.msra.mxu0 %v830
        %990 = vmatpush.msra.mxu0 %v827
        %991 = vmatpush.msra.mxu0 %v824
        %992 = vmatpush.msra.mxu0 %v821
        %993 = vmatpush.msra.mxu0 %v818
        %994 = vmatpush.msra.mxu0 %v815
        %995 = vmatpush.msra.mxu0 %v812
        %996 = vmatpush.msra.mxu0 %v809
        %997 = vmatpush.msra.mxu0 %v806
        %998 = vmatmul.f32.gmra.mxu0 %v201
        %v999 = vpop.f32.mrf.mxu0
        %v1000 = vadd.f32 0.0, %v999
        %1001 = vmatmul.f32.gmra.mxu0 %v202
        %v1002 = vpop.f32.mrf.mxu0
        %v1003 = vadd.f32 0.0, %v1002
        %1004 = vmatmul.f32.gmra.mxu0 %v203
        %v1005 = vpop.f32.mrf.mxu0
        %v1006 = vadd.f32 0.0, %v1005
        %1007 = vmatmul.f32.gmra.mxu0 %v204
        %v1008 = vpop.f32.mrf.mxu0
        %v1009 = vadd.f32 0.0, %v1008
        %1010 = vmatmul.f32.gmra.mxu0 %v205
        %v1011 = vpop.f32.mrf.mxu0
        %v1012 = vadd.f32 0.0, %v1011
        %1013 = vmatmul.f32.gmra.mxu0 %v206
        %v1014 = vpop.f32.mrf.mxu0
        %v1015 = vadd.f32 0.0, %v1014
        %1016 = vmatmul.f32.gmra.mxu0 %v207
        %v1017 = vpop.f32.mrf.mxu0
        %v1018 = vadd.f32 0.0, %v1017
        %1019 = vmatmul.f32.gmra.mxu0 %v208
        %v1020 = vpop.f32.mrf.mxu0
        %v1021 = vadd.f32 0.0, %v1020
        %1022 = vmatmul.f32.gmra.mxu0 %v209
        %v1023 = vpop.f32.mrf.mxu0
        %v1024 = vadd.f32 0.0, %v1023
        %1025 = vmatmul.f32.gmra.mxu0 %v210
        %v1026 = vpop.f32.mrf.mxu0
        %v1027 = vadd.f32 0.0, %v1026
        %1028 = vmatmul.f32.gmra.mxu0 %v211
        %v1029 = vpop.f32.mrf.mxu0
        %v1030 = vadd.f32 0.0, %v1029
        %1031 = vmatmul.f32.gmra.mxu0 %v212
        %v1032 = vpop.f32.mrf.mxu0
        %v1033 = vadd.f32 0.0, %v1032
        %1034 = vmatmul.f32.gmra.mxu0 %v213
        %v1035 = vpop.f32.mrf.mxu0
        %v1036 = vadd.f32 0.0, %v1035
        %1037 = vmatmul.f32.gmra.mxu0 %v214
        %v1038 = vpop.f32.mrf.mxu0
        %v1039 = vadd.f32 0.0, %v1038
        %1040 = vmatmul.f32.gmra.mxu0 %v215
        %v1041 = vpop.f32.mrf.mxu0
        %v1042 = vadd.f32 0.0, %v1041
        %1043 = vmatmul.f32.gmra.mxu0 %v216
        %v1044 = vpop.f32.mrf.mxu0
        %v1045 = vadd.f32 0.0, %v1044
        %1046 = vdwg.mxu0
        %v1047 = vrot.slane %v870, 2
        %v1048 = vrot.slane %v935, 2
        %v1049 = vrot.slane %v1000, 2
        %v1050 = vrot.slane %v873, 2
        %v1051 = vrot.slane %v938, 2
        %v1052 = vrot.slane %v1003, 2
        %v1053 = vrot.slane %v876, 2
        %v1054 = vrot.slane %v941, 2
        %v1055 = vrot.slane %v1006, 2
        %v1056 = vrot.slane %v879, 2
        %v1057 = vrot.slane %v944, 2
        %v1058 = vrot.slane %v1009, 2
        %v1059 = vrot.slane %v882, 2
        %v1060 = vrot.slane %v947, 2
        %v1061 = vrot.slane %v1012, 2
        %v1062 = vrot.slane %v885, 2
        %v1063 = vrot.slane %v950, 2
        %v1064 = vrot.slane %v1015, 2
        %v1065 = vrot.slane %v888, 2
        %v1066 = vrot.slane %v953, 2
        %v1067 = vrot.slane %v1018, 2
        %v1068 = vrot.slane %v891, 2
        %v1069 = vrot.slane %v956, 2
        %v1070 = vrot.slane %v1021, 2
        %v1071 = vrot.slane %v894, 2
        %v1072 = vrot.slane %v959, 2
        %v1073 = vrot.slane %v1024, 2
        %v1074 = vrot.slane %v897, 2
        %v1075 = vrot.slane %v962, 2
        %v1076 = vrot.slane %v1027, 2
        %v1077 = vrot.slane %v900, 2
        %v1078 = vrot.slane %v965, 2
        %v1079 = vrot.slane %v1030, 2
        %v1080 = vrot.slane %v903, 2
        %v1081 = vrot.slane %v968, 2
        %v1082 = vrot.slane %v1033, 2
        %v1083 = vrot.slane %v906, 2
        %v1084 = vrot.slane %v971, 2
        %v1085 = vrot.slane %v1036, 2
        %v1086 = vrot.slane %v909, 2
        %v1087 = vrot.slane %v974, 2
        %v1088 = vrot.slane %v1039, 2
        %v1089 = vrot.slane %v912, 2
        %v1090 = vrot.slane %v977, 2
        %v1091 = vrot.slane %v1042, 2
        %v1092 = vrot.slane %v915, 2
        %v1093 = vrot.slane %v980, 2
        %v1094 = vrot.slane %v1045, 2
        %vm1095 = vcmp.lt.s32.totalorder %v558, 6
        %v1096 = vsel %vm1095, %v1089, %v1092
        %v1097 = vsel %vm1095, %v1090, %v1093
        %v1098 = vsel %vm1095, %v1091, %v1094
        %v1099 = vsel %vm1095, %v1086, %v1089
        %v1100 = vsel %vm1095, %v1087, %v1090
        %v1101 = vsel %vm1095, %v1088, %v1091
        %v1102 = vsel %vm1095, %v1083, %v1086
        %v1103 = vsel %vm1095, %v1084, %v1087
        %v1104 = vsel %vm1095, %v1085, %v1088
        %v1105 = vsel %vm1095, %v1080, %v1083
        %v1106 = vsel %vm1095, %v1081, %v1084
        %v1107 = vsel %vm1095, %v1082, %v1085
        %v1108 = vsel %vm1095, %v1077, %v1080
        %v1109 = vsel %vm1095, %v1078, %v1081
        %v1110 = vsel %vm1095, %v1079, %v1082
        %v1111 = vsel %vm1095, %v1074, %v1077
        %v1112 = vsel %vm1095, %v1075, %v1078
        %v1113 = vsel %vm1095, %v1076, %v1079
        %v1114 = vsel %vm1095, %v1071, %v1074
        %v1115 = vsel %vm1095, %v1072, %v1075
        %v1116 = vsel %vm1095, %v1073, %v1076
        %v1117 = vsel %vm1095, %v1068, %v1071
        %v1118 = vsel %vm1095, %v1069, %v1072
        %v1119 = vsel %vm1095, %v1070, %v1073
        %v1120 = vsel %vm1095, %v1065, %v1068
        %v1121 = vsel %vm1095, %v1066, %v1069
        %v1122 = vsel %vm1095, %v1067, %v1070
        %v1123 = vsel %vm1095, %v1062, %v1065
        %v1124 = vsel %vm1095, %v1063, %v1066
        %v1125 = vsel %vm1095, %v1064, %v1067
        %v1126 = vsel %vm1095, %v1059, %v1062
        %v1127 = vsel %vm1095, %v1060, %v1063
        %v1128 = vsel %vm1095, %v1061, %v1064
        %v1129 = vsel %vm1095, %v1056, %v1059
        %v1130 = vsel %vm1095, %v1057, %v1060
        %v1131 = vsel %vm1095, %v1058, %v1061
        %v1132 = vsel %vm1095, %v1053, %v1056
        %v1133 = vsel %vm1095, %v1054, %v1057
        %v1134 = vsel %vm1095, %v1055, %v1058
        %v1135 = vsel %vm1095, %v1050, %v1053
        %v1136 = vsel %vm1095, %v1051, %v1054
        %v1137 = vsel %vm1095, %v1052, %v1055
        %v1138 = vsel %vm1095, %v1047, %v1050
        %v1139 = vsel %vm1095, %v1048, %v1051
        %v1140 = vsel %vm1095, %v1049, %v1052
        %v1141 = vsel %vm1095, %v1092, %v1047
        %v1142 = vsel %vm1095, %v1093, %v1048
        %v1143 = vsel %vm1095, %v1094, %v1049
        %v1144 = vadd.f32 %v626, %v1138
        %v1145 = vadd.f32 %v691, %v1139
        %v1146 = vadd.f32 %v756, %v1140
        %v1147 = vadd.f32 %v629, %v1135
        %v1148 = vadd.f32 %v694, %v1136
        %v1149 = vadd.f32 %v759, %v1137
        %v1150 = vadd.f32 %v632, %v1132
        %v1151 = vadd.f32 %v697, %v1133
        %v1152 = vadd.f32 %v762, %v1134
        %v1153 = vadd.f32 %v635, %v1129
        %v1154 = vadd.f32 %v700, %v1130
        %v1155 = vadd.f32 %v765, %v1131
        %v1156 = vadd.f32 %v638, %v1126
        %v1157 = vadd.f32 %v703, %v1127
        %v1158 = vadd.f32 %v768, %v1128
        %v1159 = vadd.f32 %v641, %v1123
        %v1160 = vadd.f32 %v706, %v1124
        %v1161 = vadd.f32 %v771, %v1125
        %v1162 = vadd.f32 %v644, %v1120
        %v1163 = vadd.f32 %v709, %v1121
        %v1164 = vadd.f32 %v774, %v1122
        %v1165 = vadd.f32 %v647, %v1117
        %v1166 = vadd.f32 %v712, %v1118
        %v1167 = vadd.f32 %v777, %v1119
        %v1168 = vadd.f32 %v650, %v1114
        %v1169 = vadd.f32 %v715, %v1115
        %v1170 = vadd.f32 %v780, %v1116
        %v1171 = vadd.f32 %v653, %v1111
        %v1172 = vadd.f32 %v718, %v1112
        %v1173 = vadd.f32 %v783, %v1113
        %v1174 = vadd.f32 %v656, %v1108
        %v1175 = vadd.f32 %v721, %v1109
        %v1176 = vadd.f32 %v786, %v1110
        %v1177 = vadd.f32 %v659, %v1105
        %v1178 = vadd.f32 %v724, %v1106
        %v1179 = vadd.f32 %v789, %v1107
        %v1180 = vadd.f32 %v662, %v1102
        %v1181 = vadd.f32 %v727, %v1103
        %v1182 = vadd.f32 %v792, %v1104
        %v1183 = vadd.f32 %v665, %v1099
        %v1184 = vadd.f32 %v730, %v1100
        %v1185 = vadd.f32 %v795, %v1101
        %v1186 = vadd.f32 %v668, %v1096
        %v1187 = vadd.f32 %v733, %v1097
        %v1188 = vadd.f32 %v798, %v1098
        %v1189 = vadd.f32 %v671, %v1141
        %v1190 = vadd.f32 %v736, %v1142
        %v1191 = vadd.f32 %v801, %v1143
        %s1192 = scalar_lea.vmem %s1, 1152
        %v1193 = vld [vmem:[%s1192] sm:$0xff]
        %v1194 = vld [vmem:[%s1192 + $0x8] sm:$0xff]
        %v1195 = vld [vmem:[%s1192 + $0x10] sm:$0xff]
        %v1196 = vld [vmem:[%s1192 + $0x18] sm:$0xff]
        %v1197 = vld [vmem:[%s1192 + $0x20] sm:$0xff]
        %v1198 = vld [vmem:[%s1192 + $0x28] sm:$0xff]
        %v1199 = vld [vmem:[%s1192 + $0x30] sm:$0xff]
        %v1200 = vld [vmem:[%s1192 + $0x38] sm:$0xff]
        %v1201 = vld [vmem:[%s1192 + $0x40] sm:$0xff]
        %v1202 = vld [vmem:[%s1192 + $0x48] sm:$0xff]
        %v1203 = vld [vmem:[%s1192 + $0x50] sm:$0xff]
        %v1204 = vld [vmem:[%s1192 + $0x58] sm:$0xff]
        %v1205 = vld [vmem:[%s1192 + $0x60] sm:$0xff]
        %v1206 = vld [vmem:[%s1192 + $0x68] sm:$0xff]
        %v1207 = vld [vmem:[%s1192 + $0x70] sm:$0xff]
        %v1208 = vld [vmem:[%s1192 + $0x78] sm:$0xff]
        %v1209 = vld [vmem:[%s1192 + $0x80] sm:$0xff]
        %v1210 = vld [vmem:[%s1192 + $0x88] sm:$0xff]
        %v1211 = vld [vmem:[%s1192 + $0x90] sm:$0xff]
        %v1212 = vld [vmem:[%s1192 + $0x98] sm:$0xff]
        %v1213 = vld [vmem:[%s1192 + $0xa0] sm:$0xff]
        %v1214 = vld [vmem:[%s1192 + $0xa8] sm:$0xff]
        %v1215 = vld [vmem:[%s1192 + $0xb0] sm:$0xff]
        %v1216 = vld [vmem:[%s1192 + $0xb8] sm:$0xff]
        %v1217 = vld [vmem:[%s1192 + $0xc0] sm:$0xff]
        %v1218 = vld [vmem:[%s1192 + $0xc8] sm:$0xff]
        %v1219 = vld [vmem:[%s1192 + $0xd0] sm:$0xff]
        %v1220 = vld [vmem:[%s1192 + $0xd8] sm:$0xff]
        %v1221 = vld [vmem:[%s1192 + $0xe0] sm:$0xff]
        %v1222 = vld [vmem:[%s1192 + $0xe8] sm:$0xff]
        %v1223 = vld [vmem:[%s1192 + $0xf0] sm:$0xff]
        %v1224 = vld [vmem:[%s1192 + $0xf8] sm:$0xff]
        %v1225 = vld [vmem:[%s1192 + $0x100] sm:$0xff]
        %v1226 = vld [vmem:[%s1192 + $0x108] sm:$0xff]
        %v1227 = vld [vmem:[%s1192 + $0x110] sm:$0xff]
        %v1228 = vld [vmem:[%s1192 + $0x118] sm:$0xff]
        %v1229 = vld [vmem:[%s1192 + $0x120] sm:$0xff]
        %v1230 = vld [vmem:[%s1192 + $0x128] sm:$0xff]
        %v1231 = vld [vmem:[%s1192 + $0x130] sm:$0xff]
        %v1232 = vld [vmem:[%s1192 + $0x138] sm:$0xff]
        %v1233 = vld [vmem:[%s1192 + $0x140] sm:$0xff]
        %v1234 = vld [vmem:[%s1192 + $0x148] sm:$0xff]
        %v1235 = vld [vmem:[%s1192 + $0x150] sm:$0xff]
        %v1236 = vld [vmem:[%s1192 + $0x158] sm:$0xff]
        %v1237 = vld [vmem:[%s1192 + $0x160] sm:$0xff]
        %v1238 = vld [vmem:[%s1192 + $0x168] sm:$0xff]
        %v1239 = vld [vmem:[%s1192 + $0x170] sm:$0xff]
        %v1240 = vld [vmem:[%s1192 + $0x178] sm:$0xff]
        %1241 = vmatpush.msra.mxu0 %v1238
        %1242 = vmatpush.msra.mxu0 %v1235
        %1243 = vmatpush.msra.mxu0 %v1232
        %1244 = vmatpush.msra.mxu0 %v1229
        %1245 = vmatpush.msra.mxu0 %v1226
        %1246 = vmatpush.msra.mxu0 %v1223
        %1247 = vmatpush.msra.mxu0 %v1220
        %1248 = vmatpush.msra.mxu0 %v1217
        %1249 = vmatpush.msra.mxu0 %v1214
        %1250 = vmatpush.msra.mxu0 %v1211
        %1251 = vmatpush.msra.mxu0 %v1208
        %1252 = vmatpush.msra.mxu0 %v1205
        %1253 = vmatpush.msra.mxu0 %v1202
        %1254 = vmatpush.msra.mxu0 %v1199
        %1255 = vmatpush.msra.mxu0 %v1196
        %1256 = vmatpush.msra.mxu0 %v1193
        %1257 = vmatmul.f32.gmra.mxu0 %v201
        %v1258 = vpop.f32.mrf.mxu0
        %v1259 = vadd.f32 0.0, %v1258
        %1260 = vmatmul.f32.gmra.mxu0 %v202
        %v1261 = vpop.f32.mrf.mxu0
        %v1262 = vadd.f32 0.0, %v1261
        %1263 = vmatmul.f32.gmra.mxu0 %v203
        %v1264 = vpop.f32.mrf.mxu0
        %v1265 = vadd.f32 0.0, %v1264
        %1266 = vmatmul.f32.gmra.mxu0 %v204
        %v1267 = vpop.f32.mrf.mxu0
        %v1268 = vadd.f32 0.0, %v1267
        %1269 = vmatmul.f32.gmra.mxu0 %v205
        %v1270 = vpop.f32.mrf.mxu0
        %v1271 = vadd.f32 0.0, %v1270
        %1272 = vmatmul.f32.gmra.mxu0 %v206
        %v1273 = vpop.f32.mrf.mxu0
        %v1274 = vadd.f32 0.0, %v1273
        %1275 = vmatmul.f32.gmra.mxu0 %v207
        %v1276 = vpop.f32.mrf.mxu0
        %v1277 = vadd.f32 0.0, %v1276
        %1278 = vmatmul.f32.gmra.mxu0 %v208
        %v1279 = vpop.f32.mrf.mxu0
        %v1280 = vadd.f32 0.0, %v1279
        %1281 = vmatmul.f32.gmra.mxu0 %v209
        %v1282 = vpop.f32.mrf.mxu0
        %v1283 = vadd.f32 0.0, %v1282
        %1284 = vmatmul.f32.gmra.mxu0 %v210
        %v1285 = vpop.f32.mrf.mxu0
        %v1286 = vadd.f32 0.0, %v1285
        %1287 = vmatmul.f32.gmra.mxu0 %v211
        %v1288 = vpop.f32.mrf.mxu0
        %v1289 = vadd.f32 0.0, %v1288
        %1290 = vmatmul.f32.gmra.mxu0 %v212
        %v1291 = vpop.f32.mrf.mxu0
        %v1292 = vadd.f32 0.0, %v1291
        %1293 = vmatmul.f32.gmra.mxu0 %v213
        %v1294 = vpop.f32.mrf.mxu0
        %v1295 = vadd.f32 0.0, %v1294
        %1296 = vmatmul.f32.gmra.mxu0 %v214
        %v1297 = vpop.f32.mrf.mxu0
        %v1298 = vadd.f32 0.0, %v1297
        %1299 = vmatmul.f32.gmra.mxu0 %v215
        %v1300 = vpop.f32.mrf.mxu0
        %v1301 = vadd.f32 0.0, %v1300
        %1302 = vmatmul.f32.gmra.mxu0 %v216
        %v1303 = vpop.f32.mrf.mxu0
        %v1304 = vadd.f32 0.0, %v1303
        %1305 = vdwg.mxu0
        %1306 = vmatpush.msra.mxu0 %v1239
        %1307 = vmatpush.msra.mxu0 %v1236
        %1308 = vmatpush.msra.mxu0 %v1233
        %1309 = vmatpush.msra.mxu0 %v1230
        %1310 = vmatpush.msra.mxu0 %v1227
        %1311 = vmatpush.msra.mxu0 %v1224
        %1312 = vmatpush.msra.mxu0 %v1221
        %1313 = vmatpush.msra.mxu0 %v1218
        %1314 = vmatpush.msra.mxu0 %v1215
        %1315 = vmatpush.msra.mxu0 %v1212
        %1316 = vmatpush.msra.mxu0 %v1209
        %1317 = vmatpush.msra.mxu0 %v1206
        %1318 = vmatpush.msra.mxu0 %v1203
        %1319 = vmatpush.msra.mxu0 %v1200
        %1320 = vmatpush.msra.mxu0 %v1197
        %1321 = vmatpush.msra.mxu0 %v1194
        %1322 = vmatmul.f32.gmra.mxu0 %v201
        %v1323 = vpop.f32.mrf.mxu0
        %v1324 = vadd.f32 0.0, %v1323
        %1325 = vmatmul.f32.gmra.mxu0 %v202
        %v1326 = vpop.f32.mrf.mxu0
        %v1327 = vadd.f32 0.0, %v1326
        %1328 = vmatmul.f32.gmra.mxu0 %v203
        %v1329 = vpop.f32.mrf.mxu0
        %v1330 = vadd.f32 0.0, %v1329
        %1331 = vmatmul.f32.gmra.mxu0 %v204
        %v1332 = vpop.f32.mrf.mxu0
        %v1333 = vadd.f32 0.0, %v1332
        %1334 = vmatmul.f32.gmra.mxu0 %v205
        %v1335 = vpop.f32.mrf.mxu0
        %v1336 = vadd.f32 0.0, %v1335
        %1337 = vmatmul.f32.gmra.mxu0 %v206
        %v1338 = vpop.f32.mrf.mxu0
        %v1339 = vadd.f32 0.0, %v1338
        %1340 = vmatmul.f32.gmra.mxu0 %v207
        %v1341 = vpop.f32.mrf.mxu0
        %v1342 = vadd.f32 0.0, %v1341
        %1343 = vmatmul.f32.gmra.mxu0 %v208
        %v1344 = vpop.f32.mrf.mxu0
        %v1345 = vadd.f32 0.0, %v1344
        %1346 = vmatmul.f32.gmra.mxu0 %v209
        %v1347 = vpop.f32.mrf.mxu0
        %v1348 = vadd.f32 0.0, %v1347
        %1349 = vmatmul.f32.gmra.mxu0 %v210
        %v1350 = vpop.f32.mrf.mxu0
        %v1351 = vadd.f32 0.0, %v1350
        %1352 = vmatmul.f32.gmra.mxu0 %v211
        %v1353 = vpop.f32.mrf.mxu0
        %v1354 = vadd.f32 0.0, %v1353
        %1355 = vmatmul.f32.gmra.mxu0 %v212
        %v1356 = vpop.f32.mrf.mxu0
        %v1357 = vadd.f32 0.0, %v1356
        %1358 = vmatmul.f32.gmra.mxu0 %v213
        %v1359 = vpop.f32.mrf.mxu0
        %v1360 = vadd.f32 0.0, %v1359
        %1361 = vmatmul.f32.gmra.mxu0 %v214
        %v1362 = vpop.f32.mrf.mxu0
        %v1363 = vadd.f32 0.0, %v1362
        %1364 = vmatmul.f32.gmra.mxu0 %v215
        %v1365 = vpop.f32.mrf.mxu0
        %v1366 = vadd.f32 0.0, %v1365
        %1367 = vmatmul.f32.gmra.mxu0 %v216
        %v1368 = vpop.f32.mrf.mxu0
        %v1369 = vadd.f32 0.0, %v1368
        %1370 = vdwg.mxu0
        %1371 = vmatpush.msra.mxu0 %v1240
        %1372 = vmatpush.msra.mxu0 %v1237
        %1373 = vmatpush.msra.mxu0 %v1234
        %1374 = vmatpush.msra.mxu0 %v1231
        %1375 = vmatpush.msra.mxu0 %v1228
        %1376 = vmatpush.msra.mxu0 %v1225
        %1377 = vmatpush.msra.mxu0 %v1222
        %1378 = vmatpush.msra.mxu0 %v1219
        %1379 = vmatpush.msra.mxu0 %v1216
        %1380 = vmatpush.msra.mxu0 %v1213
        %1381 = vmatpush.msra.mxu0 %v1210
        %1382 = vmatpush.msra.mxu0 %v1207
        %1383 = vmatpush.msra.mxu0 %v1204
        %1384 = vmatpush.msra.mxu0 %v1201
        %1385 = vmatpush.msra.mxu0 %v1198
        %1386 = vmatpush.msra.mxu0 %v1195
        %1387 = vmatmul.f32.gmra.mxu0 %v201
        %v1388 = vpop.f32.mrf.mxu0
        %v1389 = vadd.f32 0.0, %v1388
        %1390 = vmatmul.f32.gmra.mxu0 %v202
        %v1391 = vpop.f32.mrf.mxu0
        %v1392 = vadd.f32 0.0, %v1391
        %1393 = vmatmul.f32.gmra.mxu0 %v203
        %v1394 = vpop.f32.mrf.mxu0
        %v1395 = vadd.f32 0.0, %v1394
        %1396 = vmatmul.f32.gmra.mxu0 %v204
        %v1397 = vpop.f32.mrf.mxu0
        %v1398 = vadd.f32 0.0, %v1397
        %1399 = vmatmul.f32.gmra.mxu0 %v205
        %v1400 = vpop.f32.mrf.mxu0
        %v1401 = vadd.f32 0.0, %v1400
        %1402 = vmatmul.f32.gmra.mxu0 %v206
        %v1403 = vpop.f32.mrf.mxu0
        %v1404 = vadd.f32 0.0, %v1403
        %1405 = vmatmul.f32.gmra.mxu0 %v207
        %v1406 = vpop.f32.mrf.mxu0
        %v1407 = vadd.f32 0.0, %v1406
        %1408 = vmatmul.f32.gmra.mxu0 %v208
        %v1409 = vpop.f32.mrf.mxu0
        %v1410 = vadd.f32 0.0, %v1409
        %1411 = vmatmul.f32.gmra.mxu0 %v209
        %v1412 = vpop.f32.mrf.mxu0
        %v1413 = vadd.f32 0.0, %v1412
        %1414 = vmatmul.f32.gmra.mxu0 %v210
        %v1415 = vpop.f32.mrf.mxu0
        %v1416 = vadd.f32 0.0, %v1415
        %1417 = vmatmul.f32.gmra.mxu0 %v211
        %v1418 = vpop.f32.mrf.mxu0
        %v1419 = vadd.f32 0.0, %v1418
        %1420 = vmatmul.f32.gmra.mxu0 %v212
        %v1421 = vpop.f32.mrf.mxu0
        %v1422 = vadd.f32 0.0, %v1421
        %1423 = vmatmul.f32.gmra.mxu0 %v213
        %v1424 = vpop.f32.mrf.mxu0
        %v1425 = vadd.f32 0.0, %v1424
        %1426 = vmatmul.f32.gmra.mxu0 %v214
        %v1427 = vpop.f32.mrf.mxu0
        %v1428 = vadd.f32 0.0, %v1427
        %1429 = vmatmul.f32.gmra.mxu0 %v215
        %v1430 = vpop.f32.mrf.mxu0
        %v1431 = vadd.f32 0.0, %v1430
        %1432 = vmatmul.f32.gmra.mxu0 %v216
        %v1433 = vpop.f32.mrf.mxu0
        %v1434 = vadd.f32 0.0, %v1433
        %1435 = vdwg.mxu0
        %v1436 = vrot.slane %v1259, 3
        %v1437 = vrot.slane %v1324, 3
        %v1438 = vrot.slane %v1389, 3
        %v1439 = vrot.slane %v1262, 3
        %v1440 = vrot.slane %v1327, 3
        %v1441 = vrot.slane %v1392, 3
        %v1442 = vrot.slane %v1265, 3
        %v1443 = vrot.slane %v1330, 3
        %v1444 = vrot.slane %v1395, 3
        %v1445 = vrot.slane %v1268, 3
        %v1446 = vrot.slane %v1333, 3
        %v1447 = vrot.slane %v1398, 3
        %v1448 = vrot.slane %v1271, 3
        %v1449 = vrot.slane %v1336, 3
        %v1450 = vrot.slane %v1401, 3
        %v1451 = vrot.slane %v1274, 3
        %v1452 = vrot.slane %v1339, 3
        %v1453 = vrot.slane %v1404, 3
        %v1454 = vrot.slane %v1277, 3
        %v1455 = vrot.slane %v1342, 3
        %v1456 = vrot.slane %v1407, 3
        %v1457 = vrot.slane %v1280, 3
        %v1458 = vrot.slane %v1345, 3
        %v1459 = vrot.slane %v1410, 3
        %v1460 = vrot.slane %v1283, 3
        %v1461 = vrot.slane %v1348, 3
        %v1462 = vrot.slane %v1413, 3
        %v1463 = vrot.slane %v1286, 3
        %v1464 = vrot.slane %v1351, 3
        %v1465 = vrot.slane %v1416, 3
        %v1466 = vrot.slane %v1289, 3
        %v1467 = vrot.slane %v1354, 3
        %v1468 = vrot.slane %v1419, 3
        %v1469 = vrot.slane %v1292, 3
        %v1470 = vrot.slane %v1357, 3
        %v1471 = vrot.slane %v1422, 3
        %v1472 = vrot.slane %v1295, 3
        %v1473 = vrot.slane %v1360, 3
        %v1474 = vrot.slane %v1425, 3
        %v1475 = vrot.slane %v1298, 3
        %v1476 = vrot.slane %v1363, 3
        %v1477 = vrot.slane %v1428, 3
        %v1478 = vrot.slane %v1301, 3
        %v1479 = vrot.slane %v1366, 3
        %v1480 = vrot.slane %v1431, 3
        %v1481 = vrot.slane %v1304, 3
        %v1482 = vrot.slane %v1369, 3
        %v1483 = vrot.slane %v1434, 3
        %vm1484 = vcmp.lt.s32.totalorder %v558, 5
        %v1485 = vsel %vm1484, %v1478, %v1481
        %v1486 = vsel %vm1484, %v1479, %v1482
        %v1487 = vsel %vm1484, %v1480, %v1483
        %v1488 = vsel %vm1484, %v1475, %v1478
        %v1489 = vsel %vm1484, %v1476, %v1479
        %v1490 = vsel %vm1484, %v1477, %v1480
        %v1491 = vsel %vm1484, %v1472, %v1475
        %v1492 = vsel %vm1484, %v1473, %v1476
        %v1493 = vsel %vm1484, %v1474, %v1477
        %v1494 = vsel %vm1484, %v1469, %v1472
        %v1495 = vsel %vm1484, %v1470, %v1473
        %v1496 = vsel %vm1484, %v1471, %v1474
        %v1497 = vsel %vm1484, %v1466, %v1469
        %v1498 = vsel %vm1484, %v1467, %v1470
        %v1499 = vsel %vm1484, %v1468, %v1471
        %v1500 = vsel %vm1484, %v1463, %v1466
        %v1501 = vsel %vm1484, %v1464, %v1467
        %v1502 = vsel %vm1484, %v1465, %v1468
        %v1503 = vsel %vm1484, %v1460, %v1463
        %v1504 = vsel %vm1484, %v1461, %v1464
        %v1505 = vsel %vm1484, %v1462, %v1465
        %v1506 = vsel %vm1484, %v1457, %v1460
        %v1507 = vsel %vm1484, %v1458, %v1461
        %v1508 = vsel %vm1484, %v1459, %v1462
        %v1509 = vsel %vm1484, %v1454, %v1457
        %v1510 = vsel %vm1484, %v1455, %v1458
        %v1511 = vsel %vm1484, %v1456, %v1459
        %v1512 = vsel %vm1484, %v1451, %v1454
        %v1513 = vsel %vm1484, %v1452, %v1455
        %v1514 = vsel %vm1484, %v1453, %v1456
        %v1515 = vsel %vm1484, %v1448, %v1451
        %v1516 = vsel %vm1484, %v1449, %v1452
        %v1517 = vsel %vm1484, %v1450, %v1453
        %v1518 = vsel %vm1484, %v1445, %v1448
        %v1519 = vsel %vm1484, %v1446, %v1449
        %v1520 = vsel %vm1484, %v1447, %v1450
        %v1521 = vsel %vm1484, %v1442, %v1445
        %v1522 = vsel %vm1484, %v1443, %v1446
        %v1523 = vsel %vm1484, %v1444, %v1447
        %v1524 = vsel %vm1484, %v1439, %v1442
        %v1525 = vsel %vm1484, %v1440, %v1443
        %v1526 = vsel %vm1484, %v1441, %v1444
        %v1527 = vsel %vm1484, %v1436, %v1439
        %v1528 = vsel %vm1484, %v1437, %v1440
        %v1529 = vsel %vm1484, %v1438, %v1441
        %v1530 = vsel %vm1484, %v1481, %v1436
        %v1531 = vsel %vm1484, %v1482, %v1437
        %v1532 = vsel %vm1484, %v1483, %v1438
        %v1533 = vadd.f32 %v1144, %v1527
        %v1534 = vadd.f32 %v1145, %v1528
        %v1535 = vadd.f32 %v1146, %v1529
        %v1536 = vadd.f32 %v1147, %v1524
        %v1537 = vadd.f32 %v1148, %v1525
        %v1538 = vadd.f32 %v1149, %v1526
        %v1539 = vadd.f32 %v1150, %v1521
        %v1540 = vadd.f32 %v1151, %v1522
        %v1541 = vadd.f32 %v1152, %v1523
        %v1542 = vadd.f32 %v1153, %v1518
        %v1543 = vadd.f32 %v1154, %v1519
        %v1544 = vadd.f32 %v1155, %v1520
        %v1545 = vadd.f32 %v1156, %v1515
        %v1546 = vadd.f32 %v1157, %v1516
        %v1547 = vadd.f32 %v1158, %v1517
        %v1548 = vadd.f32 %v1159, %v1512
        %v1549 = vadd.f32 %v1160, %v1513
        %v1550 = vadd.f32 %v1161, %v1514
        %v1551 = vadd.f32 %v1162, %v1509
        %v1552 = vadd.f32 %v1163, %v1510
        %v1553 = vadd.f32 %v1164, %v1511
        %v1554 = vadd.f32 %v1165, %v1506
        %v1555 = vadd.f32 %v1166, %v1507
        %v1556 = vadd.f32 %v1167, %v1508
        %v1557 = vadd.f32 %v1168, %v1503
        %v1558 = vadd.f32 %v1169, %v1504
        %v1559 = vadd.f32 %v1170, %v1505
        %v1560 = vadd.f32 %v1171, %v1500
        %v1561 = vadd.f32 %v1172, %v1501
        %v1562 = vadd.f32 %v1173, %v1502
        %v1563 = vadd.f32 %v1174, %v1497
        %v1564 = vadd.f32 %v1175, %v1498
        %v1565 = vadd.f32 %v1176, %v1499
        %v1566 = vadd.f32 %v1177, %v1494
        %v1567 = vadd.f32 %v1178, %v1495
        %v1568 = vadd.f32 %v1179, %v1496
        %v1569 = vadd.f32 %v1180, %v1491
        %v1570 = vadd.f32 %v1181, %v1492
        %v1571 = vadd.f32 %v1182, %v1493
        %v1572 = vadd.f32 %v1183, %v1488
        %v1573 = vadd.f32 %v1184, %v1489
        %v1574 = vadd.f32 %v1185, %v1490
        %v1575 = vadd.f32 %v1186, %v1485
        %v1576 = vadd.f32 %v1187, %v1486
        %v1577 = vadd.f32 %v1188, %v1487
        %v1578 = vadd.f32 %v1189, %v1530
        %v1579 = vadd.f32 %v1190, %v1531
        %v1580 = vadd.f32 %v1191, %v1532
        %s1581 = scalar_lea.vmem %s1, 1536
        %v1582 = vld [vmem:[%s1581] sm:$0xff]
        %v1583 = vld [vmem:[%s1581 + $0x8] sm:$0xff]
        %v1584 = vld [vmem:[%s1581 + $0x10] sm:$0xff]
        %v1585 = vld [vmem:[%s1581 + $0x18] sm:$0xff]
        %v1586 = vld [vmem:[%s1581 + $0x20] sm:$0xff]
        %v1587 = vld [vmem:[%s1581 + $0x28] sm:$0xff]
        %v1588 = vld [vmem:[%s1581 + $0x30] sm:$0xff]
        %v1589 = vld [vmem:[%s1581 + $0x38] sm:$0xff]
        %v1590 = vld [vmem:[%s1581 + $0x40] sm:$0xff]
        %v1591 = vld [vmem:[%s1581 + $0x48] sm:$0xff]
        %v1592 = vld [vmem:[%s1581 + $0x50] sm:$0xff]
        %v1593 = vld [vmem:[%s1581 + $0x58] sm:$0xff]
        %v1594 = vld [vmem:[%s1581 + $0x60] sm:$0xff]
        %v1595 = vld [vmem:[%s1581 + $0x68] sm:$0xff]
        %v1596 = vld [vmem:[%s1581 + $0x70] sm:$0xff]
        %v1597 = vld [vmem:[%s1581 + $0x78] sm:$0xff]
        %v1598 = vld [vmem:[%s1581 + $0x80] sm:$0xff]
        %v1599 = vld [vmem:[%s1581 + $0x88] sm:$0xff]
        %v1600 = vld [vmem:[%s1581 + $0x90] sm:$0xff]
        %v1601 = vld [vmem:[%s1581 + $0x98] sm:$0xff]
        %v1602 = vld [vmem:[%s1581 + $0xa0] sm:$0xff]
        %v1603 = vld [vmem:[%s1581 + $0xa8] sm:$0xff]
        %v1604 = vld [vmem:[%s1581 + $0xb0] sm:$0xff]
        %v1605 = vld [vmem:[%s1581 + $0xb8] sm:$0xff]
        %v1606 = vld [vmem:[%s1581 + $0xc0] sm:$0xff]
        %v1607 = vld [vmem:[%s1581 + $0xc8] sm:$0xff]
        %v1608 = vld [vmem:[%s1581 + $0xd0] sm:$0xff]
        %v1609 = vld [vmem:[%s1581 + $0xd8] sm:$0xff]
        %v1610 = vld [vmem:[%s1581 + $0xe0] sm:$0xff]
        %v1611 = vld [vmem:[%s1581 + $0xe8] sm:$0xff]
        %v1612 = vld [vmem:[%s1581 + $0xf0] sm:$0xff]
        %v1613 = vld [vmem:[%s1581 + $0xf8] sm:$0xff]
        %v1614 = vld [vmem:[%s1581 + $0x100] sm:$0xff]
        %v1615 = vld [vmem:[%s1581 + $0x108] sm:$0xff]
        %v1616 = vld [vmem:[%s1581 + $0x110] sm:$0xff]
        %v1617 = vld [vmem:[%s1581 + $0x118] sm:$0xff]
        %v1618 = vld [vmem:[%s1581 + $0x120] sm:$0xff]
        %v1619 = vld [vmem:[%s1581 + $0x128] sm:$0xff]
        %v1620 = vld [vmem:[%s1581 + $0x130] sm:$0xff]
        %v1621 = vld [vmem:[%s1581 + $0x138] sm:$0xff]
        %v1622 = vld [vmem:[%s1581 + $0x140] sm:$0xff]
        %v1623 = vld [vmem:[%s1581 + $0x148] sm:$0xff]
        %v1624 = vld [vmem:[%s1581 + $0x150] sm:$0xff]
        %v1625 = vld [vmem:[%s1581 + $0x158] sm:$0xff]
        %v1626 = vld [vmem:[%s1581 + $0x160] sm:$0xff]
        %v1627 = vld [vmem:[%s1581 + $0x168] sm:$0xff]
        %v1628 = vld [vmem:[%s1581 + $0x170] sm:$0xff]
        %v1629 = vld [vmem:[%s1581 + $0x178] sm:$0xff]
        %1630 = vmatpush.msra.mxu0 %v1627
        %1631 = vmatpush.msra.mxu0 %v1624
        %1632 = vmatpush.msra.mxu0 %v1621
        %1633 = vmatpush.msra.mxu0 %v1618
        %1634 = vmatpush.msra.mxu0 %v1615
        %1635 = vmatpush.msra.mxu0 %v1612
        %1636 = vmatpush.msra.mxu0 %v1609
        %1637 = vmatpush.msra.mxu0 %v1606
        %1638 = vmatpush.msra.mxu0 %v1603
        %1639 = vmatpush.msra.mxu0 %v1600
        %1640 = vmatpush.msra.mxu0 %v1597
        %1641 = vmatpush.msra.mxu0 %v1594
        %1642 = vmatpush.msra.mxu0 %v1591
        %1643 = vmatpush.msra.mxu0 %v1588
        %1644 = vmatpush.msra.mxu0 %v1585
        %1645 = vmatpush.msra.mxu0 %v1582
        %1646 = vmatmul.f32.gmra.mxu0 %v201
        %v1647 = vpop.f32.mrf.mxu0
        %v1648 = vadd.f32 0.0, %v1647
        %1649 = vmatmul.f32.gmra.mxu0 %v202
        %v1650 = vpop.f32.mrf.mxu0
        %v1651 = vadd.f32 0.0, %v1650
        %1652 = vmatmul.f32.gmra.mxu0 %v203
        %v1653 = vpop.f32.mrf.mxu0
        %v1654 = vadd.f32 0.0, %v1653
        %1655 = vmatmul.f32.gmra.mxu0 %v204
        %v1656 = vpop.f32.mrf.mxu0
        %v1657 = vadd.f32 0.0, %v1656
        %1658 = vmatmul.f32.gmra.mxu0 %v205
        %v1659 = vpop.f32.mrf.mxu0
        %v1660 = vadd.f32 0.0, %v1659
        %1661 = vmatmul.f32.gmra.mxu0 %v206
        %v1662 = vpop.f32.mrf.mxu0
        %v1663 = vadd.f32 0.0, %v1662
        %1664 = vmatmul.f32.gmra.mxu0 %v207
        %v1665 = vpop.f32.mrf.mxu0
        %v1666 = vadd.f32 0.0, %v1665
        %1667 = vmatmul.f32.gmra.mxu0 %v208
        %v1668 = vpop.f32.mrf.mxu0
        %v1669 = vadd.f32 0.0, %v1668
        %1670 = vmatmul.f32.gmra.mxu0 %v209
        %v1671 = vpop.f32.mrf.mxu0
        %v1672 = vadd.f32 0.0, %v1671
        %1673 = vmatmul.f32.gmra.mxu0 %v210
        %v1674 = vpop.f32.mrf.mxu0
        %v1675 = vadd.f32 0.0, %v1674
        %1676 = vmatmul.f32.gmra.mxu0 %v211
        %v1677 = vpop.f32.mrf.mxu0
        %v1678 = vadd.f32 0.0, %v1677
        %1679 = vmatmul.f32.gmra.mxu0 %v212
        %v1680 = vpop.f32.mrf.mxu0
        %v1681 = vadd.f32 0.0, %v1680
        %1682 = vmatmul.f32.gmra.mxu0 %v213
        %v1683 = vpop.f32.mrf.mxu0
        %v1684 = vadd.f32 0.0, %v1683
        %1685 = vmatmul.f32.gmra.mxu0 %v214
        %v1686 = vpop.f32.mrf.mxu0
        %v1687 = vadd.f32 0.0, %v1686
        %1688 = vmatmul.f32.gmra.mxu0 %v215
        %v1689 = vpop.f32.mrf.mxu0
        %v1690 = vadd.f32 0.0, %v1689
        %1691 = vmatmul.f32.gmra.mxu0 %v216
        %v1692 = vpop.f32.mrf.mxu0
        %v1693 = vadd.f32 0.0, %v1692
        %1694 = vdwg.mxu0
        %1695 = vmatpush.msra.mxu0 %v1628
        %1696 = vmatpush.msra.mxu0 %v1625
        %1697 = vmatpush.msra.mxu0 %v1622
        %1698 = vmatpush.msra.mxu0 %v1619
        %1699 = vmatpush.msra.mxu0 %v1616
        %1700 = vmatpush.msra.mxu0 %v1613
        %1701 = vmatpush.msra.mxu0 %v1610
        %1702 = vmatpush.msra.mxu0 %v1607
        %1703 = vmatpush.msra.mxu0 %v1604
        %1704 = vmatpush.msra.mxu0 %v1601
        %1705 = vmatpush.msra.mxu0 %v1598
        %1706 = vmatpush.msra.mxu0 %v1595
        %1707 = vmatpush.msra.mxu0 %v1592
        %1708 = vmatpush.msra.mxu0 %v1589
        %1709 = vmatpush.msra.mxu0 %v1586
        %1710 = vmatpush.msra.mxu0 %v1583
        %1711 = vmatmul.f32.gmra.mxu0 %v201
        %v1712 = vpop.f32.mrf.mxu0
        %v1713 = vadd.f32 0.0, %v1712
        %1714 = vmatmul.f32.gmra.mxu0 %v202
        %v1715 = vpop.f32.mrf.mxu0
        %v1716 = vadd.f32 0.0, %v1715
        %1717 = vmatmul.f32.gmra.mxu0 %v203
        %v1718 = vpop.f32.mrf.mxu0
        %v1719 = vadd.f32 0.0, %v1718
        %1720 = vmatmul.f32.gmra.mxu0 %v204
        %v1721 = vpop.f32.mrf.mxu0
        %v1722 = vadd.f32 0.0, %v1721
        %1723 = vmatmul.f32.gmra.mxu0 %v205
        %v1724 = vpop.f32.mrf.mxu0
        %v1725 = vadd.f32 0.0, %v1724
        %1726 = vmatmul.f32.gmra.mxu0 %v206
        %v1727 = vpop.f32.mrf.mxu0
        %v1728 = vadd.f32 0.0, %v1727
        %1729 = vmatmul.f32.gmra.mxu0 %v207
        %v1730 = vpop.f32.mrf.mxu0
        %v1731 = vadd.f32 0.0, %v1730
        %1732 = vmatmul.f32.gmra.mxu0 %v208
        %v1733 = vpop.f32.mrf.mxu0
        %v1734 = vadd.f32 0.0, %v1733
        %1735 = vmatmul.f32.gmra.mxu0 %v209
        %v1736 = vpop.f32.mrf.mxu0
        %v1737 = vadd.f32 0.0, %v1736
        %1738 = vmatmul.f32.gmra.mxu0 %v210
        %v1739 = vpop.f32.mrf.mxu0
        %v1740 = vadd.f32 0.0, %v1739
        %1741 = vmatmul.f32.gmra.mxu0 %v211
        %v1742 = vpop.f32.mrf.mxu0
        %v1743 = vadd.f32 0.0, %v1742
        %1744 = vmatmul.f32.gmra.mxu0 %v212
        %v1745 = vpop.f32.mrf.mxu0
        %v1746 = vadd.f32 0.0, %v1745
        %1747 = vmatmul.f32.gmra.mxu0 %v213
        %v1748 = vpop.f32.mrf.mxu0
        %v1749 = vadd.f32 0.0, %v1748
        %1750 = vmatmul.f32.gmra.mxu0 %v214
        %v1751 = vpop.f32.mrf.mxu0
        %v1752 = vadd.f32 0.0, %v1751
        %1753 = vmatmul.f32.gmra.mxu0 %v215
        %v1754 = vpop.f32.mrf.mxu0
        %v1755 = vadd.f32 0.0, %v1754
        %1756 = vmatmul.f32.gmra.mxu0 %v216
        %v1757 = vpop.f32.mrf.mxu0
        %v1758 = vadd.f32 0.0, %v1757
        %1759 = vdwg.mxu0
        %1760 = vmatpush.msra.mxu0 %v1629
        %1761 = vmatpush.msra.mxu0 %v1626
        %1762 = vmatpush.msra.mxu0 %v1623
        %1763 = vmatpush.msra.mxu0 %v1620
        %1764 = vmatpush.msra.mxu0 %v1617
        %1765 = vmatpush.msra.mxu0 %v1614
        %1766 = vmatpush.msra.mxu0 %v1611
        %1767 = vmatpush.msra.mxu0 %v1608
        %1768 = vmatpush.msra.mxu0 %v1605
        %1769 = vmatpush.msra.mxu0 %v1602
        %1770 = vmatpush.msra.mxu0 %v1599
        %1771 = vmatpush.msra.mxu0 %v1596
        %1772 = vmatpush.msra.mxu0 %v1593
        %1773 = vmatpush.msra.mxu0 %v1590
        %1774 = vmatpush.msra.mxu0 %v1587
        %1775 = vmatpush.msra.mxu0 %v1584
        %1776 = vmatmul.f32.gmra.mxu0 %v201
        %v1777 = vpop.f32.mrf.mxu0
        %v1778 = vadd.f32 0.0, %v1777
        %1779 = vmatmul.f32.gmra.mxu0 %v202
        %v1780 = vpop.f32.mrf.mxu0
        %v1781 = vadd.f32 0.0, %v1780
        %1782 = vmatmul.f32.gmra.mxu0 %v203
        %v1783 = vpop.f32.mrf.mxu0
        %v1784 = vadd.f32 0.0, %v1783
        %1785 = vmatmul.f32.gmra.mxu0 %v204
        %v1786 = vpop.f32.mrf.mxu0
        %v1787 = vadd.f32 0.0, %v1786
        %1788 = vmatmul.f32.gmra.mxu0 %v205
        %v1789 = vpop.f32.mrf.mxu0
        %v1790 = vadd.f32 0.0, %v1789
        %1791 = vmatmul.f32.gmra.mxu0 %v206
        %v1792 = vpop.f32.mrf.mxu0
        %v1793 = vadd.f32 0.0, %v1792
        %1794 = vmatmul.f32.gmra.mxu0 %v207
        %v1795 = vpop.f32.mrf.mxu0
        %v1796 = vadd.f32 0.0, %v1795
        %1797 = vmatmul.f32.gmra.mxu0 %v208
        %v1798 = vpop.f32.mrf.mxu0
        %v1799 = vadd.f32 0.0, %v1798
        %1800 = vmatmul.f32.gmra.mxu0 %v209
        %v1801 = vpop.f32.mrf.mxu0
        %v1802 = vadd.f32 0.0, %v1801
        %1803 = vmatmul.f32.gmra.mxu0 %v210
        %v1804 = vpop.f32.mrf.mxu0
        %v1805 = vadd.f32 0.0, %v1804
        %1806 = vmatmul.f32.gmra.mxu0 %v211
        %v1807 = vpop.f32.mrf.mxu0
        %v1808 = vadd.f32 0.0, %v1807
        %1809 = vmatmul.f32.gmra.mxu0 %v212
        %v1810 = vpop.f32.mrf.mxu0
        %v1811 = vadd.f32 0.0, %v1810
        %1812 = vmatmul.f32.gmra.mxu0 %v213
        %v1813 = vpop.f32.mrf.mxu0
        %v1814 = vadd.f32 0.0, %v1813
        %1815 = vmatmul.f32.gmra.mxu0 %v214
        %v1816 = vpop.f32.mrf.mxu0
        %v1817 = vadd.f32 0.0, %v1816
        %1818 = vmatmul.f32.gmra.mxu0 %v215
        %v1819 = vpop.f32.mrf.mxu0
        %v1820 = vadd.f32 0.0, %v1819
        %1821 = vmatmul.f32.gmra.mxu0 %v216
        %v1822 = vpop.f32.mrf.mxu0
        %v1823 = vadd.f32 0.0, %v1822
        %1824 = vdwg.mxu0
        %v1825 = vrot.slane %v1648, 4
        %v1826 = vrot.slane %v1713, 4
        %v1827 = vrot.slane %v1778, 4
        %v1828 = vrot.slane %v1651, 4
        %v1829 = vrot.slane %v1716, 4
        %v1830 = vrot.slane %v1781, 4
        %v1831 = vrot.slane %v1654, 4
        %v1832 = vrot.slane %v1719, 4
        %v1833 = vrot.slane %v1784, 4
        %v1834 = vrot.slane %v1657, 4
        %v1835 = vrot.slane %v1722, 4
        %v1836 = vrot.slane %v1787, 4
        %v1837 = vrot.slane %v1660, 4
        %v1838 = vrot.slane %v1725, 4
        %v1839 = vrot.slane %v1790, 4
        %v1840 = vrot.slane %v1663, 4
        %v1841 = vrot.slane %v1728, 4
        %v1842 = vrot.slane %v1793, 4
        %v1843 = vrot.slane %v1666, 4
        %v1844 = vrot.slane %v1731, 4
        %v1845 = vrot.slane %v1796, 4
        %v1846 = vrot.slane %v1669, 4
        %v1847 = vrot.slane %v1734, 4
        %v1848 = vrot.slane %v1799, 4
        %v1849 = vrot.slane %v1672, 4
        %v1850 = vrot.slane %v1737, 4
        %v1851 = vrot.slane %v1802, 4
        %v1852 = vrot.slane %v1675, 4
        %v1853 = vrot.slane %v1740, 4
        %v1854 = vrot.slane %v1805, 4
        %v1855 = vrot.slane %v1678, 4
        %v1856 = vrot.slane %v1743, 4
        %v1857 = vrot.slane %v1808, 4
        %v1858 = vrot.slane %v1681, 4
        %v1859 = vrot.slane %v1746, 4
        %v1860 = vrot.slane %v1811, 4
        %v1861 = vrot.slane %v1684, 4
        %v1862 = vrot.slane %v1749, 4
        %v1863 = vrot.slane %v1814, 4
        %v1864 = vrot.slane %v1687, 4
        %v1865 = vrot.slane %v1752, 4
        %v1866 = vrot.slane %v1817, 4
        %v1867 = vrot.slane %v1690, 4
        %v1868 = vrot.slane %v1755, 4
        %v1869 = vrot.slane %v1820, 4
        %v1870 = vrot.slane %v1693, 4
        %v1871 = vrot.slane %v1758, 4
        %v1872 = vrot.slane %v1823, 4
        %vm1873 = vcmp.lt.s32.totalorder %v558, 4
        %v1874 = vsel %vm1873, %v1867, %v1870
        %v1875 = vsel %vm1873, %v1868, %v1871
        %v1876 = vsel %vm1873, %v1869, %v1872
        %v1877 = vsel %vm1873, %v1864, %v1867
        %v1878 = vsel %vm1873, %v1865, %v1868
        %v1879 = vsel %vm1873, %v1866, %v1869
        %v1880 = vsel %vm1873, %v1861, %v1864
        %v1881 = vsel %vm1873, %v1862, %v1865
        %v1882 = vsel %vm1873, %v1863, %v1866
        %v1883 = vsel %vm1873, %v1858, %v1861
        %v1884 = vsel %vm1873, %v1859, %v1862
        %v1885 = vsel %vm1873, %v1860, %v1863
        %v1886 = vsel %vm1873, %v1855, %v1858
        %v1887 = vsel %vm1873, %v1856, %v1859
        %v1888 = vsel %vm1873, %v1857, %v1860
        %v1889 = vsel %vm1873, %v1852, %v1855
        %v1890 = vsel %vm1873, %v1853, %v1856
        %v1891 = vsel %vm1873, %v1854, %v1857
        %v1892 = vsel %vm1873, %v1849, %v1852
        %v1893 = vsel %vm1873, %v1850, %v1853
        %v1894 = vsel %vm1873, %v1851, %v1854
        %v1895 = vsel %vm1873, %v1846, %v1849
        %v1896 = vsel %vm1873, %v1847, %v1850
        %v1897 = vsel %vm1873, %v1848, %v1851
        %v1898 = vsel %vm1873, %v1843, %v1846
        %v1899 = vsel %vm1873, %v1844, %v1847
        %v1900 = vsel %vm1873, %v1845, %v1848
        %v1901 = vsel %vm1873, %v1840, %v1843
        %v1902 = vsel %vm1873, %v1841, %v1844
        %v1903 = vsel %vm1873, %v1842, %v1845
        %v1904 = vsel %vm1873, %v1837, %v1840
        %v1905 = vsel %vm1873, %v1838, %v1841
        %v1906 = vsel %vm1873, %v1839, %v1842
        %v1907 = vsel %vm1873, %v1834, %v1837
        %v1908 = vsel %vm1873, %v1835, %v1838
        %v1909 = vsel %vm1873, %v1836, %v1839
        %v1910 = vsel %vm1873, %v1831, %v1834
        %v1911 = vsel %vm1873, %v1832, %v1835
        %v1912 = vsel %vm1873, %v1833, %v1836
        %v1913 = vsel %vm1873, %v1828, %v1831
        %v1914 = vsel %vm1873, %v1829, %v1832
        %v1915 = vsel %vm1873, %v1830, %v1833
        %v1916 = vsel %vm1873, %v1825, %v1828
        %v1917 = vsel %vm1873, %v1826, %v1829
        %v1918 = vsel %vm1873, %v1827, %v1830
        %v1919 = vsel %vm1873, %v1870, %v1825
        %v1920 = vsel %vm1873, %v1871, %v1826
        %v1921 = vsel %vm1873, %v1872, %v1827
        %v1922 = vadd.f32 %v1533, %v1916
        %v1923 = vadd.f32 %v1534, %v1917
        %v1924 = vadd.f32 %v1535, %v1918
        %v1925 = vadd.f32 %v1536, %v1913
        %v1926 = vadd.f32 %v1537, %v1914
        %v1927 = vadd.f32 %v1538, %v1915
        %v1928 = vadd.f32 %v1539, %v1910
        %v1929 = vadd.f32 %v1540, %v1911
        %v1930 = vadd.f32 %v1541, %v1912
        %v1931 = vadd.f32 %v1542, %v1907
        %v1932 = vadd.f32 %v1543, %v1908
        %v1933 = vadd.f32 %v1544, %v1909
        %v1934 = vadd.f32 %v1545, %v1904
        %v1935 = vadd.f32 %v1546, %v1905
        %v1936 = vadd.f32 %v1547, %v1906
        %v1937 = vadd.f32 %v1548, %v1901
        %v1938 = vadd.f32 %v1549, %v1902
        %v1939 = vadd.f32 %v1550, %v1903
        %v1940 = vadd.f32 %v1551, %v1898
        %v1941 = vadd.f32 %v1552, %v1899
        %v1942 = vadd.f32 %v1553, %v1900
        %v1943 = vadd.f32 %v1554, %v1895
        %v1944 = vadd.f32 %v1555, %v1896
        %v1945 = vadd.f32 %v1556, %v1897
        %v1946 = vadd.f32 %v1557, %v1892
        %v1947 = vadd.f32 %v1558, %v1893
        %v1948 = vadd.f32 %v1559, %v1894
        %v1949 = vadd.f32 %v1560, %v1889
        %v1950 = vadd.f32 %v1561, %v1890
        %v1951 = vadd.f32 %v1562, %v1891
        %v1952 = vadd.f32 %v1563, %v1886
        %v1953 = vadd.f32 %v1564, %v1887
        %v1954 = vadd.f32 %v1565, %v1888
        %v1955 = vadd.f32 %v1566, %v1883
        %v1956 = vadd.f32 %v1567, %v1884
        %v1957 = vadd.f32 %v1568, %v1885
        %v1958 = vadd.f32 %v1569, %v1880
        %v1959 = vadd.f32 %v1570, %v1881
        %v1960 = vadd.f32 %v1571, %v1882
        %v1961 = vadd.f32 %v1572, %v1877
        %v1962 = vadd.f32 %v1573, %v1878
        %v1963 = vadd.f32 %v1574, %v1879
        %v1964 = vadd.f32 %v1575, %v1874
        %v1965 = vadd.f32 %v1576, %v1875
        %v1966 = vadd.f32 %v1577, %v1876
        %v1967 = vadd.f32 %v1578, %v1919
        %v1968 = vadd.f32 %v1579, %v1920
        %v1969 = vadd.f32 %v1580, %v1921
        %s1970 = scalar_lea.vmem %s1, 1920
        %v1971 = vld [vmem:[%s1970] sm:$0xff]
        %v1972 = vld [vmem:[%s1970 + $0x8] sm:$0xff]
        %v1973 = vld [vmem:[%s1970 + $0x10] sm:$0xff]
        %v1974 = vld [vmem:[%s1970 + $0x18] sm:$0xff]
        %v1975 = vld [vmem:[%s1970 + $0x20] sm:$0xff]
        %v1976 = vld [vmem:[%s1970 + $0x28] sm:$0xff]
        %v1977 = vld [vmem:[%s1970 + $0x30] sm:$0xff]
        %v1978 = vld [vmem:[%s1970 + $0x38] sm:$0xff]
        %v1979 = vld [vmem:[%s1970 + $0x40] sm:$0xff]
        %v1980 = vld [vmem:[%s1970 + $0x48] sm:$0xff]
        %v1981 = vld [vmem:[%s1970 + $0x50] sm:$0xff]
        %v1982 = vld [vmem:[%s1970 + $0x58] sm:$0xff]
        %v1983 = vld [vmem:[%s1970 + $0x60] sm:$0xff]
        %v1984 = vld [vmem:[%s1970 + $0x68] sm:$0xff]
        %v1985 = vld [vmem:[%s1970 + $0x70] sm:$0xff]
        %v1986 = vld [vmem:[%s1970 + $0x78] sm:$0xff]
        %v1987 = vld [vmem:[%s1970 + $0x80] sm:$0xff]
        %v1988 = vld [vmem:[%s1970 + $0x88] sm:$0xff]
        %v1989 = vld [vmem:[%s1970 + $0x90] sm:$0xff]
        %v1990 = vld [vmem:[%s1970 + $0x98] sm:$0xff]
        %v1991 = vld [vmem:[%s1970 + $0xa0] sm:$0xff]
        %v1992 = vld [vmem:[%s1970 + $0xa8] sm:$0xff]
        %v1993 = vld [vmem:[%s1970 + $0xb0] sm:$0xff]
        %v1994 = vld [vmem:[%s1970 + $0xb8] sm:$0xff]
        %v1995 = vld [vmem:[%s1970 + $0xc0] sm:$0xff]
        %v1996 = vld [vmem:[%s1970 + $0xc8] sm:$0xff]
        %v1997 = vld [vmem:[%s1970 + $0xd0] sm:$0xff]
        %v1998 = vld [vmem:[%s1970 + $0xd8] sm:$0xff]
        %v1999 = vld [vmem:[%s1970 + $0xe0] sm:$0xff]
        %v2000 = vld [vmem:[%s1970 + $0xe8] sm:$0xff]
        %v2001 = vld [vmem:[%s1970 + $0xf0] sm:$0xff]
        %v2002 = vld [vmem:[%s1970 + $0xf8] sm:$0xff]
        %v2003 = vld [vmem:[%s1970 + $0x100] sm:$0xff]
        %v2004 = vld [vmem:[%s1970 + $0x108] sm:$0xff]
        %v2005 = vld [vmem:[%s1970 + $0x110] sm:$0xff]
        %v2006 = vld [vmem:[%s1970 + $0x118] sm:$0xff]
        %v2007 = vld [vmem:[%s1970 + $0x120] sm:$0xff]
        %v2008 = vld [vmem:[%s1970 + $0x128] sm:$0xff]
        %v2009 = vld [vmem:[%s1970 + $0x130] sm:$0xff]
        %v2010 = vld [vmem:[%s1970 + $0x138] sm:$0xff]
        %v2011 = vld [vmem:[%s1970 + $0x140] sm:$0xff]
        %v2012 = vld [vmem:[%s1970 + $0x148] sm:$0xff]
        %v2013 = vld [vmem:[%s1970 + $0x150] sm:$0xff]
        %v2014 = vld [vmem:[%s1970 + $0x158] sm:$0xff]
        %v2015 = vld [vmem:[%s1970 + $0x160] sm:$0xff]
        %v2016 = vld [vmem:[%s1970 + $0x168] sm:$0xff]
        %v2017 = vld [vmem:[%s1970 + $0x170] sm:$0xff]
        %v2018 = vld [vmem:[%s1970 + $0x178] sm:$0xff]
        %2019 = vmatpush.msra.mxu0 %v2016
        %2020 = vmatpush.msra.mxu0 %v2013
        %2021 = vmatpush.msra.mxu0 %v2010
        %2022 = vmatpush.msra.mxu0 %v2007
        %2023 = vmatpush.msra.mxu0 %v2004
        %2024 = vmatpush.msra.mxu0 %v2001
        %2025 = vmatpush.msra.mxu0 %v1998
        %2026 = vmatpush.msra.mxu0 %v1995
        %2027 = vmatpush.msra.mxu0 %v1992
        %2028 = vmatpush.msra.mxu0 %v1989
        %2029 = vmatpush.msra.mxu0 %v1986
        %2030 = vmatpush.msra.mxu0 %v1983
        %2031 = vmatpush.msra.mxu0 %v1980
        %2032 = vmatpush.msra.mxu0 %v1977
        %2033 = vmatpush.msra.mxu0 %v1974
        %2034 = vmatpush.msra.mxu0 %v1971
        %2035 = vmatmul.f32.gmra.mxu0 %v201
        %v2036 = vpop.f32.mrf.mxu0
        %v2037 = vadd.f32 0.0, %v2036
        %2038 = vmatmul.f32.gmra.mxu0 %v202
        %v2039 = vpop.f32.mrf.mxu0
        %v2040 = vadd.f32 0.0, %v2039
        %2041 = vmatmul.f32.gmra.mxu0 %v203
        %v2042 = vpop.f32.mrf.mxu0
        %v2043 = vadd.f32 0.0, %v2042
        %2044 = vmatmul.f32.gmra.mxu0 %v204
        %v2045 = vpop.f32.mrf.mxu0
        %v2046 = vadd.f32 0.0, %v2045
        %2047 = vmatmul.f32.gmra.mxu0 %v205
        %v2048 = vpop.f32.mrf.mxu0
        %v2049 = vadd.f32 0.0, %v2048
        %2050 = vmatmul.f32.gmra.mxu0 %v206
        %v2051 = vpop.f32.mrf.mxu0
        %v2052 = vadd.f32 0.0, %v2051
        %2053 = vmatmul.f32.gmra.mxu0 %v207
        %v2054 = vpop.f32.mrf.mxu0
        %v2055 = vadd.f32 0.0, %v2054
        %2056 = vmatmul.f32.gmra.mxu0 %v208
        %v2057 = vpop.f32.mrf.mxu0
        %v2058 = vadd.f32 0.0, %v2057
        %2059 = vmatmul.f32.gmra.mxu0 %v209
        %v2060 = vpop.f32.mrf.mxu0
        %v2061 = vadd.f32 0.0, %v2060
        %2062 = vmatmul.f32.gmra.mxu0 %v210
        %v2063 = vpop.f32.mrf.mxu0
        %v2064 = vadd.f32 0.0, %v2063
        %2065 = vmatmul.f32.gmra.mxu0 %v211
        %v2066 = vpop.f32.mrf.mxu0
        %v2067 = vadd.f32 0.0, %v2066
        %2068 = vmatmul.f32.gmra.mxu0 %v212
        %v2069 = vpop.f32.mrf.mxu0
        %v2070 = vadd.f32 0.0, %v2069
        %2071 = vmatmul.f32.gmra.mxu0 %v213
        %v2072 = vpop.f32.mrf.mxu0
        %v2073 = vadd.f32 0.0, %v2072
        %2074 = vmatmul.f32.gmra.mxu0 %v214
        %v2075 = vpop.f32.mrf.mxu0
        %v2076 = vadd.f32 0.0, %v2075
        %2077 = vmatmul.f32.gmra.mxu0 %v215
        %v2078 = vpop.f32.mrf.mxu0
        %v2079 = vadd.f32 0.0, %v2078
        %2080 = vmatmul.f32.gmra.mxu0 %v216
        %v2081 = vpop.f32.mrf.mxu0
        %v2082 = vadd.f32 0.0, %v2081
        %2083 = vdwg.mxu0
        %2084 = vmatpush.msra.mxu0 %v2017
        %2085 = vmatpush.msra.mxu0 %v2014
        %2086 = vmatpush.msra.mxu0 %v2011
        %2087 = vmatpush.msra.mxu0 %v2008
        %2088 = vmatpush.msra.mxu0 %v2005
        %2089 = vmatpush.msra.mxu0 %v2002
        %2090 = vmatpush.msra.mxu0 %v1999
        %2091 = vmatpush.msra.mxu0 %v1996
        %2092 = vmatpush.msra.mxu0 %v1993
        %2093 = vmatpush.msra.mxu0 %v1990
        %2094 = vmatpush.msra.mxu0 %v1987
        %2095 = vmatpush.msra.mxu0 %v1984
        %2096 = vmatpush.msra.mxu0 %v1981
        %2097 = vmatpush.msra.mxu0 %v1978
        %2098 = vmatpush.msra.mxu0 %v1975
        %2099 = vmatpush.msra.mxu0 %v1972
        %2100 = vmatmul.f32.gmra.mxu0 %v201
        %v2101 = vpop.f32.mrf.mxu0
        %v2102 = vadd.f32 0.0, %v2101
        %2103 = vmatmul.f32.gmra.mxu0 %v202
        %v2104 = vpop.f32.mrf.mxu0
        %v2105 = vadd.f32 0.0, %v2104
        %2106 = vmatmul.f32.gmra.mxu0 %v203
        %v2107 = vpop.f32.mrf.mxu0
        %v2108 = vadd.f32 0.0, %v2107
        %2109 = vmatmul.f32.gmra.mxu0 %v204
        %v2110 = vpop.f32.mrf.mxu0
        %v2111 = vadd.f32 0.0, %v2110
        %2112 = vmatmul.f32.gmra.mxu0 %v205
        %v2113 = vpop.f32.mrf.mxu0
        %v2114 = vadd.f32 0.0, %v2113
        %2115 = vmatmul.f32.gmra.mxu0 %v206
        %v2116 = vpop.f32.mrf.mxu0
        %v2117 = vadd.f32 0.0, %v2116
        %2118 = vmatmul.f32.gmra.mxu0 %v207
        %v2119 = vpop.f32.mrf.mxu0
        %v2120 = vadd.f32 0.0, %v2119
        %2121 = vmatmul.f32.gmra.mxu0 %v208
        %v2122 = vpop.f32.mrf.mxu0
        %v2123 = vadd.f32 0.0, %v2122
        %2124 = vmatmul.f32.gmra.mxu0 %v209
        %v2125 = vpop.f32.mrf.mxu0
        %v2126 = vadd.f32 0.0, %v2125
        %2127 = vmatmul.f32.gmra.mxu0 %v210
        %v2128 = vpop.f32.mrf.mxu0
        %v2129 = vadd.f32 0.0, %v2128
        %2130 = vmatmul.f32.gmra.mxu0 %v211
        %v2131 = vpop.f32.mrf.mxu0
        %v2132 = vadd.f32 0.0, %v2131
        %2133 = vmatmul.f32.gmra.mxu0 %v212
        %v2134 = vpop.f32.mrf.mxu0
        %v2135 = vadd.f32 0.0, %v2134
        %2136 = vmatmul.f32.gmra.mxu0 %v213
        %v2137 = vpop.f32.mrf.mxu0
        %v2138 = vadd.f32 0.0, %v2137
        %2139 = vmatmul.f32.gmra.mxu0 %v214
        %v2140 = vpop.f32.mrf.mxu0
        %v2141 = vadd.f32 0.0, %v2140
        %2142 = vmatmul.f32.gmra.mxu0 %v215
        %v2143 = vpop.f32.mrf.mxu0
        %v2144 = vadd.f32 0.0, %v2143
        %2145 = vmatmul.f32.gmra.mxu0 %v216
        %v2146 = vpop.f32.mrf.mxu0
        %v2147 = vadd.f32 0.0, %v2146
        %2148 = vdwg.mxu0
        %2149 = vmatpush.msra.mxu0 %v2018
        %2150 = vmatpush.msra.mxu0 %v2015
        %2151 = vmatpush.msra.mxu0 %v2012
        %2152 = vmatpush.msra.mxu0 %v2009
        %2153 = vmatpush.msra.mxu0 %v2006
        %2154 = vmatpush.msra.mxu0 %v2003
        %2155 = vmatpush.msra.mxu0 %v2000
        %2156 = vmatpush.msra.mxu0 %v1997
        %2157 = vmatpush.msra.mxu0 %v1994
        %2158 = vmatpush.msra.mxu0 %v1991
        %2159 = vmatpush.msra.mxu0 %v1988
        %2160 = vmatpush.msra.mxu0 %v1985
        %2161 = vmatpush.msra.mxu0 %v1982
        %2162 = vmatpush.msra.mxu0 %v1979
        %2163 = vmatpush.msra.mxu0 %v1976
        %2164 = vmatpush.msra.mxu0 %v1973
        %2165 = vmatmul.f32.gmra.mxu0 %v201
        %v2166 = vpop.f32.mrf.mxu0
        %v2167 = vadd.f32 0.0, %v2166
        %2168 = vmatmul.f32.gmra.mxu0 %v202
        %v2169 = vpop.f32.mrf.mxu0
        %v2170 = vadd.f32 0.0, %v2169
        %2171 = vmatmul.f32.gmra.mxu0 %v203
        %v2172 = vpop.f32.mrf.mxu0
        %v2173 = vadd.f32 0.0, %v2172
        %2174 = vmatmul.f32.gmra.mxu0 %v204
        %v2175 = vpop.f32.mrf.mxu0
        %v2176 = vadd.f32 0.0, %v2175
        %2177 = vmatmul.f32.gmra.mxu0 %v205
        %v2178 = vpop.f32.mrf.mxu0
        %v2179 = vadd.f32 0.0, %v2178
        %2180 = vmatmul.f32.gmra.mxu0 %v206
        %v2181 = vpop.f32.mrf.mxu0
        %v2182 = vadd.f32 0.0, %v2181
        %2183 = vmatmul.f32.gmra.mxu0 %v207
        %v2184 = vpop.f32.mrf.mxu0
        %v2185 = vadd.f32 0.0, %v2184
        %2186 = vmatmul.f32.gmra.mxu0 %v208
        %v2187 = vpop.f32.mrf.mxu0
        %v2188 = vadd.f32 0.0, %v2187
        %2189 = vmatmul.f32.gmra.mxu0 %v209
        %v2190 = vpop.f32.mrf.mxu0
        %v2191 = vadd.f32 0.0, %v2190
        %2192 = vmatmul.f32.gmra.mxu0 %v210
        %v2193 = vpop.f32.mrf.mxu0
        %v2194 = vadd.f32 0.0, %v2193
        %2195 = vmatmul.f32.gmra.mxu0 %v211
        %v2196 = vpop.f32.mrf.mxu0
        %v2197 = vadd.f32 0.0, %v2196
        %2198 = vmatmul.f32.gmra.mxu0 %v212
        %v2199 = vpop.f32.mrf.mxu0
        %v2200 = vadd.f32 0.0, %v2199
        %2201 = vmatmul.f32.gmra.mxu0 %v213
        %v2202 = vpop.f32.mrf.mxu0
        %v2203 = vadd.f32 0.0, %v2202
        %2204 = vmatmul.f32.gmra.mxu0 %v214
        %v2205 = vpop.f32.mrf.mxu0
        %v2206 = vadd.f32 0.0, %v2205
        %2207 = vmatmul.f32.gmra.mxu0 %v215
        %v2208 = vpop.f32.mrf.mxu0
        %v2209 = vadd.f32 0.0, %v2208
        %2210 = vmatmul.f32.gmra.mxu0 %v216
        %v2211 = vpop.f32.mrf.mxu0
        %v2212 = vadd.f32 0.0, %v2211
        %2213 = vdwg.mxu0
        %v2214 = vrot.slane %v2037, 5
        %v2215 = vrot.slane %v2102, 5
        %v2216 = vrot.slane %v2167, 5
        %v2217 = vrot.slane %v2040, 5
        %v2218 = vrot.slane %v2105, 5
        %v2219 = vrot.slane %v2170, 5
        %v2220 = vrot.slane %v2043, 5
        %v2221 = vrot.slane %v2108, 5
        %v2222 = vrot.slane %v2173, 5
        %v2223 = vrot.slane %v2046, 5
        %v2224 = vrot.slane %v2111, 5
        %v2225 = vrot.slane %v2176, 5
        %v2226 = vrot.slane %v2049, 5
        %v2227 = vrot.slane %v2114, 5
        %v2228 = vrot.slane %v2179, 5
        %v2229 = vrot.slane %v2052, 5
        %v2230 = vrot.slane %v2117, 5
        %v2231 = vrot.slane %v2182, 5
        %v2232 = vrot.slane %v2055, 5
        %v2233 = vrot.slane %v2120, 5
        %v2234 = vrot.slane %v2185, 5
        %v2235 = vrot.slane %v2058, 5
        %v2236 = vrot.slane %v2123, 5
        %v2237 = vrot.slane %v2188, 5
        %v2238 = vrot.slane %v2061, 5
        %v2239 = vrot.slane %v2126, 5
        %v2240 = vrot.slane %v2191, 5
        %v2241 = vrot.slane %v2064, 5
        %v2242 = vrot.slane %v2129, 5
        %v2243 = vrot.slane %v2194, 5
        %v2244 = vrot.slane %v2067, 5
        %v2245 = vrot.slane %v2132, 5
        %v2246 = vrot.slane %v2197, 5
        %v2247 = vrot.slane %v2070, 5
        %v2248 = vrot.slane %v2135, 5
        %v2249 = vrot.slane %v2200, 5
        %v2250 = vrot.slane %v2073, 5
        %v2251 = vrot.slane %v2138, 5
        %v2252 = vrot.slane %v2203, 5
        %v2253 = vrot.slane %v2076, 5
        %v2254 = vrot.slane %v2141, 5
        %v2255 = vrot.slane %v2206, 5
        %v2256 = vrot.slane %v2079, 5
        %v2257 = vrot.slane %v2144, 5
        %v2258 = vrot.slane %v2209, 5
        %v2259 = vrot.slane %v2082, 5
        %v2260 = vrot.slane %v2147, 5
        %v2261 = vrot.slane %v2212, 5
        %vm2262 = vcmp.lt.s32.totalorder %v558, 3
        %v2263 = vsel %vm2262, %v2256, %v2259
        %v2264 = vsel %vm2262, %v2257, %v2260
        %v2265 = vsel %vm2262, %v2258, %v2261
        %v2266 = vsel %vm2262, %v2253, %v2256
        %v2267 = vsel %vm2262, %v2254, %v2257
        %v2268 = vsel %vm2262, %v2255, %v2258
        %v2269 = vsel %vm2262, %v2250, %v2253
        %v2270 = vsel %vm2262, %v2251, %v2254
        %v2271 = vsel %vm2262, %v2252, %v2255
        %v2272 = vsel %vm2262, %v2247, %v2250
        %v2273 = vsel %vm2262, %v2248, %v2251
        %v2274 = vsel %vm2262, %v2249, %v2252
        %v2275 = vsel %vm2262, %v2244, %v2247
        %v2276 = vsel %vm2262, %v2245, %v2248
        %v2277 = vsel %vm2262, %v2246, %v2249
        %v2278 = vsel %vm2262, %v2241, %v2244
        %v2279 = vsel %vm2262, %v2242, %v2245
        %v2280 = vsel %vm2262, %v2243, %v2246
        %v2281 = vsel %vm2262, %v2238, %v2241
        %v2282 = vsel %vm2262, %v2239, %v2242
        %v2283 = vsel %vm2262, %v2240, %v2243
        %v2284 = vsel %vm2262, %v2235, %v2238
        %v2285 = vsel %vm2262, %v2236, %v2239
        %v2286 = vsel %vm2262, %v2237, %v2240
        %v2287 = vsel %vm2262, %v2232, %v2235
        %v2288 = vsel %vm2262, %v2233, %v2236
        %v2289 = vsel %vm2262, %v2234, %v2237
        %v2290 = vsel %vm2262, %v2229, %v2232
        %v2291 = vsel %vm2262, %v2230, %v2233
        %v2292 = vsel %vm2262, %v2231, %v2234
        %v2293 = vsel %vm2262, %v2226, %v2229
        %v2294 = vsel %vm2262, %v2227, %v2230
        %v2295 = vsel %vm2262, %v2228, %v2231
        %v2296 = vsel %vm2262, %v2223, %v2226
        %v2297 = vsel %vm2262, %v2224, %v2227
        %v2298 = vsel %vm2262, %v2225, %v2228
        %v2299 = vsel %vm2262, %v2220, %v2223
        %v2300 = vsel %vm2262, %v2221, %v2224
        %v2301 = vsel %vm2262, %v2222, %v2225
        %v2302 = vsel %vm2262, %v2217, %v2220
        %v2303 = vsel %vm2262, %v2218, %v2221
        %v2304 = vsel %vm2262, %v2219, %v2222
        %v2305 = vsel %vm2262, %v2214, %v2217
        %v2306 = vsel %vm2262, %v2215, %v2218
        %v2307 = vsel %vm2262, %v2216, %v2219
        %v2308 = vsel %vm2262, %v2259, %v2214
        %v2309 = vsel %vm2262, %v2260, %v2215
        %v2310 = vsel %vm2262, %v2261, %v2216
        %v2311 = vadd.f32 %v1922, %v2305
        %v2312 = vadd.f32 %v1923, %v2306
        %v2313 = vadd.f32 %v1924, %v2307
        %v2314 = vadd.f32 %v1925, %v2302
        %v2315 = vadd.f32 %v1926, %v2303
        %v2316 = vadd.f32 %v1927, %v2304
        %v2317 = vadd.f32 %v1928, %v2299
        %v2318 = vadd.f32 %v1929, %v2300
        %v2319 = vadd.f32 %v1930, %v2301
        %v2320 = vadd.f32 %v1931, %v2296
        %v2321 = vadd.f32 %v1932, %v2297
        %v2322 = vadd.f32 %v1933, %v2298
        %v2323 = vadd.f32 %v1934, %v2293
        %v2324 = vadd.f32 %v1935, %v2294
        %v2325 = vadd.f32 %v1936, %v2295
        %v2326 = vadd.f32 %v1937, %v2290
        %v2327 = vadd.f32 %v1938, %v2291
        %v2328 = vadd.f32 %v1939, %v2292
        %v2329 = vadd.f32 %v1940, %v2287
        %v2330 = vadd.f32 %v1941, %v2288
        %v2331 = vadd.f32 %v1942, %v2289
        %v2332 = vadd.f32 %v1943, %v2284
        %v2333 = vadd.f32 %v1944, %v2285
        %v2334 = vadd.f32 %v1945, %v2286
        %v2335 = vadd.f32 %v1946, %v2281
        %v2336 = vadd.f32 %v1947, %v2282
        %v2337 = vadd.f32 %v1948, %v2283
        %v2338 = vadd.f32 %v1949, %v2278
        %v2339 = vadd.f32 %v1950, %v2279
        %v2340 = vadd.f32 %v1951, %v2280
        %v2341 = vadd.f32 %v1952, %v2275
        %v2342 = vadd.f32 %v1953, %v2276
        %v2343 = vadd.f32 %v1954, %v2277
        %v2344 = vadd.f32 %v1955, %v2272
        %v2345 = vadd.f32 %v1956, %v2273
        %v2346 = vadd.f32 %v1957, %v2274
        %v2347 = vadd.f32 %v1958, %v2269
        %v2348 = vadd.f32 %v1959, %v2270
        %v2349 = vadd.f32 %v1960, %v2271
        %v2350 = vadd.f32 %v1961, %v2266
        %v2351 = vadd.f32 %v1962, %v2267
        %v2352 = vadd.f32 %v1963, %v2268
        %v2353 = vadd.f32 %v1964, %v2263
        %v2354 = vadd.f32 %v1965, %v2264
        %v2355 = vadd.f32 %v1966, %v2265
        %v2356 = vadd.f32 %v1967, %v2308
        %v2357 = vadd.f32 %v1968, %v2309
        %v2358 = vadd.f32 %v1969, %v2310
        %s2359 = scalar_lea.vmem %s1, 2304
        %v2360 = vld [vmem:[%s2359] sm:$0xff]
        %v2361 = vld [vmem:[%s2359 + $0x8] sm:$0xff]
        %v2362 = vld [vmem:[%s2359 + $0x10] sm:$0xff]
        %v2363 = vld [vmem:[%s2359 + $0x18] sm:$0xff]
        %v2364 = vld [vmem:[%s2359 + $0x20] sm:$0xff]
        %v2365 = vld [vmem:[%s2359 + $0x28] sm:$0xff]
        %v2366 = vld [vmem:[%s2359 + $0x30] sm:$0xff]
        %v2367 = vld [vmem:[%s2359 + $0x38] sm:$0xff]
        %v2368 = vld [vmem:[%s2359 + $0x40] sm:$0xff]
        %v2369 = vld [vmem:[%s2359 + $0x48] sm:$0xff]
        %v2370 = vld [vmem:[%s2359 + $0x50] sm:$0xff]
        %v2371 = vld [vmem:[%s2359 + $0x58] sm:$0xff]
        %v2372 = vld [vmem:[%s2359 + $0x60] sm:$0xff]
        %v2373 = vld [vmem:[%s2359 + $0x68] sm:$0xff]
        %v2374 = vld [vmem:[%s2359 + $0x70] sm:$0xff]
        %v2375 = vld [vmem:[%s2359 + $0x78] sm:$0xff]
        %v2376 = vld [vmem:[%s2359 + $0x80] sm:$0xff]
        %v2377 = vld [vmem:[%s2359 + $0x88] sm:$0xff]
        %v2378 = vld [vmem:[%s2359 + $0x90] sm:$0xff]
        %v2379 = vld [vmem:[%s2359 + $0x98] sm:$0xff]
        %v2380 = vld [vmem:[%s2359 + $0xa0] sm:$0xff]
        %v2381 = vld [vmem:[%s2359 + $0xa8] sm:$0xff]
        %v2382 = vld [vmem:[%s2359 + $0xb0] sm:$0xff]
        %v2383 = vld [vmem:[%s2359 + $0xb8] sm:$0xff]
        %v2384 = vld [vmem:[%s2359 + $0xc0] sm:$0xff]
        %v2385 = vld [vmem:[%s2359 + $0xc8] sm:$0xff]
        %v2386 = vld [vmem:[%s2359 + $0xd0] sm:$0xff]
        %v2387 = vld [vmem:[%s2359 + $0xd8] sm:$0xff]
        %v2388 = vld [vmem:[%s2359 + $0xe0] sm:$0xff]
        %v2389 = vld [vmem:[%s2359 + $0xe8] sm:$0xff]
        %v2390 = vld [vmem:[%s2359 + $0xf0] sm:$0xff]
        %v2391 = vld [vmem:[%s2359 + $0xf8] sm:$0xff]
        %v2392 = vld [vmem:[%s2359 + $0x100] sm:$0xff]
        %v2393 = vld [vmem:[%s2359 + $0x108] sm:$0xff]
        %v2394 = vld [vmem:[%s2359 + $0x110] sm:$0xff]
        %v2395 = vld [vmem:[%s2359 + $0x118] sm:$0xff]
        %v2396 = vld [vmem:[%s2359 + $0x120] sm:$0xff]
        %v2397 = vld [vmem:[%s2359 + $0x128] sm:$0xff]
        %v2398 = vld [vmem:[%s2359 + $0x130] sm:$0xff]
        %v2399 = vld [vmem:[%s2359 + $0x138] sm:$0xff]
        %v2400 = vld [vmem:[%s2359 + $0x140] sm:$0xff]
        %v2401 = vld [vmem:[%s2359 + $0x148] sm:$0xff]
        %v2402 = vld [vmem:[%s2359 + $0x150] sm:$0xff]
        %v2403 = vld [vmem:[%s2359 + $0x158] sm:$0xff]
        %v2404 = vld [vmem:[%s2359 + $0x160] sm:$0xff]
        %v2405 = vld [vmem:[%s2359 + $0x168] sm:$0xff]
        %v2406 = vld [vmem:[%s2359 + $0x170] sm:$0xff]
        %v2407 = vld [vmem:[%s2359 + $0x178] sm:$0xff]
        %2408 = vmatpush.msra.mxu0 %v2405
        %2409 = vmatpush.msra.mxu0 %v2402
        %2410 = vmatpush.msra.mxu0 %v2399
        %2411 = vmatpush.msra.mxu0 %v2396
        %2412 = vmatpush.msra.mxu0 %v2393
        %2413 = vmatpush.msra.mxu0 %v2390
        %2414 = vmatpush.msra.mxu0 %v2387
        %2415 = vmatpush.msra.mxu0 %v2384
        %2416 = vmatpush.msra.mxu0 %v2381
        %2417 = vmatpush.msra.mxu0 %v2378
        %2418 = vmatpush.msra.mxu0 %v2375
        %2419 = vmatpush.msra.mxu0 %v2372
        %2420 = vmatpush.msra.mxu0 %v2369
        %2421 = vmatpush.msra.mxu0 %v2366
        %2422 = vmatpush.msra.mxu0 %v2363
        %2423 = vmatpush.msra.mxu0 %v2360
        %2424 = vmatmul.f32.gmra.mxu0 %v201
        %v2425 = vpop.f32.mrf.mxu0
        %v2426 = vadd.f32 0.0, %v2425
        %2427 = vmatmul.f32.gmra.mxu0 %v202
        %v2428 = vpop.f32.mrf.mxu0
        %v2429 = vadd.f32 0.0, %v2428
        %2430 = vmatmul.f32.gmra.mxu0 %v203
        %v2431 = vpop.f32.mrf.mxu0
        %v2432 = vadd.f32 0.0, %v2431
        %2433 = vmatmul.f32.gmra.mxu0 %v204
        %v2434 = vpop.f32.mrf.mxu0
        %v2435 = vadd.f32 0.0, %v2434
        %2436 = vmatmul.f32.gmra.mxu0 %v205
        %v2437 = vpop.f32.mrf.mxu0
        %v2438 = vadd.f32 0.0, %v2437
        %2439 = vmatmul.f32.gmra.mxu0 %v206
        %v2440 = vpop.f32.mrf.mxu0
        %v2441 = vadd.f32 0.0, %v2440
        %2442 = vmatmul.f32.gmra.mxu0 %v207
        %v2443 = vpop.f32.mrf.mxu0
        %v2444 = vadd.f32 0.0, %v2443
        %2445 = vmatmul.f32.gmra.mxu0 %v208
        %v2446 = vpop.f32.mrf.mxu0
        %v2447 = vadd.f32 0.0, %v2446
        %2448 = vmatmul.f32.gmra.mxu0 %v209
        %v2449 = vpop.f32.mrf.mxu0
        %v2450 = vadd.f32 0.0, %v2449
        %2451 = vmatmul.f32.gmra.mxu0 %v210
        %v2452 = vpop.f32.mrf.mxu0
        %v2453 = vadd.f32 0.0, %v2452
        %2454 = vmatmul.f32.gmra.mxu0 %v211
        %v2455 = vpop.f32.mrf.mxu0
        %v2456 = vadd.f32 0.0, %v2455
        %2457 = vmatmul.f32.gmra.mxu0 %v212
        %v2458 = vpop.f32.mrf.mxu0
        %v2459 = vadd.f32 0.0, %v2458
        %2460 = vmatmul.f32.gmra.mxu0 %v213
        %v2461 = vpop.f32.mrf.mxu0
        %v2462 = vadd.f32 0.0, %v2461
        %2463 = vmatmul.f32.gmra.mxu0 %v214
        %v2464 = vpop.f32.mrf.mxu0
        %v2465 = vadd.f32 0.0, %v2464
        %2466 = vmatmul.f32.gmra.mxu0 %v215
        %v2467 = vpop.f32.mrf.mxu0
        %v2468 = vadd.f32 0.0, %v2467
        %2469 = vmatmul.f32.gmra.mxu0 %v216
        %v2470 = vpop.f32.mrf.mxu0
        %v2471 = vadd.f32 0.0, %v2470
        %2472 = vdwg.mxu0
        %2473 = vmatpush.msra.mxu0 %v2406
        %2474 = vmatpush.msra.mxu0 %v2403
        %2475 = vmatpush.msra.mxu0 %v2400
        %2476 = vmatpush.msra.mxu0 %v2397
        %2477 = vmatpush.msra.mxu0 %v2394
        %2478 = vmatpush.msra.mxu0 %v2391
        %2479 = vmatpush.msra.mxu0 %v2388
        %2480 = vmatpush.msra.mxu0 %v2385
        %2481 = vmatpush.msra.mxu0 %v2382
        %2482 = vmatpush.msra.mxu0 %v2379
        %2483 = vmatpush.msra.mxu0 %v2376
        %2484 = vmatpush.msra.mxu0 %v2373
        %2485 = vmatpush.msra.mxu0 %v2370
        %2486 = vmatpush.msra.mxu0 %v2367
        %2487 = vmatpush.msra.mxu0 %v2364
        %2488 = vmatpush.msra.mxu0 %v2361
        %2489 = vmatmul.f32.gmra.mxu0 %v201
        %v2490 = vpop.f32.mrf.mxu0
        %v2491 = vadd.f32 0.0, %v2490
        %2492 = vmatmul.f32.gmra.mxu0 %v202
        %v2493 = vpop.f32.mrf.mxu0
        %v2494 = vadd.f32 0.0, %v2493
        %2495 = vmatmul.f32.gmra.mxu0 %v203
        %v2496 = vpop.f32.mrf.mxu0
        %v2497 = vadd.f32 0.0, %v2496
        %2498 = vmatmul.f32.gmra.mxu0 %v204
        %v2499 = vpop.f32.mrf.mxu0
        %v2500 = vadd.f32 0.0, %v2499
        %2501 = vmatmul.f32.gmra.mxu0 %v205
        %v2502 = vpop.f32.mrf.mxu0
        %v2503 = vadd.f32 0.0, %v2502
        %2504 = vmatmul.f32.gmra.mxu0 %v206
        %v2505 = vpop.f32.mrf.mxu0
        %v2506 = vadd.f32 0.0, %v2505
        %2507 = vmatmul.f32.gmra.mxu0 %v207
        %v2508 = vpop.f32.mrf.mxu0
        %v2509 = vadd.f32 0.0, %v2508
        %2510 = vmatmul.f32.gmra.mxu0 %v208
        %v2511 = vpop.f32.mrf.mxu0
        %v2512 = vadd.f32 0.0, %v2511
        %2513 = vmatmul.f32.gmra.mxu0 %v209
        %v2514 = vpop.f32.mrf.mxu0
        %v2515 = vadd.f32 0.0, %v2514
        %2516 = vmatmul.f32.gmra.mxu0 %v210
        %v2517 = vpop.f32.mrf.mxu0
        %v2518 = vadd.f32 0.0, %v2517
        %2519 = vmatmul.f32.gmra.mxu0 %v211
        %v2520 = vpop.f32.mrf.mxu0
        %v2521 = vadd.f32 0.0, %v2520
        %2522 = vmatmul.f32.gmra.mxu0 %v212
        %v2523 = vpop.f32.mrf.mxu0
        %v2524 = vadd.f32 0.0, %v2523
        %2525 = vmatmul.f32.gmra.mxu0 %v213
        %v2526 = vpop.f32.mrf.mxu0
        %v2527 = vadd.f32 0.0, %v2526
        %2528 = vmatmul.f32.gmra.mxu0 %v214
        %v2529 = vpop.f32.mrf.mxu0
        %v2530 = vadd.f32 0.0, %v2529
        %2531 = vmatmul.f32.gmra.mxu0 %v215
        %v2532 = vpop.f32.mrf.mxu0
        %v2533 = vadd.f32 0.0, %v2532
        %2534 = vmatmul.f32.gmra.mxu0 %v216
        %v2535 = vpop.f32.mrf.mxu0
        %v2536 = vadd.f32 0.0, %v2535
        %2537 = vdwg.mxu0
        %2538 = vmatpush.msra.mxu0 %v2407
        %2539 = vmatpush.msra.mxu0 %v2404
        %2540 = vmatpush.msra.mxu0 %v2401
        %2541 = vmatpush.msra.mxu0 %v2398
        %2542 = vmatpush.msra.mxu0 %v2395
        %2543 = vmatpush.msra.mxu0 %v2392
        %2544 = vmatpush.msra.mxu0 %v2389
        %2545 = vmatpush.msra.mxu0 %v2386
        %2546 = vmatpush.msra.mxu0 %v2383
        %2547 = vmatpush.msra.mxu0 %v2380
        %2548 = vmatpush.msra.mxu0 %v2377
        %2549 = vmatpush.msra.mxu0 %v2374
        %2550 = vmatpush.msra.mxu0 %v2371
        %2551 = vmatpush.msra.mxu0 %v2368
        %2552 = vmatpush.msra.mxu0 %v2365
        %2553 = vmatpush.msra.mxu0 %v2362
        %2554 = vmatmul.f32.gmra.mxu0 %v201
        %v2555 = vpop.f32.mrf.mxu0
        %v2556 = vadd.f32 0.0, %v2555
        %2557 = vmatmul.f32.gmra.mxu0 %v202
        %v2558 = vpop.f32.mrf.mxu0
        %v2559 = vadd.f32 0.0, %v2558
        %2560 = vmatmul.f32.gmra.mxu0 %v203
        %v2561 = vpop.f32.mrf.mxu0
        %v2562 = vadd.f32 0.0, %v2561
        %2563 = vmatmul.f32.gmra.mxu0 %v204
        %v2564 = vpop.f32.mrf.mxu0
        %v2565 = vadd.f32 0.0, %v2564
        %2566 = vmatmul.f32.gmra.mxu0 %v205
        %v2567 = vpop.f32.mrf.mxu0
        %v2568 = vadd.f32 0.0, %v2567
        %2569 = vmatmul.f32.gmra.mxu0 %v206
        %v2570 = vpop.f32.mrf.mxu0
        %v2571 = vadd.f32 0.0, %v2570
        %2572 = vmatmul.f32.gmra.mxu0 %v207
        %v2573 = vpop.f32.mrf.mxu0
        %v2574 = vadd.f32 0.0, %v2573
        %2575 = vmatmul.f32.gmra.mxu0 %v208
        %v2576 = vpop.f32.mrf.mxu0
        %v2577 = vadd.f32 0.0, %v2576
        %2578 = vmatmul.f32.gmra.mxu0 %v209
        %v2579 = vpop.f32.mrf.mxu0
        %v2580 = vadd.f32 0.0, %v2579
        %2581 = vmatmul.f32.gmra.mxu0 %v210
        %v2582 = vpop.f32.mrf.mxu0
        %v2583 = vadd.f32 0.0, %v2582
        %2584 = vmatmul.f32.gmra.mxu0 %v211
        %v2585 = vpop.f32.mrf.mxu0
        %v2586 = vadd.f32 0.0, %v2585
        %2587 = vmatmul.f32.gmra.mxu0 %v212
        %v2588 = vpop.f32.mrf.mxu0
        %v2589 = vadd.f32 0.0, %v2588
        %2590 = vmatmul.f32.gmra.mxu0 %v213
        %v2591 = vpop.f32.mrf.mxu0
        %v2592 = vadd.f32 0.0, %v2591
        %2593 = vmatmul.f32.gmra.mxu0 %v214
        %v2594 = vpop.f32.mrf.mxu0
        %v2595 = vadd.f32 0.0, %v2594
        %2596 = vmatmul.f32.gmra.mxu0 %v215
        %v2597 = vpop.f32.mrf.mxu0
        %v2598 = vadd.f32 0.0, %v2597
        %2599 = vmatmul.f32.gmra.mxu0 %v216
        %v2600 = vpop.f32.mrf.mxu0
        %v2601 = vadd.f32 0.0, %v2600
        %2602 = vdwg.mxu0
        %v2603 = vrot.slane %v2426, 6
        %v2604 = vrot.slane %v2491, 6
        %v2605 = vrot.slane %v2556, 6
        %v2606 = vrot.slane %v2429, 6
        %v2607 = vrot.slane %v2494, 6
        %v2608 = vrot.slane %v2559, 6
        %v2609 = vrot.slane %v2432, 6
        %v2610 = vrot.slane %v2497, 6
        %v2611 = vrot.slane %v2562, 6
        %v2612 = vrot.slane %v2435, 6
        %v2613 = vrot.slane %v2500, 6
        %v2614 = vrot.slane %v2565, 6
        %v2615 = vrot.slane %v2438, 6
        %v2616 = vrot.slane %v2503, 6
        %v2617 = vrot.slane %v2568, 6
        %v2618 = vrot.slane %v2441, 6
        %v2619 = vrot.slane %v2506, 6
        %v2620 = vrot.slane %v2571, 6
        %v2621 = vrot.slane %v2444, 6
        %v2622 = vrot.slane %v2509, 6
        %v2623 = vrot.slane %v2574, 6
        %v2624 = vrot.slane %v2447, 6
        %v2625 = vrot.slane %v2512, 6
        %v2626 = vrot.slane %v2577, 6
        %v2627 = vrot.slane %v2450, 6
        %v2628 = vrot.slane %v2515, 6
        %v2629 = vrot.slane %v2580, 6
        %v2630 = vrot.slane %v2453, 6
        %v2631 = vrot.slane %v2518, 6
        %v2632 = vrot.slane %v2583, 6
        %v2633 = vrot.slane %v2456, 6
        %v2634 = vrot.slane %v2521, 6
        %v2635 = vrot.slane %v2586, 6
        %v2636 = vrot.slane %v2459, 6
        %v2637 = vrot.slane %v2524, 6
        %v2638 = vrot.slane %v2589, 6
        %v2639 = vrot.slane %v2462, 6
        %v2640 = vrot.slane %v2527, 6
        %v2641 = vrot.slane %v2592, 6
        %v2642 = vrot.slane %v2465, 6
        %v2643 = vrot.slane %v2530, 6
        %v2644 = vrot.slane %v2595, 6
        %v2645 = vrot.slane %v2468, 6
        %v2646 = vrot.slane %v2533, 6
        %v2647 = vrot.slane %v2598, 6
        %v2648 = vrot.slane %v2471, 6
        %v2649 = vrot.slane %v2536, 6
        %v2650 = vrot.slane %v2601, 6
        %vm2651 = vcmp.lt.s32.totalorder %v558, 2
        %v2652 = vsel %vm2651, %v2645, %v2648
        %v2653 = vsel %vm2651, %v2646, %v2649
        %v2654 = vsel %vm2651, %v2647, %v2650
        %v2655 = vsel %vm2651, %v2642, %v2645
        %v2656 = vsel %vm2651, %v2643, %v2646
        %v2657 = vsel %vm2651, %v2644, %v2647
        %v2658 = vsel %vm2651, %v2639, %v2642
        %v2659 = vsel %vm2651, %v2640, %v2643
        %v2660 = vsel %vm2651, %v2641, %v2644
        %v2661 = vsel %vm2651, %v2636, %v2639
        %v2662 = vsel %vm2651, %v2637, %v2640
        %v2663 = vsel %vm2651, %v2638, %v2641
        %v2664 = vsel %vm2651, %v2633, %v2636
        %v2665 = vsel %vm2651, %v2634, %v2637
        %v2666 = vsel %vm2651, %v2635, %v2638
        %v2667 = vsel %vm2651, %v2630, %v2633
        %v2668 = vsel %vm2651, %v2631, %v2634
        %v2669 = vsel %vm2651, %v2632, %v2635
        %v2670 = vsel %vm2651, %v2627, %v2630
        %v2671 = vsel %vm2651, %v2628, %v2631
        %v2672 = vsel %vm2651, %v2629, %v2632
        %v2673 = vsel %vm2651, %v2624, %v2627
        %v2674 = vsel %vm2651, %v2625, %v2628
        %v2675 = vsel %vm2651, %v2626, %v2629
        %v2676 = vsel %vm2651, %v2621, %v2624
        %v2677 = vsel %vm2651, %v2622, %v2625
        %v2678 = vsel %vm2651, %v2623, %v2626
        %v2679 = vsel %vm2651, %v2618, %v2621
        %v2680 = vsel %vm2651, %v2619, %v2622
        %v2681 = vsel %vm2651, %v2620, %v2623
        %v2682 = vsel %vm2651, %v2615, %v2618
        %v2683 = vsel %vm2651, %v2616, %v2619
        %v2684 = vsel %vm2651, %v2617, %v2620
        %v2685 = vsel %vm2651, %v2612, %v2615
        %v2686 = vsel %vm2651, %v2613, %v2616
        %v2687 = vsel %vm2651, %v2614, %v2617
        %v2688 = vsel %vm2651, %v2609, %v2612
        %v2689 = vsel %vm2651, %v2610, %v2613
        %v2690 = vsel %vm2651, %v2611, %v2614
        %v2691 = vsel %vm2651, %v2606, %v2609
        %v2692 = vsel %vm2651, %v2607, %v2610
        %v2693 = vsel %vm2651, %v2608, %v2611
        %v2694 = vsel %vm2651, %v2603, %v2606
        %v2695 = vsel %vm2651, %v2604, %v2607
        %v2696 = vsel %vm2651, %v2605, %v2608
        %v2697 = vsel %vm2651, %v2648, %v2603
        %v2698 = vsel %vm2651, %v2649, %v2604
        %v2699 = vsel %vm2651, %v2650, %v2605
        %v2700 = vadd.f32 %v2311, %v2694
        %v2701 = vadd.f32 %v2312, %v2695
        %v2702 = vadd.f32 %v2313, %v2696
        %v2703 = vadd.f32 %v2314, %v2691
        %v2704 = vadd.f32 %v2315, %v2692
        %v2705 = vadd.f32 %v2316, %v2693
        %v2706 = vadd.f32 %v2317, %v2688
        %v2707 = vadd.f32 %v2318, %v2689
        %v2708 = vadd.f32 %v2319, %v2690
        %v2709 = vadd.f32 %v2320, %v2685
        %v2710 = vadd.f32 %v2321, %v2686
        %v2711 = vadd.f32 %v2322, %v2687
        %v2712 = vadd.f32 %v2323, %v2682
        %v2713 = vadd.f32 %v2324, %v2683
        %v2714 = vadd.f32 %v2325, %v2684
        %v2715 = vadd.f32 %v2326, %v2679
        %v2716 = vadd.f32 %v2327, %v2680
        %v2717 = vadd.f32 %v2328, %v2681
        %v2718 = vadd.f32 %v2329, %v2676
        %v2719 = vadd.f32 %v2330, %v2677
        %v2720 = vadd.f32 %v2331, %v2678
        %v2721 = vadd.f32 %v2332, %v2673
        %v2722 = vadd.f32 %v2333, %v2674
        %v2723 = vadd.f32 %v2334, %v2675
        %v2724 = vadd.f32 %v2335, %v2670
        %v2725 = vadd.f32 %v2336, %v2671
        %v2726 = vadd.f32 %v2337, %v2672
        %v2727 = vadd.f32 %v2338, %v2667
        %v2728 = vadd.f32 %v2339, %v2668
        %v2729 = vadd.f32 %v2340, %v2669
        %v2730 = vadd.f32 %v2341, %v2664
        %v2731 = vadd.f32 %v2342, %v2665
        %v2732 = vadd.f32 %v2343, %v2666
        %v2733 = vadd.f32 %v2344, %v2661
        %v2734 = vadd.f32 %v2345, %v2662
        %v2735 = vadd.f32 %v2346, %v2663
        %v2736 = vadd.f32 %v2347, %v2658
        %v2737 = vadd.f32 %v2348, %v2659
        %v2738 = vadd.f32 %v2349, %v2660
        %v2739 = vadd.f32 %v2350, %v2655
        %v2740 = vadd.f32 %v2351, %v2656
        %v2741 = vadd.f32 %v2352, %v2657
        %v2742 = vadd.f32 %v2353, %v2652
        %v2743 = vadd.f32 %v2354, %v2653
        %v2744 = vadd.f32 %v2355, %v2654
        %v2745 = vadd.f32 %v2356, %v2697
        %v2746 = vadd.f32 %v2357, %v2698
        %v2747 = vadd.f32 %v2358, %v2699
        %s2748 = scalar_lea.vmem %s1, 2688
        %v2749 = vld [vmem:[%s2748] sm:$0xff]
        %v2750 = vld [vmem:[%s2748 + $0x8] sm:$0xff]
        %v2751 = vld [vmem:[%s2748 + $0x10] sm:$0xff]
        %v2752 = vld [vmem:[%s2748 + $0x18] sm:$0xff]
        %v2753 = vld [vmem:[%s2748 + $0x20] sm:$0xff]
        %v2754 = vld [vmem:[%s2748 + $0x28] sm:$0xff]
        %v2755 = vld [vmem:[%s2748 + $0x30] sm:$0xff]
        %v2756 = vld [vmem:[%s2748 + $0x38] sm:$0xff]
        %v2757 = vld [vmem:[%s2748 + $0x40] sm:$0xff]
        %v2758 = vld [vmem:[%s2748 + $0x48] sm:$0xff]
        %v2759 = vld [vmem:[%s2748 + $0x50] sm:$0xff]
        %v2760 = vld [vmem:[%s2748 + $0x58] sm:$0xff]
        %v2761 = vld [vmem:[%s2748 + $0x60] sm:$0xff]
        %v2762 = vld [vmem:[%s2748 + $0x68] sm:$0xff]
        %v2763 = vld [vmem:[%s2748 + $0x70] sm:$0xff]
        %v2764 = vld [vmem:[%s2748 + $0x78] sm:$0xff]
        %v2765 = vld [vmem:[%s2748 + $0x80] sm:$0xff]
        %v2766 = vld [vmem:[%s2748 + $0x88] sm:$0xff]
        %v2767 = vld [vmem:[%s2748 + $0x90] sm:$0xff]
        %v2768 = vld [vmem:[%s2748 + $0x98] sm:$0xff]
        %v2769 = vld [vmem:[%s2748 + $0xa0] sm:$0xff]
        %v2770 = vld [vmem:[%s2748 + $0xa8] sm:$0xff]
        %v2771 = vld [vmem:[%s2748 + $0xb0] sm:$0xff]
        %v2772 = vld [vmem:[%s2748 + $0xb8] sm:$0xff]
        %v2773 = vld [vmem:[%s2748 + $0xc0] sm:$0xff]
        %v2774 = vld [vmem:[%s2748 + $0xc8] sm:$0xff]
        %v2775 = vld [vmem:[%s2748 + $0xd0] sm:$0xff]
        %v2776 = vld [vmem:[%s2748 + $0xd8] sm:$0xff]
        %v2777 = vld [vmem:[%s2748 + $0xe0] sm:$0xff]
        %v2778 = vld [vmem:[%s2748 + $0xe8] sm:$0xff]
        %v2779 = vld [vmem:[%s2748 + $0xf0] sm:$0xff]
        %v2780 = vld [vmem:[%s2748 + $0xf8] sm:$0xff]
        %v2781 = vld [vmem:[%s2748 + $0x100] sm:$0xff]
        %v2782 = vld [vmem:[%s2748 + $0x108] sm:$0xff]
        %v2783 = vld [vmem:[%s2748 + $0x110] sm:$0xff]
        %v2784 = vld [vmem:[%s2748 + $0x118] sm:$0xff]
        %v2785 = vld [vmem:[%s2748 + $0x120] sm:$0xff]
        %v2786 = vld [vmem:[%s2748 + $0x128] sm:$0xff]
        %v2787 = vld [vmem:[%s2748 + $0x130] sm:$0xff]
        %v2788 = vld [vmem:[%s2748 + $0x138] sm:$0xff]
        %v2789 = vld [vmem:[%s2748 + $0x140] sm:$0xff]
        %v2790 = vld [vmem:[%s2748 + $0x148] sm:$0xff]
        %v2791 = vld [vmem:[%s2748 + $0x150] sm:$0xff]
        %v2792 = vld [vmem:[%s2748 + $0x158] sm:$0xff]
        %v2793 = vld [vmem:[%s2748 + $0x160] sm:$0xff]
        %v2794 = vld [vmem:[%s2748 + $0x168] sm:$0xff]
        %v2795 = vld [vmem:[%s2748 + $0x170] sm:$0xff]
        %v2796 = vld [vmem:[%s2748 + $0x178] sm:$0xff]
        %2797 = vmatpush.msra.mxu0 %v2794
        %2798 = vmatpush.msra.mxu0 %v2791
        %2799 = vmatpush.msra.mxu0 %v2788
        %2800 = vmatpush.msra.mxu0 %v2785
        %2801 = vmatpush.msra.mxu0 %v2782
        %2802 = vmatpush.msra.mxu0 %v2779
        %2803 = vmatpush.msra.mxu0 %v2776
        %2804 = vmatpush.msra.mxu0 %v2773
        %2805 = vmatpush.msra.mxu0 %v2770
        %2806 = vmatpush.msra.mxu0 %v2767
        %2807 = vmatpush.msra.mxu0 %v2764
        %2808 = vmatpush.msra.mxu0 %v2761
        %2809 = vmatpush.msra.mxu0 %v2758
        %2810 = vmatpush.msra.mxu0 %v2755
        %2811 = vmatpush.msra.mxu0 %v2752
        %2812 = vmatpush.msra.mxu0 %v2749
        %2813 = vmatmul.f32.gmra.mxu0 %v201
        %v2814 = vpop.f32.mrf.mxu0
        %v2815 = vadd.f32 0.0, %v2814
        %2816 = vmatmul.f32.gmra.mxu0 %v202
        %v2817 = vpop.f32.mrf.mxu0
        %v2818 = vadd.f32 0.0, %v2817
        %2819 = vmatmul.f32.gmra.mxu0 %v203
        %v2820 = vpop.f32.mrf.mxu0
        %v2821 = vadd.f32 0.0, %v2820
        %2822 = vmatmul.f32.gmra.mxu0 %v204
        %v2823 = vpop.f32.mrf.mxu0
        %v2824 = vadd.f32 0.0, %v2823
        %2825 = vmatmul.f32.gmra.mxu0 %v205
        %v2826 = vpop.f32.mrf.mxu0
        %v2827 = vadd.f32 0.0, %v2826
        %2828 = vmatmul.f32.gmra.mxu0 %v206
        %v2829 = vpop.f32.mrf.mxu0
        %v2830 = vadd.f32 0.0, %v2829
        %2831 = vmatmul.f32.gmra.mxu0 %v207
        %v2832 = vpop.f32.mrf.mxu0
        %v2833 = vadd.f32 0.0, %v2832
        %2834 = vmatmul.f32.gmra.mxu0 %v208
        %v2835 = vpop.f32.mrf.mxu0
        %v2836 = vadd.f32 0.0, %v2835
        %2837 = vmatmul.f32.gmra.mxu0 %v209
        %v2838 = vpop.f32.mrf.mxu0
        %v2839 = vadd.f32 0.0, %v2838
        %2840 = vmatmul.f32.gmra.mxu0 %v210
        %v2841 = vpop.f32.mrf.mxu0
        %v2842 = vadd.f32 0.0, %v2841
        %2843 = vmatmul.f32.gmra.mxu0 %v211
        %v2844 = vpop.f32.mrf.mxu0
        %v2845 = vadd.f32 0.0, %v2844
        %2846 = vmatmul.f32.gmra.mxu0 %v212
        %v2847 = vpop.f32.mrf.mxu0
        %v2848 = vadd.f32 0.0, %v2847
        %2849 = vmatmul.f32.gmra.mxu0 %v213
        %v2850 = vpop.f32.mrf.mxu0
        %v2851 = vadd.f32 0.0, %v2850
        %2852 = vmatmul.f32.gmra.mxu0 %v214
        %v2853 = vpop.f32.mrf.mxu0
        %v2854 = vadd.f32 0.0, %v2853
        %2855 = vmatmul.f32.gmra.mxu0 %v215
        %v2856 = vpop.f32.mrf.mxu0
        %v2857 = vadd.f32 0.0, %v2856
        %2858 = vmatmul.f32.gmra.mxu0 %v216
        %v2859 = vpop.f32.mrf.mxu0
        %v2860 = vadd.f32 0.0, %v2859
        %2861 = vdwg.mxu0
        %2862 = vmatpush.msra.mxu0 %v2795
        %2863 = vmatpush.msra.mxu0 %v2792
        %2864 = vmatpush.msra.mxu0 %v2789
        %2865 = vmatpush.msra.mxu0 %v2786
        %2866 = vmatpush.msra.mxu0 %v2783
        %2867 = vmatpush.msra.mxu0 %v2780
        %2868 = vmatpush.msra.mxu0 %v2777
        %2869 = vmatpush.msra.mxu0 %v2774
        %2870 = vmatpush.msra.mxu0 %v2771
        %2871 = vmatpush.msra.mxu0 %v2768
        %2872 = vmatpush.msra.mxu0 %v2765
        %2873 = vmatpush.msra.mxu0 %v2762
        %2874 = vmatpush.msra.mxu0 %v2759
        %2875 = vmatpush.msra.mxu0 %v2756
        %2876 = vmatpush.msra.mxu0 %v2753
        %2877 = vmatpush.msra.mxu0 %v2750
        %2878 = vmatmul.f32.gmra.mxu0 %v201
        %v2879 = vpop.f32.mrf.mxu0
        %v2880 = vadd.f32 0.0, %v2879
        %2881 = vmatmul.f32.gmra.mxu0 %v202
        %v2882 = vpop.f32.mrf.mxu0
        %v2883 = vadd.f32 0.0, %v2882
        %2884 = vmatmul.f32.gmra.mxu0 %v203
        %v2885 = vpop.f32.mrf.mxu0
        %v2886 = vadd.f32 0.0, %v2885
        %2887 = vmatmul.f32.gmra.mxu0 %v204
        %v2888 = vpop.f32.mrf.mxu0
        %v2889 = vadd.f32 0.0, %v2888
        %2890 = vmatmul.f32.gmra.mxu0 %v205
        %v2891 = vpop.f32.mrf.mxu0
        %v2892 = vadd.f32 0.0, %v2891
        %2893 = vmatmul.f32.gmra.mxu0 %v206
        %v2894 = vpop.f32.mrf.mxu0
        %v2895 = vadd.f32 0.0, %v2894
        %2896 = vmatmul.f32.gmra.mxu0 %v207
        %v2897 = vpop.f32.mrf.mxu0
        %v2898 = vadd.f32 0.0, %v2897
        %2899 = vmatmul.f32.gmra.mxu0 %v208
        %v2900 = vpop.f32.mrf.mxu0
        %v2901 = vadd.f32 0.0, %v2900
        %2902 = vmatmul.f32.gmra.mxu0 %v209
        %v2903 = vpop.f32.mrf.mxu0
        %v2904 = vadd.f32 0.0, %v2903
        %2905 = vmatmul.f32.gmra.mxu0 %v210
        %v2906 = vpop.f32.mrf.mxu0
        %v2907 = vadd.f32 0.0, %v2906
        %2908 = vmatmul.f32.gmra.mxu0 %v211
        %v2909 = vpop.f32.mrf.mxu0
        %v2910 = vadd.f32 0.0, %v2909
        %2911 = vmatmul.f32.gmra.mxu0 %v212
        %v2912 = vpop.f32.mrf.mxu0
        %v2913 = vadd.f32 0.0, %v2912
        %2914 = vmatmul.f32.gmra.mxu0 %v213
        %v2915 = vpop.f32.mrf.mxu0
        %v2916 = vadd.f32 0.0, %v2915
        %2917 = vmatmul.f32.gmra.mxu0 %v214
        %v2918 = vpop.f32.mrf.mxu0
        %v2919 = vadd.f32 0.0, %v2918
        %2920 = vmatmul.f32.gmra.mxu0 %v215
        %v2921 = vpop.f32.mrf.mxu0
        %v2922 = vadd.f32 0.0, %v2921
        %2923 = vmatmul.f32.gmra.mxu0 %v216
        %v2924 = vpop.f32.mrf.mxu0
        %v2925 = vadd.f32 0.0, %v2924
        %2926 = vdwg.mxu0
        %2927 = vmatpush.msra.mxu0 %v2796
        %2928 = vmatpush.msra.mxu0 %v2793
        %2929 = vmatpush.msra.mxu0 %v2790
        %2930 = vmatpush.msra.mxu0 %v2787
        %2931 = vmatpush.msra.mxu0 %v2784
        %2932 = vmatpush.msra.mxu0 %v2781
        %2933 = vmatpush.msra.mxu0 %v2778
        %2934 = vmatpush.msra.mxu0 %v2775
        %2935 = vmatpush.msra.mxu0 %v2772
        %2936 = vmatpush.msra.mxu0 %v2769
        %2937 = vmatpush.msra.mxu0 %v2766
        %2938 = vmatpush.msra.mxu0 %v2763
        %2939 = vmatpush.msra.mxu0 %v2760
        %2940 = vmatpush.msra.mxu0 %v2757
        %2941 = vmatpush.msra.mxu0 %v2754
        %2942 = vmatpush.msra.mxu0 %v2751
        %2943 = vmatmul.f32.gmra.mxu0 %v201
        %v2944 = vpop.f32.mrf.mxu0
        %v2945 = vadd.f32 0.0, %v2944
        %2946 = vmatmul.f32.gmra.mxu0 %v202
        %v2947 = vpop.f32.mrf.mxu0
        %v2948 = vadd.f32 0.0, %v2947
        %2949 = vmatmul.f32.gmra.mxu0 %v203
        %v2950 = vpop.f32.mrf.mxu0
        %v2951 = vadd.f32 0.0, %v2950
        %2952 = vmatmul.f32.gmra.mxu0 %v204
        %v2953 = vpop.f32.mrf.mxu0
        %v2954 = vadd.f32 0.0, %v2953
        %2955 = vmatmul.f32.gmra.mxu0 %v205
        %v2956 = vpop.f32.mrf.mxu0
        %v2957 = vadd.f32 0.0, %v2956
        %2958 = vmatmul.f32.gmra.mxu0 %v206
        %v2959 = vpop.f32.mrf.mxu0
        %v2960 = vadd.f32 0.0, %v2959
        %2961 = vmatmul.f32.gmra.mxu0 %v207
        %v2962 = vpop.f32.mrf.mxu0
        %v2963 = vadd.f32 0.0, %v2962
        %2964 = vmatmul.f32.gmra.mxu0 %v208
        %v2965 = vpop.f32.mrf.mxu0
        %v2966 = vadd.f32 0.0, %v2965
        %2967 = vmatmul.f32.gmra.mxu0 %v209
        %v2968 = vpop.f32.mrf.mxu0
        %v2969 = vadd.f32 0.0, %v2968
        %2970 = vmatmul.f32.gmra.mxu0 %v210
        %v2971 = vpop.f32.mrf.mxu0
        %v2972 = vadd.f32 0.0, %v2971
        %2973 = vmatmul.f32.gmra.mxu0 %v211
        %v2974 = vpop.f32.mrf.mxu0
        %v2975 = vadd.f32 0.0, %v2974
        %2976 = vmatmul.f32.gmra.mxu0 %v212
        %v2977 = vpop.f32.mrf.mxu0
        %v2978 = vadd.f32 0.0, %v2977
        %2979 = vmatmul.f32.gmra.mxu0 %v213
        %v2980 = vpop.f32.mrf.mxu0
        %v2981 = vadd.f32 0.0, %v2980
        %2982 = vmatmul.f32.gmra.mxu0 %v214
        %v2983 = vpop.f32.mrf.mxu0
        %v2984 = vadd.f32 0.0, %v2983
        %2985 = vmatmul.f32.gmra.mxu0 %v215
        %v2986 = vpop.f32.mrf.mxu0
        %v2987 = vadd.f32 0.0, %v2986
        %2988 = vmatmul.f32.gmra.mxu0 %v216
        %v2989 = vpop.f32.mrf.mxu0
        %v2990 = vadd.f32 0.0, %v2989
        %2991 = vdwg.mxu0
        %v2992 = vrot.slane %v2815, 7
        %v2993 = vrot.slane %v2880, 7
        %v2994 = vrot.slane %v2945, 7
        %v2995 = vrot.slane %v2818, 7
        %v2996 = vrot.slane %v2883, 7
        %v2997 = vrot.slane %v2948, 7
        %v2998 = vrot.slane %v2821, 7
        %v2999 = vrot.slane %v2886, 7
        %v3000 = vrot.slane %v2951, 7
        %v3001 = vrot.slane %v2824, 7
        %v3002 = vrot.slane %v2889, 7
        %v3003 = vrot.slane %v2954, 7
        %v3004 = vrot.slane %v2827, 7
        %v3005 = vrot.slane %v2892, 7
        %v3006 = vrot.slane %v2957, 7
        %v3007 = vrot.slane %v2830, 7
        %v3008 = vrot.slane %v2895, 7
        %v3009 = vrot.slane %v2960, 7
        %v3010 = vrot.slane %v2833, 7
        %v3011 = vrot.slane %v2898, 7
        %v3012 = vrot.slane %v2963, 7
        %v3013 = vrot.slane %v2836, 7
        %v3014 = vrot.slane %v2901, 7
        %v3015 = vrot.slane %v2966, 7
        %v3016 = vrot.slane %v2839, 7
        %v3017 = vrot.slane %v2904, 7
        %v3018 = vrot.slane %v2969, 7
        %v3019 = vrot.slane %v2842, 7
        %v3020 = vrot.slane %v2907, 7
        %v3021 = vrot.slane %v2972, 7
        %v3022 = vrot.slane %v2845, 7
        %v3023 = vrot.slane %v2910, 7
        %v3024 = vrot.slane %v2975, 7
        %v3025 = vrot.slane %v2848, 7
        %v3026 = vrot.slane %v2913, 7
        %v3027 = vrot.slane %v2978, 7
        %v3028 = vrot.slane %v2851, 7
        %v3029 = vrot.slane %v2916, 7
        %v3030 = vrot.slane %v2981, 7
        %v3031 = vrot.slane %v2854, 7
        %v3032 = vrot.slane %v2919, 7
        %v3033 = vrot.slane %v2984, 7
        %v3034 = vrot.slane %v2857, 7
        %v3035 = vrot.slane %v2922, 7
        %v3036 = vrot.slane %v2987, 7
        %v3037 = vrot.slane %v2860, 7
        %v3038 = vrot.slane %v2925, 7
        %v3039 = vrot.slane %v2990, 7
        %vm3040 = vcmp.lt.s32.totalorder %v558, 1
        %v3041 = vsel %vm3040, %v3034, %v3037
        %v3042 = vsel %vm3040, %v3035, %v3038
        %v3043 = vsel %vm3040, %v3036, %v3039
        %v3044 = vsel %vm3040, %v3031, %v3034
        %v3045 = vsel %vm3040, %v3032, %v3035
        %v3046 = vsel %vm3040, %v3033, %v3036
        %v3047 = vsel %vm3040, %v3028, %v3031
        %v3048 = vsel %vm3040, %v3029, %v3032
        %v3049 = vsel %vm3040, %v3030, %v3033
        %v3050 = vsel %vm3040, %v3025, %v3028
        %v3051 = vsel %vm3040, %v3026, %v3029
        %v3052 = vsel %vm3040, %v3027, %v3030
        %v3053 = vsel %vm3040, %v3022, %v3025
        %v3054 = vsel %vm3040, %v3023, %v3026
        %v3055 = vsel %vm3040, %v3024, %v3027
        %v3056 = vsel %vm3040, %v3019, %v3022
        %v3057 = vsel %vm3040, %v3020, %v3023
        %v3058 = vsel %vm3040, %v3021, %v3024
        %v3059 = vsel %vm3040, %v3016, %v3019
        %v3060 = vsel %vm3040, %v3017, %v3020
        %v3061 = vsel %vm3040, %v3018, %v3021
        %v3062 = vsel %vm3040, %v3013, %v3016
        %v3063 = vsel %vm3040, %v3014, %v3017
        %v3064 = vsel %vm3040, %v3015, %v3018
        %v3065 = vsel %vm3040, %v3010, %v3013
        %v3066 = vsel %vm3040, %v3011, %v3014
        %v3067 = vsel %vm3040, %v3012, %v3015
        %v3068 = vsel %vm3040, %v3007, %v3010
        %v3069 = vsel %vm3040, %v3008, %v3011
        %v3070 = vsel %vm3040, %v3009, %v3012
        %v3071 = vsel %vm3040, %v3004, %v3007
        %v3072 = vsel %vm3040, %v3005, %v3008
        %v3073 = vsel %vm3040, %v3006, %v3009
        %v3074 = vsel %vm3040, %v3001, %v3004
        %v3075 = vsel %vm3040, %v3002, %v3005
        %v3076 = vsel %vm3040, %v3003, %v3006
        %v3077 = vsel %vm3040, %v2998, %v3001
        %v3078 = vsel %vm3040, %v2999, %v3002
        %v3079 = vsel %vm3040, %v3000, %v3003
        %v3080 = vsel %vm3040, %v2995, %v2998
        %v3081 = vsel %vm3040, %v2996, %v2999
        %v3082 = vsel %vm3040, %v2997, %v3000
        %v3083 = vsel %vm3040, %v2992, %v2995
        %v3084 = vsel %vm3040, %v2993, %v2996
        %v3085 = vsel %vm3040, %v2994, %v2997
        %v3086 = vsel %vm3040, %v3037, %v2992
        %v3087 = vsel %vm3040, %v3038, %v2993
        %v3088 = vsel %vm3040, %v3039, %v2994
        %v3089 = vadd.f32 %v2700, %v3083
        %v3090 = vadd.f32 %v2701, %v3084
        %v3091 = vadd.f32 %v2702, %v3085
        %v3092 = vadd.f32 %v2703, %v3080
        %v3093 = vadd.f32 %v2704, %v3081
        %v3094 = vadd.f32 %v2705, %v3082
        %v3095 = vadd.f32 %v2706, %v3077
        %v3096 = vadd.f32 %v2707, %v3078
        %v3097 = vadd.f32 %v2708, %v3079
        %v3098 = vadd.f32 %v2709, %v3074
        %v3099 = vadd.f32 %v2710, %v3075
        %v3100 = vadd.f32 %v2711, %v3076
        %v3101 = vadd.f32 %v2712, %v3071
        %v3102 = vadd.f32 %v2713, %v3072
        %v3103 = vadd.f32 %v2714, %v3073
        %v3104 = vadd.f32 %v2715, %v3068
        %v3105 = vadd.f32 %v2716, %v3069
        %v3106 = vadd.f32 %v2717, %v3070
        %v3107 = vadd.f32 %v2718, %v3065
        %v3108 = vadd.f32 %v2719, %v3066
        %v3109 = vadd.f32 %v2720, %v3067
        %v3110 = vadd.f32 %v2721, %v3062
        %v3111 = vadd.f32 %v2722, %v3063
        %v3112 = vadd.f32 %v2723, %v3064
        %v3113 = vadd.f32 %v2724, %v3059
        %v3114 = vadd.f32 %v2725, %v3060
        %v3115 = vadd.f32 %v2726, %v3061
        %v3116 = vadd.f32 %v2727, %v3056
        %v3117 = vadd.f32 %v2728, %v3057
        %v3118 = vadd.f32 %v2729, %v3058
        %v3119 = vadd.f32 %v2730, %v3053
        %v3120 = vadd.f32 %v2731, %v3054
        %v3121 = vadd.f32 %v2732, %v3055
        %v3122 = vadd.f32 %v2733, %v3050
        %v3123 = vadd.f32 %v2734, %v3051
        %v3124 = vadd.f32 %v2735, %v3052
        %v3125 = vadd.f32 %v2736, %v3047
        %v3126 = vadd.f32 %v2737, %v3048
        %v3127 = vadd.f32 %v2738, %v3049
        %v3128 = vadd.f32 %v2739, %v3044
        %v3129 = vadd.f32 %v2740, %v3045
        %v3130 = vadd.f32 %v2741, %v3046
        %v3131 = vadd.f32 %v2742, %v3041
        %v3132 = vadd.f32 %v2743, %v3042
        %v3133 = vadd.f32 %v2744, %v3043
        %v3134 = vadd.f32 %v2745, %v3086
        %v3135 = vadd.f32 %v2746, %v3087
        %v3136 = vadd.f32 %v2747, %v3088
        %s3137 = scalar_lea.vmem %s1, 3072
        %v3138 = vld [vmem:[%s3137] sm:$0xff]
        %v3139 = vld [vmem:[%s3137 + $0x8] sm:$0xff]
        %v3140 = vld [vmem:[%s3137 + $0x10] sm:$0xff]
        %v3141 = vld [vmem:[%s3137 + $0x18] sm:$0xff]
        %v3142 = vld [vmem:[%s3137 + $0x20] sm:$0xff]
        %v3143 = vld [vmem:[%s3137 + $0x28] sm:$0xff]
        %v3144 = vld [vmem:[%s3137 + $0x30] sm:$0xff]
        %v3145 = vld [vmem:[%s3137 + $0x38] sm:$0xff]
        %v3146 = vld [vmem:[%s3137 + $0x40] sm:$0xff]
        %v3147 = vld [vmem:[%s3137 + $0x48] sm:$0xff]
        %v3148 = vld [vmem:[%s3137 + $0x50] sm:$0xff]
        %v3149 = vld [vmem:[%s3137 + $0x58] sm:$0xff]
        %v3150 = vld [vmem:[%s3137 + $0x60] sm:$0xff]
        %v3151 = vld [vmem:[%s3137 + $0x68] sm:$0xff]
        %v3152 = vld [vmem:[%s3137 + $0x70] sm:$0xff]
        %v3153 = vld [vmem:[%s3137 + $0x78] sm:$0xff]
        %v3154 = vld [vmem:[%s3137 + $0x80] sm:$0xff]
        %v3155 = vld [vmem:[%s3137 + $0x88] sm:$0xff]
        %v3156 = vld [vmem:[%s3137 + $0x90] sm:$0xff]
        %v3157 = vld [vmem:[%s3137 + $0x98] sm:$0xff]
        %v3158 = vld [vmem:[%s3137 + $0xa0] sm:$0xff]
        %v3159 = vld [vmem:[%s3137 + $0xa8] sm:$0xff]
        %v3160 = vld [vmem:[%s3137 + $0xb0] sm:$0xff]
        %v3161 = vld [vmem:[%s3137 + $0xb8] sm:$0xff]
        %v3162 = vld [vmem:[%s3137 + $0xc0] sm:$0xff]
        %v3163 = vld [vmem:[%s3137 + $0xc8] sm:$0xff]
        %v3164 = vld [vmem:[%s3137 + $0xd0] sm:$0xff]
        %v3165 = vld [vmem:[%s3137 + $0xd8] sm:$0xff]
        %v3166 = vld [vmem:[%s3137 + $0xe0] sm:$0xff]
        %v3167 = vld [vmem:[%s3137 + $0xe8] sm:$0xff]
        %v3168 = vld [vmem:[%s3137 + $0xf0] sm:$0xff]
        %v3169 = vld [vmem:[%s3137 + $0xf8] sm:$0xff]
        %v3170 = vld [vmem:[%s3137 + $0x100] sm:$0xff]
        %v3171 = vld [vmem:[%s3137 + $0x108] sm:$0xff]
        %v3172 = vld [vmem:[%s3137 + $0x110] sm:$0xff]
        %v3173 = vld [vmem:[%s3137 + $0x118] sm:$0xff]
        %v3174 = vld [vmem:[%s3137 + $0x120] sm:$0xff]
        %v3175 = vld [vmem:[%s3137 + $0x128] sm:$0xff]
        %v3176 = vld [vmem:[%s3137 + $0x130] sm:$0xff]
        %v3177 = vld [vmem:[%s3137 + $0x138] sm:$0xff]
        %v3178 = vld [vmem:[%s3137 + $0x140] sm:$0xff]
        %v3179 = vld [vmem:[%s3137 + $0x148] sm:$0xff]
        %v3180 = vld [vmem:[%s3137 + $0x150] sm:$0xff]
        %v3181 = vld [vmem:[%s3137 + $0x158] sm:$0xff]
        %v3182 = vld [vmem:[%s3137 + $0x160] sm:$0xff]
        %v3183 = vld [vmem:[%s3137 + $0x168] sm:$0xff]
        %v3184 = vld [vmem:[%s3137 + $0x170] sm:$0xff]
        %v3185 = vld [vmem:[%s3137 + $0x178] sm:$0xff]
        %3186 = vmatpush.msra.mxu0 %v3183
        %3187 = vmatpush.msra.mxu0 %v3180
        %3188 = vmatpush.msra.mxu0 %v3177
        %3189 = vmatpush.msra.mxu0 %v3174
        %3190 = vmatpush.msra.mxu0 %v3171
        %3191 = vmatpush.msra.mxu0 %v3168
        %3192 = vmatpush.msra.mxu0 %v3165
        %3193 = vmatpush.msra.mxu0 %v3162
        %3194 = vmatpush.msra.mxu0 %v3159
        %3195 = vmatpush.msra.mxu0 %v3156
        %3196 = vmatpush.msra.mxu0 %v3153
        %3197 = vmatpush.msra.mxu0 %v3150
        %3198 = vmatpush.msra.mxu0 %v3147
        %3199 = vmatpush.msra.mxu0 %v3144
        %3200 = vmatpush.msra.mxu0 %v3141
        %3201 = vmatpush.msra.mxu0 %v3138
        %3202 = vmatmul.f32.gmra.mxu0 %v201
        %v3203 = vpop.f32.mrf.mxu0
        %v3204 = vadd.f32 0.0, %v3203
        %3205 = vmatmul.f32.gmra.mxu0 %v202
        %v3206 = vpop.f32.mrf.mxu0
        %v3207 = vadd.f32 0.0, %v3206
        %3208 = vmatmul.f32.gmra.mxu0 %v203
        %v3209 = vpop.f32.mrf.mxu0
        %v3210 = vadd.f32 0.0, %v3209
        %3211 = vmatmul.f32.gmra.mxu0 %v204
        %v3212 = vpop.f32.mrf.mxu0
        %v3213 = vadd.f32 0.0, %v3212
        %3214 = vmatmul.f32.gmra.mxu0 %v205
        %v3215 = vpop.f32.mrf.mxu0
        %v3216 = vadd.f32 0.0, %v3215
        %3217 = vmatmul.f32.gmra.mxu0 %v206
        %v3218 = vpop.f32.mrf.mxu0
        %v3219 = vadd.f32 0.0, %v3218
        %3220 = vmatmul.f32.gmra.mxu0 %v207
        %v3221 = vpop.f32.mrf.mxu0
        %v3222 = vadd.f32 0.0, %v3221
        %3223 = vmatmul.f32.gmra.mxu0 %v208
        %v3224 = vpop.f32.mrf.mxu0
        %v3225 = vadd.f32 0.0, %v3224
        %3226 = vmatmul.f32.gmra.mxu0 %v209
        %v3227 = vpop.f32.mrf.mxu0
        %v3228 = vadd.f32 0.0, %v3227
        %3229 = vmatmul.f32.gmra.mxu0 %v210
        %v3230 = vpop.f32.mrf.mxu0
        %v3231 = vadd.f32 0.0, %v3230
        %3232 = vmatmul.f32.gmra.mxu0 %v211
        %v3233 = vpop.f32.mrf.mxu0
        %v3234 = vadd.f32 0.0, %v3233
        %3235 = vmatmul.f32.gmra.mxu0 %v212
        %v3236 = vpop.f32.mrf.mxu0
        %v3237 = vadd.f32 0.0, %v3236
        %3238 = vmatmul.f32.gmra.mxu0 %v213
        %v3239 = vpop.f32.mrf.mxu0
        %v3240 = vadd.f32 0.0, %v3239
        %3241 = vmatmul.f32.gmra.mxu0 %v214
        %v3242 = vpop.f32.mrf.mxu0
        %v3243 = vadd.f32 0.0, %v3242
        %3244 = vmatmul.f32.gmra.mxu0 %v215
        %v3245 = vpop.f32.mrf.mxu0
        %v3246 = vadd.f32 0.0, %v3245
        %3247 = vmatmul.f32.gmra.mxu0 %v216
        %v3248 = vpop.f32.mrf.mxu0
        %v3249 = vadd.f32 0.0, %v3248
        %3250 = vdwg.mxu0
        %3251 = vmatpush.msra.mxu0 %v3184
        %3252 = vmatpush.msra.mxu0 %v3181
        %3253 = vmatpush.msra.mxu0 %v3178
        %3254 = vmatpush.msra.mxu0 %v3175
        %3255 = vmatpush.msra.mxu0 %v3172
        %3256 = vmatpush.msra.mxu0 %v3169
        %3257 = vmatpush.msra.mxu0 %v3166
        %3258 = vmatpush.msra.mxu0 %v3163
        %3259 = vmatpush.msra.mxu0 %v3160
        %3260 = vmatpush.msra.mxu0 %v3157
        %3261 = vmatpush.msra.mxu0 %v3154
        %3262 = vmatpush.msra.mxu0 %v3151
        %3263 = vmatpush.msra.mxu0 %v3148
        %3264 = vmatpush.msra.mxu0 %v3145
        %3265 = vmatpush.msra.mxu0 %v3142
        %3266 = vmatpush.msra.mxu0 %v3139
        %3267 = vmatmul.f32.gmra.mxu0 %v201
        %v3268 = vpop.f32.mrf.mxu0
        %v3269 = vadd.f32 0.0, %v3268
        %3270 = vmatmul.f32.gmra.mxu0 %v202
        %v3271 = vpop.f32.mrf.mxu0
        %v3272 = vadd.f32 0.0, %v3271
        %3273 = vmatmul.f32.gmra.mxu0 %v203
        %v3274 = vpop.f32.mrf.mxu0
        %v3275 = vadd.f32 0.0, %v3274
        %3276 = vmatmul.f32.gmra.mxu0 %v204
        %v3277 = vpop.f32.mrf.mxu0
        %v3278 = vadd.f32 0.0, %v3277
        %3279 = vmatmul.f32.gmra.mxu0 %v205
        %v3280 = vpop.f32.mrf.mxu0
        %v3281 = vadd.f32 0.0, %v3280
        %3282 = vmatmul.f32.gmra.mxu0 %v206
        %v3283 = vpop.f32.mrf.mxu0
        %v3284 = vadd.f32 0.0, %v3283
        %3285 = vmatmul.f32.gmra.mxu0 %v207
        %v3286 = vpop.f32.mrf.mxu0
        %v3287 = vadd.f32 0.0, %v3286
        %3288 = vmatmul.f32.gmra.mxu0 %v208
        %v3289 = vpop.f32.mrf.mxu0
        %v3290 = vadd.f32 0.0, %v3289
        %3291 = vmatmul.f32.gmra.mxu0 %v209
        %v3292 = vpop.f32.mrf.mxu0
        %v3293 = vadd.f32 0.0, %v3292
        %3294 = vmatmul.f32.gmra.mxu0 %v210
        %v3295 = vpop.f32.mrf.mxu0
        %v3296 = vadd.f32 0.0, %v3295
        %3297 = vmatmul.f32.gmra.mxu0 %v211
        %v3298 = vpop.f32.mrf.mxu0
        %v3299 = vadd.f32 0.0, %v3298
        %3300 = vmatmul.f32.gmra.mxu0 %v212
        %v3301 = vpop.f32.mrf.mxu0
        %v3302 = vadd.f32 0.0, %v3301
        %3303 = vmatmul.f32.gmra.mxu0 %v213
        %v3304 = vpop.f32.mrf.mxu0
        %v3305 = vadd.f32 0.0, %v3304
        %3306 = vmatmul.f32.gmra.mxu0 %v214
        %v3307 = vpop.f32.mrf.mxu0
        %v3308 = vadd.f32 0.0, %v3307
        %3309 = vmatmul.f32.gmra.mxu0 %v215
        %v3310 = vpop.f32.mrf.mxu0
        %v3311 = vadd.f32 0.0, %v3310
        %3312 = vmatmul.f32.gmra.mxu0 %v216
        %v3313 = vpop.f32.mrf.mxu0
        %v3314 = vadd.f32 0.0, %v3313
        %3315 = vdwg.mxu0
        %3316 = vmatpush.msra.mxu0 %v3185
        %3317 = vmatpush.msra.mxu0 %v3182
        %3318 = vmatpush.msra.mxu0 %v3179
        %3319 = vmatpush.msra.mxu0 %v3176
        %3320 = vmatpush.msra.mxu0 %v3173
        %3321 = vmatpush.msra.mxu0 %v3170
        %3322 = vmatpush.msra.mxu0 %v3167
        %3323 = vmatpush.msra.mxu0 %v3164
        %3324 = vmatpush.msra.mxu0 %v3161
        %3325 = vmatpush.msra.mxu0 %v3158
        %3326 = vmatpush.msra.mxu0 %v3155
        %3327 = vmatpush.msra.mxu0 %v3152
        %3328 = vmatpush.msra.mxu0 %v3149
        %3329 = vmatpush.msra.mxu0 %v3146
        %3330 = vmatpush.msra.mxu0 %v3143
        %3331 = vmatpush.msra.mxu0 %v3140
        %3332 = vmatmul.f32.gmra.mxu0 %v201
        %v3333 = vpop.f32.mrf.mxu0
        %v3334 = vadd.f32 0.0, %v3333
        %3335 = vmatmul.f32.gmra.mxu0 %v202
        %v3336 = vpop.f32.mrf.mxu0
        %v3337 = vadd.f32 0.0, %v3336
        %3338 = vmatmul.f32.gmra.mxu0 %v203
        %v3339 = vpop.f32.mrf.mxu0
        %v3340 = vadd.f32 0.0, %v3339
        %3341 = vmatmul.f32.gmra.mxu0 %v204
        %v3342 = vpop.f32.mrf.mxu0
        %v3343 = vadd.f32 0.0, %v3342
        %3344 = vmatmul.f32.gmra.mxu0 %v205
        %v3345 = vpop.f32.mrf.mxu0
        %v3346 = vadd.f32 0.0, %v3345
        %3347 = vmatmul.f32.gmra.mxu0 %v206
        %v3348 = vpop.f32.mrf.mxu0
        %v3349 = vadd.f32 0.0, %v3348
        %3350 = vmatmul.f32.gmra.mxu0 %v207
        %v3351 = vpop.f32.mrf.mxu0
        %v3352 = vadd.f32 0.0, %v3351
        %3353 = vmatmul.f32.gmra.mxu0 %v208
        %v3354 = vpop.f32.mrf.mxu0
        %v3355 = vadd.f32 0.0, %v3354
        %3356 = vmatmul.f32.gmra.mxu0 %v209
        %v3357 = vpop.f32.mrf.mxu0
        %v3358 = vadd.f32 0.0, %v3357
        %3359 = vmatmul.f32.gmra.mxu0 %v210
        %v3360 = vpop.f32.mrf.mxu0
        %v3361 = vadd.f32 0.0, %v3360
        %3362 = vmatmul.f32.gmra.mxu0 %v211
        %v3363 = vpop.f32.mrf.mxu0
        %v3364 = vadd.f32 0.0, %v3363
        %3365 = vmatmul.f32.gmra.mxu0 %v212
        %v3366 = vpop.f32.mrf.mxu0
        %v3367 = vadd.f32 0.0, %v3366
        %3368 = vmatmul.f32.gmra.mxu0 %v213
        %v3369 = vpop.f32.mrf.mxu0
        %v3370 = vadd.f32 0.0, %v3369
        %3371 = vmatmul.f32.gmra.mxu0 %v214
        %v3372 = vpop.f32.mrf.mxu0
        %v3373 = vadd.f32 0.0, %v3372
        %3374 = vmatmul.f32.gmra.mxu0 %v215
        %v3375 = vpop.f32.mrf.mxu0
        %v3376 = vadd.f32 0.0, %v3375
        %3377 = vmatmul.f32.gmra.mxu0 %v216
        %v3378 = vpop.f32.mrf.mxu0
        %v3379 = vadd.f32 0.0, %v3378
        %3380 = vdwg.mxu0
        %v3381 = vadd.f32 %v3089, %v3207
        %v3382 = vadd.f32 %v3090, %v3272
        %v3383 = vadd.f32 %v3091, %v3337
        %v3384 = vadd.f32 %v3092, %v3210
        %v3385 = vadd.f32 %v3093, %v3275
        %v3386 = vadd.f32 %v3094, %v3340
        %v3387 = vadd.f32 %v3095, %v3213
        %v3388 = vadd.f32 %v3096, %v3278
        %v3389 = vadd.f32 %v3097, %v3343
        %v3390 = vadd.f32 %v3098, %v3216
        %v3391 = vadd.f32 %v3099, %v3281
        %v3392 = vadd.f32 %v3100, %v3346
        %v3393 = vadd.f32 %v3101, %v3219
        %v3394 = vadd.f32 %v3102, %v3284
        %v3395 = vadd.f32 %v3103, %v3349
        %v3396 = vadd.f32 %v3104, %v3222
        %v3397 = vadd.f32 %v3105, %v3287
        %v3398 = vadd.f32 %v3106, %v3352
        %v3399 = vadd.f32 %v3107, %v3225
        %v3400 = vadd.f32 %v3108, %v3290
        %v3401 = vadd.f32 %v3109, %v3355
        %v3402 = vadd.f32 %v3110, %v3228
        %v3403 = vadd.f32 %v3111, %v3293
        %v3404 = vadd.f32 %v3112, %v3358
        %v3405 = vadd.f32 %v3113, %v3231
        %v3406 = vadd.f32 %v3114, %v3296
        %v3407 = vadd.f32 %v3115, %v3361
        %v3408 = vadd.f32 %v3116, %v3234
        %v3409 = vadd.f32 %v3117, %v3299
        %v3410 = vadd.f32 %v3118, %v3364
        %v3411 = vadd.f32 %v3119, %v3237
        %v3412 = vadd.f32 %v3120, %v3302
        %v3413 = vadd.f32 %v3121, %v3367
        %v3414 = vadd.f32 %v3122, %v3240
        %v3415 = vadd.f32 %v3123, %v3305
        %v3416 = vadd.f32 %v3124, %v3370
        %v3417 = vadd.f32 %v3125, %v3243
        %v3418 = vadd.f32 %v3126, %v3308
        %v3419 = vadd.f32 %v3127, %v3373
        %v3420 = vadd.f32 %v3128, %v3246
        %v3421 = vadd.f32 %v3129, %v3311
        %v3422 = vadd.f32 %v3130, %v3376
        %v3423 = vadd.f32 %v3131, %v3249
        %v3424 = vadd.f32 %v3132, %v3314
        %v3425 = vadd.f32 %v3133, %v3379
        %v3426 = vadd.f32 %v3134, %v3204
        %v3427 = vadd.f32 %v3135, %v3269
        %v3428 = vadd.f32 %v3136, %v3334
        %s3429 = scalar_lea.vmem %s1, 3456
        %v3430 = vld [vmem:[%s3429] sm:$0xff]
        %v3431 = vld [vmem:[%s3429 + $0x8] sm:$0xff]
        %v3432 = vld [vmem:[%s3429 + $0x10] sm:$0xff]
        %v3433 = vld [vmem:[%s3429 + $0x18] sm:$0xff]
        %v3434 = vld [vmem:[%s3429 + $0x20] sm:$0xff]
        %v3435 = vld [vmem:[%s3429 + $0x28] sm:$0xff]
        %v3436 = vld [vmem:[%s3429 + $0x30] sm:$0xff]
        %v3437 = vld [vmem:[%s3429 + $0x38] sm:$0xff]
        %v3438 = vld [vmem:[%s3429 + $0x40] sm:$0xff]
        %v3439 = vld [vmem:[%s3429 + $0x48] sm:$0xff]
        %v3440 = vld [vmem:[%s3429 + $0x50] sm:$0xff]
        %v3441 = vld [vmem:[%s3429 + $0x58] sm:$0xff]
        %v3442 = vld [vmem:[%s3429 + $0x60] sm:$0xff]
        %v3443 = vld [vmem:[%s3429 + $0x68] sm:$0xff]
        %v3444 = vld [vmem:[%s3429 + $0x70] sm:$0xff]
        %v3445 = vld [vmem:[%s3429 + $0x78] sm:$0xff]
        %v3446 = vld [vmem:[%s3429 + $0x80] sm:$0xff]
        %v3447 = vld [vmem:[%s3429 + $0x88] sm:$0xff]
        %v3448 = vld [vmem:[%s3429 + $0x90] sm:$0xff]
        %v3449 = vld [vmem:[%s3429 + $0x98] sm:$0xff]
        %v3450 = vld [vmem:[%s3429 + $0xa0] sm:$0xff]
        %v3451 = vld [vmem:[%s3429 + $0xa8] sm:$0xff]
        %v3452 = vld [vmem:[%s3429 + $0xb0] sm:$0xff]
        %v3453 = vld [vmem:[%s3429 + $0xb8] sm:$0xff]
        %v3454 = vld [vmem:[%s3429 + $0xc0] sm:$0xff]
        %v3455 = vld [vmem:[%s3429 + $0xc8] sm:$0xff]
        %v3456 = vld [vmem:[%s3429 + $0xd0] sm:$0xff]
        %v3457 = vld [vmem:[%s3429 + $0xd8] sm:$0xff]
        %v3458 = vld [vmem:[%s3429 + $0xe0] sm:$0xff]
        %v3459 = vld [vmem:[%s3429 + $0xe8] sm:$0xff]
        %v3460 = vld [vmem:[%s3429 + $0xf0] sm:$0xff]
        %v3461 = vld [vmem:[%s3429 + $0xf8] sm:$0xff]
        %v3462 = vld [vmem:[%s3429 + $0x100] sm:$0xff]
        %v3463 = vld [vmem:[%s3429 + $0x108] sm:$0xff]
        %v3464 = vld [vmem:[%s3429 + $0x110] sm:$0xff]
        %v3465 = vld [vmem:[%s3429 + $0x118] sm:$0xff]
        %v3466 = vld [vmem:[%s3429 + $0x120] sm:$0xff]
        %v3467 = vld [vmem:[%s3429 + $0x128] sm:$0xff]
        %v3468 = vld [vmem:[%s3429 + $0x130] sm:$0xff]
        %v3469 = vld [vmem:[%s3429 + $0x138] sm:$0xff]
        %v3470 = vld [vmem:[%s3429 + $0x140] sm:$0xff]
        %v3471 = vld [vmem:[%s3429 + $0x148] sm:$0xff]
        %v3472 = vld [vmem:[%s3429 + $0x150] sm:$0xff]
        %v3473 = vld [vmem:[%s3429 + $0x158] sm:$0xff]
        %v3474 = vld [vmem:[%s3429 + $0x160] sm:$0xff]
        %v3475 = vld [vmem:[%s3429 + $0x168] sm:$0xff]
        %v3476 = vld [vmem:[%s3429 + $0x170] sm:$0xff]
        %v3477 = vld [vmem:[%s3429 + $0x178] sm:$0xff]
        %3478 = vmatpush.msra.mxu0 %v3475
        %3479 = vmatpush.msra.mxu0 %v3472
        %3480 = vmatpush.msra.mxu0 %v3469
        %3481 = vmatpush.msra.mxu0 %v3466
        %3482 = vmatpush.msra.mxu0 %v3463
        %3483 = vmatpush.msra.mxu0 %v3460
        %3484 = vmatpush.msra.mxu0 %v3457
        %3485 = vmatpush.msra.mxu0 %v3454
        %3486 = vmatpush.msra.mxu0 %v3451
        %3487 = vmatpush.msra.mxu0 %v3448
        %3488 = vmatpush.msra.mxu0 %v3445
        %3489 = vmatpush.msra.mxu0 %v3442
        %3490 = vmatpush.msra.mxu0 %v3439
        %3491 = vmatpush.msra.mxu0 %v3436
        %3492 = vmatpush.msra.mxu0 %v3433
        %3493 = vmatpush.msra.mxu0 %v3430
        %3494 = vmatmul.f32.gmra.mxu0 %v201
        %v3495 = vpop.f32.mrf.mxu0
        %v3496 = vadd.f32 0.0, %v3495
        %3497 = vmatmul.f32.gmra.mxu0 %v202
        %v3498 = vpop.f32.mrf.mxu0
        %v3499 = vadd.f32 0.0, %v3498
        %3500 = vmatmul.f32.gmra.mxu0 %v203
        %v3501 = vpop.f32.mrf.mxu0
        %v3502 = vadd.f32 0.0, %v3501
        %3503 = vmatmul.f32.gmra.mxu0 %v204
        %v3504 = vpop.f32.mrf.mxu0
        %v3505 = vadd.f32 0.0, %v3504
        %3506 = vmatmul.f32.gmra.mxu0 %v205
        %v3507 = vpop.f32.mrf.mxu0
        %v3508 = vadd.f32 0.0, %v3507
        %3509 = vmatmul.f32.gmra.mxu0 %v206
        %v3510 = vpop.f32.mrf.mxu0
        %v3511 = vadd.f32 0.0, %v3510
        %3512 = vmatmul.f32.gmra.mxu0 %v207
        %v3513 = vpop.f32.mrf.mxu0
        %v3514 = vadd.f32 0.0, %v3513
        %3515 = vmatmul.f32.gmra.mxu0 %v208
        %v3516 = vpop.f32.mrf.mxu0
        %v3517 = vadd.f32 0.0, %v3516
        %3518 = vmatmul.f32.gmra.mxu0 %v209
        %v3519 = vpop.f32.mrf.mxu0
        %v3520 = vadd.f32 0.0, %v3519
        %3521 = vmatmul.f32.gmra.mxu0 %v210
        %v3522 = vpop.f32.mrf.mxu0
        %v3523 = vadd.f32 0.0, %v3522
        %3524 = vmatmul.f32.gmra.mxu0 %v211
        %v3525 = vpop.f32.mrf.mxu0
        %v3526 = vadd.f32 0.0, %v3525
        %3527 = vmatmul.f32.gmra.mxu0 %v212
        %v3528 = vpop.f32.mrf.mxu0
        %v3529 = vadd.f32 0.0, %v3528
        %3530 = vmatmul.f32.gmra.mxu0 %v213
        %v3531 = vpop.f32.mrf.mxu0
        %v3532 = vadd.f32 0.0, %v3531
        %3533 = vmatmul.f32.gmra.mxu0 %v214
        %v3534 = vpop.f32.mrf.mxu0
        %v3535 = vadd.f32 0.0, %v3534
        %3536 = vmatmul.f32.gmra.mxu0 %v215
        %v3537 = vpop.f32.mrf.mxu0
        %v3538 = vadd.f32 0.0, %v3537
        %3539 = vmatmul.f32.gmra.mxu0 %v216
        %v3540 = vpop.f32.mrf.mxu0
        %v3541 = vadd.f32 0.0, %v3540
        %3542 = vdwg.mxu0
        %3543 = vmatpush.msra.mxu0 %v3476
        %3544 = vmatpush.msra.mxu0 %v3473
        %3545 = vmatpush.msra.mxu0 %v3470
        %3546 = vmatpush.msra.mxu0 %v3467
        %3547 = vmatpush.msra.mxu0 %v3464
        %3548 = vmatpush.msra.mxu0 %v3461
        %3549 = vmatpush.msra.mxu0 %v3458
        %3550 = vmatpush.msra.mxu0 %v3455
        %3551 = vmatpush.msra.mxu0 %v3452
        %3552 = vmatpush.msra.mxu0 %v3449
        %3553 = vmatpush.msra.mxu0 %v3446
        %3554 = vmatpush.msra.mxu0 %v3443
        %3555 = vmatpush.msra.mxu0 %v3440
        %3556 = vmatpush.msra.mxu0 %v3437
        %3557 = vmatpush.msra.mxu0 %v3434
        %3558 = vmatpush.msra.mxu0 %v3431
        %3559 = vmatmul.f32.gmra.mxu0 %v201
        %v3560 = vpop.f32.mrf.mxu0
        %v3561 = vadd.f32 0.0, %v3560
        %3562 = vmatmul.f32.gmra.mxu0 %v202
        %v3563 = vpop.f32.mrf.mxu0
        %v3564 = vadd.f32 0.0, %v3563
        %3565 = vmatmul.f32.gmra.mxu0 %v203
        %v3566 = vpop.f32.mrf.mxu0
        %v3567 = vadd.f32 0.0, %v3566
        %3568 = vmatmul.f32.gmra.mxu0 %v204
        %v3569 = vpop.f32.mrf.mxu0
        %v3570 = vadd.f32 0.0, %v3569
        %3571 = vmatmul.f32.gmra.mxu0 %v205
        %v3572 = vpop.f32.mrf.mxu0
        %v3573 = vadd.f32 0.0, %v3572
        %3574 = vmatmul.f32.gmra.mxu0 %v206
        %v3575 = vpop.f32.mrf.mxu0
        %v3576 = vadd.f32 0.0, %v3575
        %3577 = vmatmul.f32.gmra.mxu0 %v207
        %v3578 = vpop.f32.mrf.mxu0
        %v3579 = vadd.f32 0.0, %v3578
        %3580 = vmatmul.f32.gmra.mxu0 %v208
        %v3581 = vpop.f32.mrf.mxu0
        %v3582 = vadd.f32 0.0, %v3581
        %3583 = vmatmul.f32.gmra.mxu0 %v209
        %v3584 = vpop.f32.mrf.mxu0
        %v3585 = vadd.f32 0.0, %v3584
        %3586 = vmatmul.f32.gmra.mxu0 %v210
        %v3587 = vpop.f32.mrf.mxu0
        %v3588 = vadd.f32 0.0, %v3587
        %3589 = vmatmul.f32.gmra.mxu0 %v211
        %v3590 = vpop.f32.mrf.mxu0
        %v3591 = vadd.f32 0.0, %v3590
        %3592 = vmatmul.f32.gmra.mxu0 %v212
        %v3593 = vpop.f32.mrf.mxu0
        %v3594 = vadd.f32 0.0, %v3593
        %3595 = vmatmul.f32.gmra.mxu0 %v213
        %v3596 = vpop.f32.mrf.mxu0
        %v3597 = vadd.f32 0.0, %v3596
        %3598 = vmatmul.f32.gmra.mxu0 %v214
        %v3599 = vpop.f32.mrf.mxu0
        %v3600 = vadd.f32 0.0, %v3599
        %3601 = vmatmul.f32.gmra.mxu0 %v215
        %v3602 = vpop.f32.mrf.mxu0
        %v3603 = vadd.f32 0.0, %v3602
        %3604 = vmatmul.f32.gmra.mxu0 %v216
        %v3605 = vpop.f32.mrf.mxu0
        %v3606 = vadd.f32 0.0, %v3605
        %3607 = vdwg.mxu0
        %3608 = vmatpush.msra.mxu0 %v3477
        %3609 = vmatpush.msra.mxu0 %v3474
        %3610 = vmatpush.msra.mxu0 %v3471
        %3611 = vmatpush.msra.mxu0 %v3468
        %3612 = vmatpush.msra.mxu0 %v3465
        %3613 = vmatpush.msra.mxu0 %v3462
        %3614 = vmatpush.msra.mxu0 %v3459
        %3615 = vmatpush.msra.mxu0 %v3456
        %3616 = vmatpush.msra.mxu0 %v3453
        %3617 = vmatpush.msra.mxu0 %v3450
        %3618 = vmatpush.msra.mxu0 %v3447
        %3619 = vmatpush.msra.mxu0 %v3444
        %3620 = vmatpush.msra.mxu0 %v3441
        %3621 = vmatpush.msra.mxu0 %v3438
        %3622 = vmatpush.msra.mxu0 %v3435
        %3623 = vmatpush.msra.mxu0 %v3432
        %3624 = vmatmul.f32.gmra.mxu0 %v201
        %v3625 = vpop.f32.mrf.mxu0
        %v3626 = vadd.f32 0.0, %v3625
        %3627 = vmatmul.f32.gmra.mxu0 %v202
        %v3628 = vpop.f32.mrf.mxu0
        %v3629 = vadd.f32 0.0, %v3628
        %3630 = vmatmul.f32.gmra.mxu0 %v203
        %v3631 = vpop.f32.mrf.mxu0
        %v3632 = vadd.f32 0.0, %v3631
        %3633 = vmatmul.f32.gmra.mxu0 %v204
        %v3634 = vpop.f32.mrf.mxu0
        %v3635 = vadd.f32 0.0, %v3634
        %3636 = vmatmul.f32.gmra.mxu0 %v205
        %v3637 = vpop.f32.mrf.mxu0
        %v3638 = vadd.f32 0.0, %v3637
        %3639 = vmatmul.f32.gmra.mxu0 %v206
        %v3640 = vpop.f32.mrf.mxu0
        %v3641 = vadd.f32 0.0, %v3640
        %3642 = vmatmul.f32.gmra.mxu0 %v207
        %v3643 = vpop.f32.mrf.mxu0
        %v3644 = vadd.f32 0.0, %v3643
        %3645 = vmatmul.f32.gmra.mxu0 %v208
        %v3646 = vpop.f32.mrf.mxu0
        %v3647 = vadd.f32 0.0, %v3646
        %3648 = vmatmul.f32.gmra.mxu0 %v209
        %v3649 = vpop.f32.mrf.mxu0
        %v3650 = vadd.f32 0.0, %v3649
        %3651 = vmatmul.f32.gmra.mxu0 %v210
        %v3652 = vpop.f32.mrf.mxu0
        %v3653 = vadd.f32 0.0, %v3652
        %3654 = vmatmul.f32.gmra.mxu0 %v211
        %v3655 = vpop.f32.mrf.mxu0
        %v3656 = vadd.f32 0.0, %v3655
        %3657 = vmatmul.f32.gmra.mxu0 %v212
        %v3658 = vpop.f32.mrf.mxu0
        %v3659 = vadd.f32 0.0, %v3658
        %3660 = vmatmul.f32.gmra.mxu0 %v213
        %v3661 = vpop.f32.mrf.mxu0
        %v3662 = vadd.f32 0.0, %v3661
        %3663 = vmatmul.f32.gmra.mxu0 %v214
        %v3664 = vpop.f32.mrf.mxu0
        %v3665 = vadd.f32 0.0, %v3664
        %3666 = vmatmul.f32.gmra.mxu0 %v215
        %v3667 = vpop.f32.mrf.mxu0
        %v3668 = vadd.f32 0.0, %v3667
        %3669 = vmatmul.f32.gmra.mxu0 %v216
        %v3670 = vpop.f32.mrf.mxu0
        %v3671 = vadd.f32 0.0, %v3670
        %3672 = vdwg.mxu0
        %v3673 = vrot.slane %v3496, 1
        %v3674 = vrot.slane %v3561, 1
        %v3675 = vrot.slane %v3626, 1
        %v3676 = vrot.slane %v3499, 1
        %v3677 = vrot.slane %v3564, 1
        %v3678 = vrot.slane %v3629, 1
        %v3679 = vrot.slane %v3502, 1
        %v3680 = vrot.slane %v3567, 1
        %v3681 = vrot.slane %v3632, 1
        %v3682 = vrot.slane %v3505, 1
        %v3683 = vrot.slane %v3570, 1
        %v3684 = vrot.slane %v3635, 1
        %v3685 = vrot.slane %v3508, 1
        %v3686 = vrot.slane %v3573, 1
        %v3687 = vrot.slane %v3638, 1
        %v3688 = vrot.slane %v3511, 1
        %v3689 = vrot.slane %v3576, 1
        %v3690 = vrot.slane %v3641, 1
        %v3691 = vrot.slane %v3514, 1
        %v3692 = vrot.slane %v3579, 1
        %v3693 = vrot.slane %v3644, 1
        %v3694 = vrot.slane %v3517, 1
        %v3695 = vrot.slane %v3582, 1
        %v3696 = vrot.slane %v3647, 1
        %v3697 = vrot.slane %v3520, 1
        %v3698 = vrot.slane %v3585, 1
        %v3699 = vrot.slane %v3650, 1
        %v3700 = vrot.slane %v3523, 1
        %v3701 = vrot.slane %v3588, 1
        %v3702 = vrot.slane %v3653, 1
        %v3703 = vrot.slane %v3526, 1
        %v3704 = vrot.slane %v3591, 1
        %v3705 = vrot.slane %v3656, 1
        %v3706 = vrot.slane %v3529, 1
        %v3707 = vrot.slane %v3594, 1
        %v3708 = vrot.slane %v3659, 1
        %v3709 = vrot.slane %v3532, 1
        %v3710 = vrot.slane %v3597, 1
        %v3711 = vrot.slane %v3662, 1
        %v3712 = vrot.slane %v3535, 1
        %v3713 = vrot.slane %v3600, 1
        %v3714 = vrot.slane %v3665, 1
        %v3715 = vrot.slane %v3538, 1
        %v3716 = vrot.slane %v3603, 1
        %v3717 = vrot.slane %v3668, 1
        %v3718 = vrot.slane %v3541, 1
        %v3719 = vrot.slane %v3606, 1
        %v3720 = vrot.slane %v3671, 1
        %v3721 = vsel %vm559, %v3715, %v3718
        %v3722 = vsel %vm559, %v3716, %v3719
        %v3723 = vsel %vm559, %v3717, %v3720
        %v3724 = vsel %vm559, %v3712, %v3715
        %v3725 = vsel %vm559, %v3713, %v3716
        %v3726 = vsel %vm559, %v3714, %v3717
        %v3727 = vsel %vm559, %v3709, %v3712
        %v3728 = vsel %vm559, %v3710, %v3713
        %v3729 = vsel %vm559, %v3711, %v3714
        %v3730 = vsel %vm559, %v3706, %v3709
        %v3731 = vsel %vm559, %v3707, %v3710
        %v3732 = vsel %vm559, %v3708, %v3711
        %v3733 = vsel %vm559, %v3703, %v3706
        %v3734 = vsel %vm559, %v3704, %v3707
        %v3735 = vsel %vm559, %v3705, %v3708
        %v3736 = vsel %vm559, %v3700, %v3703
        %v3737 = vsel %vm559, %v3701, %v3704
        %v3738 = vsel %vm559, %v3702, %v3705
        %v3739 = vsel %vm559, %v3697, %v3700
        %v3740 = vsel %vm559, %v3698, %v3701
        %v3741 = vsel %vm559, %v3699, %v3702
        %v3742 = vsel %vm559, %v3694, %v3697
        %v3743 = vsel %vm559, %v3695, %v3698
        %v3744 = vsel %vm559, %v3696, %v3699
        %v3745 = vsel %vm559, %v3691, %v3694
        %v3746 = vsel %vm559, %v3692, %v3695
        %v3747 = vsel %vm559, %v3693, %v3696
        %v3748 = vsel %vm559, %v3688, %v3691
        %v3749 = vsel %vm559, %v3689, %v3692
        %v3750 = vsel %vm559, %v3690, %v3693
        %v3751 = vsel %vm559, %v3685, %v3688
        %v3752 = vsel %vm559, %v3686, %v3689
        %v3753 = vsel %vm559, %v3687, %v3690
        %v3754 = vsel %vm559, %v3682, %v3685
        %v3755 = vsel %vm559, %v3683, %v3686
        %v3756 = vsel %vm559, %v3684, %v3687
        %v3757 = vsel %vm559, %v3679, %v3682
        %v3758 = vsel %vm559, %v3680, %v3683
        %v3759 = vsel %vm559, %v3681, %v3684
        %v3760 = vsel %vm559, %v3676, %v3679
        %v3761 = vsel %vm559, %v3677, %v3680
        %v3762 = vsel %vm559, %v3678, %v3681
        %v3763 = vsel %vm559, %v3673, %v3676
        %v3764 = vsel %vm559, %v3674, %v3677
        %v3765 = vsel %vm559, %v3675, %v3678
        %v3766 = vsel %vm559, %v3718, %v3673
        %v3767 = vsel %vm559, %v3719, %v3674
        %v3768 = vsel %vm559, %v3720, %v3675
        %v3769 = vadd.f32 %v3381, %v3760
        %v3770 = vadd.f32 %v3382, %v3761
        %v3771 = vadd.f32 %v3383, %v3762
        %v3772 = vadd.f32 %v3384, %v3757
        %v3773 = vadd.f32 %v3385, %v3758
        %v3774 = vadd.f32 %v3386, %v3759
        %v3775 = vadd.f32 %v3387, %v3754
        %v3776 = vadd.f32 %v3388, %v3755
        %v3777 = vadd.f32 %v3389, %v3756
        %v3778 = vadd.f32 %v3390, %v3751
        %v3779 = vadd.f32 %v3391, %v3752
        %v3780 = vadd.f32 %v3392, %v3753
        %v3781 = vadd.f32 %v3393, %v3748
        %v3782 = vadd.f32 %v3394, %v3749
        %v3783 = vadd.f32 %v3395, %v3750
        %v3784 = vadd.f32 %v3396, %v3745
        %v3785 = vadd.f32 %v3397, %v3746
        %v3786 = vadd.f32 %v3398, %v3747
        %v3787 = vadd.f32 %v3399, %v3742
        %v3788 = vadd.f32 %v3400, %v3743
        %v3789 = vadd.f32 %v3401, %v3744
        %v3790 = vadd.f32 %v3402, %v3739
        %v3791 = vadd.f32 %v3403, %v3740
        %v3792 = vadd.f32 %v3404, %v3741
        %v3793 = vadd.f32 %v3405, %v3736
        %v3794 = vadd.f32 %v3406, %v3737
        %v3795 = vadd.f32 %v3407, %v3738
        %v3796 = vadd.f32 %v3408, %v3733
        %v3797 = vadd.f32 %v3409, %v3734
        %v3798 = vadd.f32 %v3410, %v3735
        %v3799 = vadd.f32 %v3411, %v3730
        %v3800 = vadd.f32 %v3412, %v3731
        %v3801 = vadd.f32 %v3413, %v3732
        %v3802 = vadd.f32 %v3414, %v3727
        %v3803 = vadd.f32 %v3415, %v3728
        %v3804 = vadd.f32 %v3416, %v3729
        %v3805 = vadd.f32 %v3417, %v3724
        %v3806 = vadd.f32 %v3418, %v3725
        %v3807 = vadd.f32 %v3419, %v3726
        %v3808 = vadd.f32 %v3420, %v3721
        %v3809 = vadd.f32 %v3421, %v3722
        %v3810 = vadd.f32 %v3422, %v3723
        %v3811 = vadd.f32 %v3423, %v3766
        %v3812 = vadd.f32 %v3424, %v3767
        %v3813 = vadd.f32 %v3425, %v3768
        %v3814 = vadd.f32 %v3426, %v3763
        %v3815 = vadd.f32 %v3427, %v3764
        %v3816 = vadd.f32 %v3428, %v3765
        %v3817 = vld [vmem:[%s3] sm:$0xff]
        %v3818 = vld [vmem:[%s3 + $0x8] sm:$0xff]
        %v3819 = vld [vmem:[%s3 + $0x10] sm:$0xff]
        %v3820 = vld [vmem:[%s3 + $0x18] sm:$0xff]
        %v3821 = vld [vmem:[%s3 + $0x20] sm:$0xff]
        %v3822 = vld [vmem:[%s3 + $0x28] sm:$0xff]
        %v3823 = vld [vmem:[%s3 + $0x30] sm:$0xff]
        %v3824 = vld [vmem:[%s3 + $0x38] sm:$0xff]
        %v3825 = vld [vmem:[%s3 + $0x40] sm:$0xff]
        %v3826 = vld [vmem:[%s3 + $0x48] sm:$0xff]
        %v3827 = vld [vmem:[%s3 + $0x50] sm:$0xff]
        %v3828 = vld [vmem:[%s3 + $0x58] sm:$0xff]
        %v3829 = vld [vmem:[%s3 + $0x60] sm:$0xff]
        %v3830 = vld [vmem:[%s3 + $0x68] sm:$0xff]
        %v3831 = vld [vmem:[%s3 + $0x70] sm:$0xff]
        %v3832 = vld [vmem:[%s3 + $0x78] sm:$0xff]
        %v3833 = vld [vmem:[%s3 + $0x80] sm:$0xff]
        %v3834 = vld [vmem:[%s3 + $0x88] sm:$0xff]
        %v3835 = vld [vmem:[%s3 + $0x90] sm:$0xff]
        %v3836 = vld [vmem:[%s3 + $0x98] sm:$0xff]
        %v3837 = vld [vmem:[%s3 + $0xa0] sm:$0xff]
        %v3838 = vld [vmem:[%s3 + $0xa8] sm:$0xff]
        %v3839 = vld [vmem:[%s3 + $0xb0] sm:$0xff]
        %v3840 = vld [vmem:[%s3 + $0xb8] sm:$0xff]
        %v3841 = vld [vmem:[%s3 + $0xc0] sm:$0xff]
        %v3842 = vld [vmem:[%s3 + $0xc8] sm:$0xff]
        %v3843 = vld [vmem:[%s3 + $0xd0] sm:$0xff]
        %v3844 = vld [vmem:[%s3 + $0xd8] sm:$0xff]
        %v3845 = vld [vmem:[%s3 + $0xe0] sm:$0xff]
        %v3846 = vld [vmem:[%s3 + $0xe8] sm:$0xff]
        %v3847 = vld [vmem:[%s3 + $0xf0] sm:$0xff]
        %v3848 = vld [vmem:[%s3 + $0xf8] sm:$0xff]
        %v3849 = vld [vmem:[%s3 + $0x100] sm:$0xff]
        %v3850 = vld [vmem:[%s3 + $0x108] sm:$0xff]
        %v3851 = vld [vmem:[%s3 + $0x110] sm:$0xff]
        %v3852 = vld [vmem:[%s3 + $0x118] sm:$0xff]
        %v3853 = vld [vmem:[%s3 + $0x120] sm:$0xff]
        %v3854 = vld [vmem:[%s3 + $0x128] sm:$0xff]
        %v3855 = vld [vmem:[%s3 + $0x130] sm:$0xff]
        %v3856 = vld [vmem:[%s3 + $0x138] sm:$0xff]
        %v3857 = vld [vmem:[%s3 + $0x140] sm:$0xff]
        %v3858 = vld [vmem:[%s3 + $0x148] sm:$0xff]
        %v3859 = vld [vmem:[%s3 + $0x150] sm:$0xff]
        %v3860 = vld [vmem:[%s3 + $0x158] sm:$0xff]
        %v3861 = vld [vmem:[%s3 + $0x160] sm:$0xff]
        %v3862 = vld [vmem:[%s3 + $0x168] sm:$0xff]
        %v3863 = vld [vmem:[%s3 + $0x170] sm:$0xff]
        %v3864 = vld [vmem:[%s3 + $0x178] sm:$0xff]
        %v3865 = vadd.f32 %v3769, %v3817
        %v3866 = vadd.f32 %v3770, %v3818
        %v3867 = vadd.f32 %v3771, %v3819
        %v3868 = vadd.f32 %v3772, %v3820
        %v3869 = vadd.f32 %v3773, %v3821
        %v3870 = vadd.f32 %v3774, %v3822
        %v3871 = vadd.f32 %v3775, %v3823
        %v3872 = vadd.f32 %v3776, %v3824
        %v3873 = vadd.f32 %v3777, %v3825
        %v3874 = vadd.f32 %v3778, %v3826
        %v3875 = vadd.f32 %v3779, %v3827
        %v3876 = vadd.f32 %v3780, %v3828
        %v3877 = vadd.f32 %v3781, %v3829
        %v3878 = vadd.f32 %v3782, %v3830
        %v3879 = vadd.f32 %v3783, %v3831
        %v3880 = vadd.f32 %v3784, %v3832
        %v3881 = vadd.f32 %v3785, %v3833
        %v3882 = vadd.f32 %v3786, %v3834
        %v3883 = vadd.f32 %v3787, %v3835
        %v3884 = vadd.f32 %v3788, %v3836
        %v3885 = vadd.f32 %v3789, %v3837
        %v3886 = vadd.f32 %v3790, %v3838
        %v3887 = vadd.f32 %v3791, %v3839
        %v3888 = vadd.f32 %v3792, %v3840
        %v3889 = vadd.f32 %v3793, %v3841
        %v3890 = vadd.f32 %v3794, %v3842
        %v3891 = vadd.f32 %v3795, %v3843
        %v3892 = vadd.f32 %v3796, %v3844
        %v3893 = vadd.f32 %v3797, %v3845
        %v3894 = vadd.f32 %v3798, %v3846
        %v3895 = vadd.f32 %v3799, %v3847
        %v3896 = vadd.f32 %v3800, %v3848
        %v3897 = vadd.f32 %v3801, %v3849
        %v3898 = vadd.f32 %v3802, %v3850
        %v3899 = vadd.f32 %v3803, %v3851
        %v3900 = vadd.f32 %v3804, %v3852
        %v3901 = vadd.f32 %v3805, %v3853
        %v3902 = vadd.f32 %v3806, %v3854
        %v3903 = vadd.f32 %v3807, %v3855
        %v3904 = vadd.f32 %v3808, %v3856
        %v3905 = vadd.f32 %v3809, %v3857
        %v3906 = vadd.f32 %v3810, %v3858
        %v3907 = vadd.f32 %v3811, %v3859
        %v3908 = vadd.f32 %v3812, %v3860
        %v3909 = vadd.f32 %v3813, %v3861
        %v3910 = vadd.f32 %v3814, %v3862
        %v3911 = vadd.f32 %v3815, %v3863
        %v3912 = vadd.f32 %v3816, %v3864
        %v3913 = vmax.f32 %v3865, %v3868
        %v3914 = vrot.slane %v3913, 4
        %v3915 = vmax.f32 %v3913, %v3914
        %v3916 = vrot.slane %v3915, 2
        %v3917 = vmax.f32 %v3915, %v3916
        %v3918 = vrot.slane %v3917, 1
        %v3919 = vmax.f32 %v3917, %v3918
        %v3920 = vmax.f32 %v3866, %v3869
        %v3921 = vrot.slane %v3920, 4
        %v3922 = vmax.f32 %v3920, %v3921
        %v3923 = vrot.slane %v3922, 2
        %v3924 = vmax.f32 %v3922, %v3923
        %v3925 = vrot.slane %v3924, 1
        %v3926 = vmax.f32 %v3924, %v3925
        %vm3927 = vcmask 523264
        %v3928 = vsel %vm3927, %v3867, -inf
        %v3929 = vsel %vm3927, %v3870, -inf
        %v3930 = vmax.f32 %v3928, %v3929
        %v3931 = vrot.slane %v3930, 4
        %v3932 = vmax.f32 %v3930, %v3931
        %v3933 = vrot.slane %v3932, 2
        %v3934 = vmax.f32 %v3932, %v3933
        %v3935 = vrot.slane %v3934, 1
        %v3936 = vmax.f32 %v3934, %v3935
        %v3937 = vmax.f32 %v3871, %v3874
        %v3938 = vrot.slane %v3937, 4
        %v3939 = vmax.f32 %v3937, %v3938
        %v3940 = vrot.slane %v3939, 2
        %v3941 = vmax.f32 %v3939, %v3940
        %v3942 = vrot.slane %v3941, 1
        %v3943 = vmax.f32 %v3941, %v3942
        %v3944 = vmax.f32 %v3872, %v3875
        %v3945 = vrot.slane %v3944, 4
        %v3946 = vmax.f32 %v3944, %v3945
        %v3947 = vrot.slane %v3946, 2
        %v3948 = vmax.f32 %v3946, %v3947
        %v3949 = vrot.slane %v3948, 1
        %v3950 = vmax.f32 %v3948, %v3949
        %v3951 = vsel %vm3927, %v3873, -inf
        %v3952 = vsel %vm3927, %v3876, -inf
        %v3953 = vmax.f32 %v3951, %v3952
        %v3954 = vrot.slane %v3953, 4
        %v3955 = vmax.f32 %v3953, %v3954
        %v3956 = vrot.slane %v3955, 2
        %v3957 = vmax.f32 %v3955, %v3956
        %v3958 = vrot.slane %v3957, 1
        %v3959 = vmax.f32 %v3957, %v3958
        %v3960 = vmax.f32 %v3877, %v3880
        %v3961 = vrot.slane %v3960, 4
        %v3962 = vmax.f32 %v3960, %v3961
        %v3963 = vrot.slane %v3962, 2
        %v3964 = vmax.f32 %v3962, %v3963
        %v3965 = vrot.slane %v3964, 1
        %v3966 = vmax.f32 %v3964, %v3965
        %v3967 = vmax.f32 %v3878, %v3881
        %v3968 = vrot.slane %v3967, 4
        %v3969 = vmax.f32 %v3967, %v3968
        %v3970 = vrot.slane %v3969, 2
        %v3971 = vmax.f32 %v3969, %v3970
        %v3972 = vrot.slane %v3971, 1
        %v3973 = vmax.f32 %v3971, %v3972
        %v3974 = vsel %vm3927, %v3879, -inf
        %v3975 = vsel %vm3927, %v3882, -inf
        %v3976 = vmax.f32 %v3974, %v3975
        %v3977 = vrot.slane %v3976, 4
        %v3978 = vmax.f32 %v3976, %v3977
        %v3979 = vrot.slane %v3978, 2
        %v3980 = vmax.f32 %v3978, %v3979
        %v3981 = vrot.slane %v3980, 1
        %v3982 = vmax.f32 %v3980, %v3981
        %v3983 = vmax.f32 %v3883, %v3886
        %v3984 = vrot.slane %v3983, 4
        %v3985 = vmax.f32 %v3983, %v3984
        %v3986 = vrot.slane %v3985, 2
        %v3987 = vmax.f32 %v3985, %v3986
        %v3988 = vrot.slane %v3987, 1
        %v3989 = vmax.f32 %v3987, %v3988
        %v3990 = vmax.f32 %v3884, %v3887
        %v3991 = vrot.slane %v3990, 4
        %v3992 = vmax.f32 %v3990, %v3991
        %v3993 = vrot.slane %v3992, 2
        %v3994 = vmax.f32 %v3992, %v3993
        %v3995 = vrot.slane %v3994, 1
        %v3996 = vmax.f32 %v3994, %v3995
        %v3997 = vsel %vm3927, %v3885, -inf
        %v3998 = vsel %vm3927, %v3888, -inf
        %v3999 = vmax.f32 %v3997, %v3998
        %v4000 = vrot.slane %v3999, 4
        %v4001 = vmax.f32 %v3999, %v4000
        %v4002 = vrot.slane %v4001, 2
        %v4003 = vmax.f32 %v4001, %v4002
        %v4004 = vrot.slane %v4003, 1
        %v4005 = vmax.f32 %v4003, %v4004
        %v4006 = vmax.f32 %v3889, %v3892
        %v4007 = vrot.slane %v4006, 4
        %v4008 = vmax.f32 %v4006, %v4007
        %v4009 = vrot.slane %v4008, 2
        %v4010 = vmax.f32 %v4008, %v4009
        %v4011 = vrot.slane %v4010, 1
        %v4012 = vmax.f32 %v4010, %v4011
        %v4013 = vmax.f32 %v3890, %v3893
        %v4014 = vrot.slane %v4013, 4
        %v4015 = vmax.f32 %v4013, %v4014
        %v4016 = vrot.slane %v4015, 2
        %v4017 = vmax.f32 %v4015, %v4016
        %v4018 = vrot.slane %v4017, 1
        %v4019 = vmax.f32 %v4017, %v4018
        %v4020 = vsel %vm3927, %v3891, -inf
        %v4021 = vsel %vm3927, %v3894, -inf
        %v4022 = vmax.f32 %v4020, %v4021
        %v4023 = vrot.slane %v4022, 4
        %v4024 = vmax.f32 %v4022, %v4023
        %v4025 = vrot.slane %v4024, 2
        %v4026 = vmax.f32 %v4024, %v4025
        %v4027 = vrot.slane %v4026, 1
        %v4028 = vmax.f32 %v4026, %v4027
        %v4029 = vmax.f32 %v3895, %v3898
        %v4030 = vrot.slane %v4029, 4
        %v4031 = vmax.f32 %v4029, %v4030
        %v4032 = vrot.slane %v4031, 2
        %v4033 = vmax.f32 %v4031, %v4032
        %v4034 = vrot.slane %v4033, 1
        %v4035 = vmax.f32 %v4033, %v4034
        %v4036 = vmax.f32 %v3896, %v3899
        %v4037 = vrot.slane %v4036, 4
        %v4038 = vmax.f32 %v4036, %v4037
        %v4039 = vrot.slane %v4038, 2
        %v4040 = vmax.f32 %v4038, %v4039
        %v4041 = vrot.slane %v4040, 1
        %v4042 = vmax.f32 %v4040, %v4041
        %v4043 = vsel %vm3927, %v3897, -inf
        %v4044 = vsel %vm3927, %v3900, -inf
        %v4045 = vmax.f32 %v4043, %v4044
        %v4046 = vrot.slane %v4045, 4
        %v4047 = vmax.f32 %v4045, %v4046
        %v4048 = vrot.slane %v4047, 2
        %v4049 = vmax.f32 %v4047, %v4048
        %v4050 = vrot.slane %v4049, 1
        %v4051 = vmax.f32 %v4049, %v4050
        %v4052 = vmax.f32 %v3901, %v3904
        %v4053 = vrot.slane %v4052, 4
        %v4054 = vmax.f32 %v4052, %v4053
        %v4055 = vrot.slane %v4054, 2
        %v4056 = vmax.f32 %v4054, %v4055
        %v4057 = vrot.slane %v4056, 1
        %v4058 = vmax.f32 %v4056, %v4057
        %v4059 = vmax.f32 %v3902, %v3905
        %v4060 = vrot.slane %v4059, 4
        %v4061 = vmax.f32 %v4059, %v4060
        %v4062 = vrot.slane %v4061, 2
        %v4063 = vmax.f32 %v4061, %v4062
        %v4064 = vrot.slane %v4063, 1
        %v4065 = vmax.f32 %v4063, %v4064
        %v4066 = vsel %vm3927, %v3903, -inf
        %v4067 = vsel %vm3927, %v3906, -inf
        %v4068 = vmax.f32 %v4066, %v4067
        %v4069 = vrot.slane %v4068, 4
        %v4070 = vmax.f32 %v4068, %v4069
        %v4071 = vrot.slane %v4070, 2
        %v4072 = vmax.f32 %v4070, %v4071
        %v4073 = vrot.slane %v4072, 1
        %v4074 = vmax.f32 %v4072, %v4073
        %v4075 = vmax.f32 %v3907, %v3910
        %v4076 = vrot.slane %v4075, 4
        %v4077 = vmax.f32 %v4075, %v4076
        %v4078 = vrot.slane %v4077, 2
        %v4079 = vmax.f32 %v4077, %v4078
        %v4080 = vrot.slane %v4079, 1
        %v4081 = vmax.f32 %v4079, %v4080
        %v4082 = vmax.f32 %v3908, %v3911
        %v4083 = vrot.slane %v4082, 4
        %v4084 = vmax.f32 %v4082, %v4083
        %v4085 = vrot.slane %v4084, 2
        %v4086 = vmax.f32 %v4084, %v4085
        %v4087 = vrot.slane %v4086, 1
        %v4088 = vmax.f32 %v4086, %v4087
        %v4089 = vsel %vm3927, %v3909, -inf
        %v4090 = vsel %vm3927, %v3912, -inf
        %v4091 = vmax.f32 %v4089, %v4090
        %v4092 = vrot.slane %v4091, 4
        %v4093 = vmax.f32 %v4091, %v4092
        %v4094 = vrot.slane %v4093, 2
        %v4095 = vmax.f32 %v4093, %v4094
        %v4096 = vrot.slane %v4095, 1
        %v4097 = vmax.f32 %v4095, %v4096
        %v4098 = vld [vmem:[%s2] sm:$0x7]
        %v4100 = vperm.slane %v4098, 0
        %v4101 = vperm.slane %v4098, 1
        %v4102 = vperm.slane %v4098, 2
        %v4106 = vadd.f32 %v3919, %v4100
        %v4107 = vadd.f32 %v3926, %v4101
        %v4108 = vadd.f32 %v3936, %v4102
        %v4109 = vadd.f32 %v3943, %v4100
        %v4110 = vadd.f32 %v3950, %v4101
        %v4111 = vadd.f32 %v3959, %v4102
        %v4112 = vadd.f32 %v3966, %v4100
        %v4113 = vadd.f32 %v3973, %v4101
        %v4114 = vadd.f32 %v3982, %v4102
        %v4115 = vadd.f32 %v3989, %v4100
        %v4116 = vadd.f32 %v3996, %v4101
        %v4117 = vadd.f32 %v4005, %v4102
        %v4118 = vadd.f32 %v4012, %v4100
        %v4119 = vadd.f32 %v4019, %v4101
        %v4120 = vadd.f32 %v4028, %v4102
        %v4121 = vadd.f32 %v4035, %v4100
        %v4122 = vadd.f32 %v4042, %v4101
        %v4123 = vadd.f32 %v4051, %v4102
        %v4124 = vadd.f32 %v4058, %v4100
        %v4125 = vadd.f32 %v4065, %v4101
        %v4126 = vadd.f32 %v4074, %v4102
        %v4127 = vadd.f32 %v4081, %v4100
        %v4128 = vadd.f32 %v4088, %v4101
        %v4129 = vadd.f32 %v4097, %v4102
        %v4130 = vmax.f32 %v4106, 0.0
        %v4131 = vmax.f32 %v4107, 0.0
        %v4132 = vmax.f32 %v4108, 0.0
        %v4133 = vmax.f32 %v4109, 0.0
        %v4134 = vmax.f32 %v4110, 0.0
        %v4135 = vmax.f32 %v4111, 0.0
        %v4136 = vmax.f32 %v4112, 0.0
        %v4137 = vmax.f32 %v4113, 0.0
        %v4138 = vmax.f32 %v4114, 0.0
        %v4139 = vmax.f32 %v4115, 0.0
        %v4140 = vmax.f32 %v4116, 0.0
        %v4141 = vmax.f32 %v4117, 0.0
        %v4142 = vmax.f32 %v4118, 0.0
        %v4143 = vmax.f32 %v4119, 0.0
        %v4144 = vmax.f32 %v4120, 0.0
        %v4145 = vmax.f32 %v4121, 0.0
        %v4146 = vmax.f32 %v4122, 0.0
        %v4147 = vmax.f32 %v4123, 0.0
        %v4148 = vmax.f32 %v4124, 0.0
        %v4149 = vmax.f32 %v4125, 0.0
        %v4150 = vmax.f32 %v4126, 0.0
        %v4151 = vmax.f32 %v4127, 0.0
        %v4152 = vmax.f32 %v4128, 0.0
        %v4153 = vmax.f32 %v4129, 0.0
        %v4178 = vrot.slane %v4133, 7
        %vm4179 = vcmask 1041409
        %v4180 = vsel %vm4179, %v4178, %v4130
        %v4181 = vrot.slane %v4136, 6
        %vm4182 = vcmask 1042434
        %v4183 = vsel %vm4182, %v4181, %v4180
        %v4184 = vrot.slane %v4139, 5
        %vm4185 = vcmask 1043459
        %v4186 = vsel %vm4185, %v4184, %v4183
        %v4187 = vrot.slane %v4142, 4
        %vm4188 = vcmask 1044484
        %v4189 = vsel %vm4188, %v4187, %v4186
        %v4190 = vrot.slane %v4145, 3
        %vm4191 = vcmask 1045509
        %v4192 = vsel %vm4191, %v4190, %v4189
        %v4193 = vrot.slane %v4148, 2
        %vm4194 = vcmask 1046534
        %v4195 = vsel %vm4194, %v4193, %v4192
        %v4196 = vrot.slane %v4151, 1
        %vm4197 = vcmask 1047559
        %v4198 = vsel %vm4197, %v4196, %v4195
        %v4199 = vrot.slane %v4134, 7
        %v4200 = vsel %vm4179, %v4199, %v4131
        %v4201 = vrot.slane %v4137, 6
        %v4202 = vsel %vm4182, %v4201, %v4200
        %v4203 = vrot.slane %v4140, 5
        %v4204 = vsel %vm4185, %v4203, %v4202
        %v4205 = vrot.slane %v4143, 4
        %v4206 = vsel %vm4188, %v4205, %v4204
        %v4207 = vrot.slane %v4146, 3
        %v4208 = vsel %vm4191, %v4207, %v4206
        %v4209 = vrot.slane %v4149, 2
        %v4210 = vsel %vm4194, %v4209, %v4208
        %v4211 = vrot.slane %v4152, 1
        %v4212 = vsel %vm4197, %v4211, %v4210
        %v4213 = vrot.slane %v4135, 7
        %v4214 = vsel %vm4179, %v4213, %v4132
        %v4215 = vrot.slane %v4138, 6
        %v4216 = vsel %vm4182, %v4215, %v4214
        %v4217 = vrot.slane %v4141, 5
        %v4218 = vsel %vm4185, %v4217, %v4216
        %v4219 = vrot.slane %v4144, 4
        %v4220 = vsel %vm4188, %v4219, %v4218
        %v4221 = vrot.slane %v4147, 3
        %v4222 = vsel %vm4191, %v4221, %v4220
        %v4223 = vrot.slane %v4150, 2
        %v4224 = vsel %vm4194, %v4223, %v4222
        %v4225 = vrot.slane %v4153, 1
        %v4226 = vsel %vm4197, %v4225, %v4224
        %4230 = vst [vmem:[%s193] sm:$0xff] %v4198
        %4231 = vst [vmem:[%s193 + $0x8] sm:$0xff] %v4212
        %4232 = vst.msk [vmem:[%s193 + $0x10] sm:$0xff] %vm3927, %v4226
        %s4233 = sand.u32 %s115, 1
        %s4234 = scalar_lea.sflag [#allocation3], %s4233
        %s4235 = sand.u32 %s115, 1
        %s4236 = smul.addr %s4235, 24
        %s4237 = scalar_lea.vmem [#allocation2], %s4236
        // Predicated region
        $region37: #{tpu_custom_call.1} parent=35 // pred_check
          %p4238 = pneg %p125
        $region38: #{tpu_custom_call.1} parent=35 // pred_check_branch
          %4240 = sbr.rel (%p4238) target = $region40
        $region39: #{tpu_custom_call.1} parent=35 // pred_region
          %4242 = vsyncadd %s4234, 0
          %s4243 = smul.addr %s18, 3
          %s4244 = smul.addr %s4243, 8
          %s4245 = scalar_lea.hbm %s4, %s4244
          %s4247 = sshll.u32 %s4237, 4
          %s4248 = int_to_ptr.vmem [resolvable:$true] %s4247
          %s4249 = sshll.u32 %s4245, 4
          %s4250 = int_to_ptr.hbm [resolvable:$true] %s4249
          %4252 = dma.vmem_to_hbm [thread:$0]  %s4248, 384, %s4250, %s4234
        $region40: #{tpu_custom_call.1} parent=35 // pred_fallthru
          _
      $region36: #{tpu_custom_call.1} parent=5 // pred_fallthru
        _
      %p4253 = scmp.le.s32.totalorder 2, %s13
      // Predicated region
      $region41: #{tpu_custom_call.1} parent=5 // pred_check
        %p4254 = pneg %p4253
      $region42: #{tpu_custom_call.1} parent=5 // pred_check_branch
        %4256 = sbr.rel (%p4254) target = $region44
      $region43: #{tpu_custom_call.1} parent=5 // pred_region
        %s4257 = ssub.s32 %s13, 2
        // Predicated region
        $region45: #{tpu_custom_call.1} parent=43 // pred_check
          %p4258 = pneg %p131
        $region46: #{tpu_custom_call.1} parent=43 // pred_check_branch
          %4260 = sbr.rel (%p4258) target = $region48
        $region47: #{tpu_custom_call.1} parent=43 // pred_region
          %s4261 = sand.u32 %s116, 1
          %s4262 = scalar_lea.sflag [#allocation3], %s4261
          %s4263 = sand.u32 %s116, 1
          %s4264 = smul.addr %s4263, 24
          %s4265 = scalar_lea.vmem [#allocation2], %s4264
          %4267 = dma.done %s4262, 384
        $region48: #{tpu_custom_call.1} parent=43 // pred_fallthru
          _
      $region44: #{tpu_custom_call.1} parent=5 // pred_fallthru
        _
    $region6: #{tpu_custom_call.1} parent=1 // loop_footer
      %s17 = sadd.s32 1, %s13
    $region7: #{tpu_custom_call.1} parent=1 // loop_footer_branch
      %12 = sbr.rel target = $region3
    $region8: #{tpu_custom_call.1} parent=1 // loop_exit
      _
    %4268 = vsyncpa [#allocation3], 1
    %s4269 = scalar_lea.sflag [#allocation3], 1
    %4270 = vsyncpa %s4269, 1

</llo_original>
